<compile_context>
chip_gen: v6e
topology: v6e:2x2x1
jax: 0.10.0
libtpu: 0.0.40
codegen_flags: <defaults>
</compile_context>

<pallas_src>
import functools

import jax
import jax.numpy as jnp
from jax import lax
from jax.experimental import pallas as pl
from jax.experimental.pallas import tpu as pltpu


def _round_up(x: int, m: int) -> int:
    return (x + m - 1) // m * m


# -----------------------------------------------------------------------------
# Kernel
# -----------------------------------------------------------------------------
def _bilstm_chunk_kernel(T_real,
                         xf_ref, xb_ref,
                         wih_f_ref, wih_b_ref, b_f_ref, b_b_ref,
                         whh_f_ref, whh_b_ref,
                         out_f_ref, out_b_ref,
                         gxf, gxb, h_f, c_f, h_b, c_b):
    """One (batch-chunk, time-chunk) grid step of the bidirectional LSTM.

    xf_ref / xb_ref : (TC, BC, D)    fwd chunk i / bwd chunk NT-1-i of x (time-major)
    wih_*_ref       : (D, 4*Hp)      input->gates weights (gate blocks padded to Hp)
    b_*_ref         : (1, 4*Hp)      combined bias (b_ih + b_hh), padded, f32
    whh_*_ref       : (Hp, 4*Hp)     hidden->gates weights (rows/cols zero padded)
    out_*_ref       : (TC, BC, Hp)   per-direction hidden states
    gxf / gxb       : (TC, BC, 4*Hp) VMEM scratch for the hoisted projection
    h_* / c_*       : (BC, Hp)       f32 carries, persist across the time grid axis
    Gate order follows PyTorch: i, f, g, o.
    """
    TC, BC, D = xf_ref.shape
    Hp = whh_f_ref.shape[0]
    G = 4 * Hp
    i_t = pl.program_id(1)
    n_t = pl.num_programs(1)

    # ---- init carries at the first time-chunk of each batch-chunk ----
    @pl.when(i_t == 0)
    def _init():
        z = jnp.zeros((BC, Hp), jnp.float32)
        h_f[...] = z
        c_f[...] = z
        h_b[...] = z
        c_b[...] = z

    # ---- phase 1: hoisted input projection (one big MXU matmul per direction)
    xf = xf_ref[...].reshape(TC * BC, D)
    gxf[...] = (jnp.dot(xf, wih_f_ref[...], preferred_element_type=jnp.float32)
                + b_f_ref[...]).reshape(TC, BC, G)
    xb = xb_ref[...].reshape(TC * BC, D)
    gxb[...] = (jnp.dot(xb, wih_b_ref[...], preferred_element_type=jnp.float32)
                + b_b_ref[...]).reshape(TC, BC, G)

    # ---- phase 2: recurrence, fwd & bwd interleaved in one unrolled loop ----
    whh_f = whh_f_ref[...]   # hoisted out of the time loop
    whh_b = whh_b_ref[...]
    cdt = whh_f.dtype        # matmul compute dtype (f32 or bf16)

    def cell(gates_x, h, c, whh):
        gates = gates_x + jnp.dot(h.astype(cdt), whh,
                                  preferred_element_type=jnp.float32)
        # Hp is a multiple of 128 -> every gate slice is a whole lane block.
        i_g = jax.nn.sigmoid(gates[:, 0 * Hp:1 * Hp])
        f_g = jax.nn.sigmoid(gates[:, 1 * Hp:2 * Hp])
        g_g = jnp.tanh(gates[:, 2 * Hp:3 * Hp])
        o_g = jax.nn.sigmoid(gates[:, 3 * Hp:4 * Hp])
        c_n = f_g * c + i_g * g_g
        h_n = o_g * jnp.tanh(c_n)
        return h_n, c_n

    def step(s, carry):
        hf, cf, hb, cb = carry
        sb = TC - 1 - s
        # Independent directions: the second cell's MXU push overlaps the
        # first cell's VPU/EUP gate math.
        hf_n, cf_n = cell(gxf[s], hf, cf, whh_f)
        hb_n, cb_n = cell(gxb[sb], hb, cb, whh_b)
        # The backward direction meets zero-padded timesteps (t >= T_real)
        # FIRST; freeze its state there so padding never leaks into real steps.
        t_b = (n_t - 1 - i_t) * TC + sb
        keep = t_b < T_real
        hb_n = jnp.where(keep, hb_n, hb)
        cb_n = jnp.where(keep, cb_n, cb)
        out_f_ref[s] = hf_n          # (BC, Hp) lane-dense, unmasked store
        out_b_ref[sb] = hb_n
        return hf_n, cf_n, hb_n, cb_n

    carry = (h_f[...], c_f[...], h_b[...], c_b[...])
    hf, cf, hb, cb = lax.fori_loop(0, TC, step, carry, unroll=True)
    h_f[...] = hf
    c_f[...] = cf
    h_b[...] = hb
    c_b[...] = cb


# -----------------------------------------------------------------------------
# Weight preparation helpers (run once, in XLA)
# -----------------------------------------------------------------------------
def _place_gate_cols(w, H, Hp):
    """(K, 4H) -> (K, 4Hp): gate k's H real columns land at [k*Hp, k*Hp + H)."""
    K = w.shape[0]
    out = jnp.zeros((K, 4 * Hp), jnp.float32)
    for k in range(4):
        out = out.at[:, k * Hp:k * Hp + H].set(
            w[:, k * H:(k + 1) * H].astype(jnp.float32))
    return out


def _pad_whh(whh, H, Hp):
    """(4H, H) PyTorch weight_hh -> (Hp, 4Hp), zero padded rows / gate cols."""
    w = _place_gate_cols(whh.T, H, Hp)                       # (H, 4Hp)
    return jnp.zeros((Hp, 4 * Hp), jnp.float32).at[:H, :].set(w)


# -----------------------------------------------------------------------------
# Wrapper
# -----------------------------------------------------------------------------
@functools.partial(jax.jit, static_argnames=("compute_dtype", "t_chunk"))
def bilstm_forward(x, params, input_mask=None, compute_dtype=jnp.float32,
                   t_chunk=8):
    """x: (B, T, D) float32, batch_first.  Returns (B, T, D) = concat(fwd, bwd).

    `input_mask` is accepted for API parity with the PyTorch module and ignored
    (the reference forward ignores it too).
    """
    del input_mask
    B, T, D = x.shape
    assert D % 2 == 0, "hidden_dim must be even"
    H = D // 2

    # Padded sizes: lane-pad each gate, sublane-pad the batch, chunk the time axis.
    Hp = _round_up(H, 128)
    sub = 8 * (4 // jnp.dtype(compute_dtype).itemsize)   # 8 for f32, 16 for bf16
    Bp = _round_up(B, sub)
    BC = 32 if (Bp % 32 == 0) else Bp                    # batch chunk (megacore axis)
    NB = Bp // BC
    TC = _round_up(min(t_chunk, T), 8)                   # time chunk
    Tp = _round_up(T, TC)
    NT = Tp // TC

    # Time-major, padded input.
    # TODO(synk): fold this transpose/pad into the kernel (per-chunk in-VMEM
    # transpose) to save one XLA HBM pass over x.
    x_tm = jnp.transpose(x, (1, 0, 2)).astype(jnp.float32)       # (T, B, D)
    x_tm = jnp.pad(x_tm, ((0, Tp - T), (0, Bp - B), (0, 0)))
    x_tm = x_tm.astype(compute_dtype)                            # (Tp, Bp, D)

    # Weights: pre-transposed, gate blocks padded to Hp lanes; biases folded
    # (b_ih + b_hh) and kept in f32 (they are added to the f32 accumulator).
    wih_f = _place_gate_cols(params["wih_f"].T, H, Hp).astype(compute_dtype)
    wih_b = _place_gate_cols(params["wih_b"].T, H, Hp).astype(compute_dtype)
    whh_f = _pad_whh(params["whh_f"], H, Hp).astype(compute_dtype)
    whh_b = _pad_whh(params["whh_b"], H, Hp).astype(compute_dtype)
    b_f = _place_gate_cols((params["bih_f"] + params["bhh_f"]).reshape(1, -1), H, Hp)
    b_b = _place_gate_cols((params["bih_b"] + params["bhh_b"]).reshape(1, -1), H, Hp)

    kernel = functools.partial(_bilstm_chunk_kernel, T)

    out_f, out_b = pl.pallas_call(
        kernel,
        out_shape=(jax.ShapeDtypeStruct((Tp, Bp, Hp), jnp.float32),
                   jax.ShapeDtypeStruct((Tp, Bp, Hp), jnp.float32)),
        grid_spec=pltpu.PrefetchScalarGridSpec(
            num_scalar_prefetch=0,
            grid=(NB, NT),
            in_specs=[
                # forward direction reads time-chunk i, backward reads NT-1-i
                pl.BlockSpec((TC, BC, D), lambda b, i: (i, b, 0)),
                pl.BlockSpec((TC, BC, D), lambda b, i: (NT - 1 - i, b, 0)),
                pl.BlockSpec((D, 4 * Hp), lambda b, i: (0, 0)),
                pl.BlockSpec((D, 4 * Hp), lambda b, i: (0, 0)),
                pl.BlockSpec((1, 4 * Hp), lambda b, i: (0, 0)),
                pl.BlockSpec((1, 4 * Hp), lambda b, i: (0, 0)),
                pl.BlockSpec((Hp, 4 * Hp), lambda b, i: (0, 0)),
                pl.BlockSpec((Hp, 4 * Hp), lambda b, i: (0, 0)),
            ],
            out_specs=(
                pl.BlockSpec((TC, BC, Hp), lambda b, i: (i, b, 0)),
                pl.BlockSpec((TC, BC, Hp), lambda b, i: (NT - 1 - i, b, 0)),
            ),
            scratch_shapes=[
                pltpu.VMEM((TC, BC, 4 * Hp), jnp.float32),   # gates_x fwd
                pltpu.VMEM((TC, BC, 4 * Hp), jnp.float32),   # gates_x bwd
                pltpu.VMEM((BC, Hp), jnp.float32),           # h fwd
                pltpu.VMEM((BC, Hp), jnp.float32),           # c fwd
                pltpu.VMEM((BC, Hp), jnp.float32),           # h bwd
                pltpu.VMEM((BC, Hp), jnp.float32),           # c bwd
            ],
        ),
        compiler_params=pltpu.CompilerParams(
            dimension_semantics=("parallel", "arbitrary"),
            vmem_limit_bytes=32 * 1024 * 1024),
    )(x_tm, x_tm, wih_f, wih_b, b_f, b_b, whh_f, whh_b)

    # Strip padding, concat [fwd, bwd] along features, back to batch_first.
    out = jnp.concatenate([out_f[:T, :B, :H], out_b[:T, :B, :H]], axis=-1)
    return jnp.transpose(out, (1, 0, 2))


# -----------------------------------------------------------------------------
# Params init (matches BiLSTM.init_weights) and pure-JAX reference
# -----------------------------------------------------------------------------
def _xavier_normal(key, shape):
    fan_out, fan_in = shape
    std = (2.0 / (fan_in + fan_out)) ** 0.5
    return std * jax.random.normal(key, shape, dtype=jnp.float32)


def init_bilstm_params(key, hidden_dim):
    H = hidden_dim // 2
    k0, k1, k2, k3 = jax.random.split(key, 4)
    return {
        "wih_f": _xavier_normal(k0, (4 * H, hidden_dim)),
        "whh_f": _xavier_normal(k1, (4 * H, H)),
        "bih_f": jnp.zeros((4 * H,), jnp.float32),
        "bhh_f": jnp.zeros((4 * H,), jnp.float32),
        "wih_b": _xavier_normal(k2, (4 * H, hidden_dim)),
        "whh_b": _xavier_normal(k3, (4 * H, H)),
        "bih_b": jnp.zeros((4 * H,), jnp.float32),
        "bhh_b": jnp.zeros((4 * H,), jnp.float32),
    }


def _reference_bilstm(x, params):
    """Pure-JAX reference (lax.scan) mirroring torch.nn.LSTM semantics."""
    B, T, D = x.shape
    H = D // 2

    def cell(wih, whh, b, h, c, x_t):
        gates = x_t @ wih.T + h @ whh.T + b
        i = jax.nn.sigmoid(gates[:, 0 * H:1 * H])
        f = jax.nn.sigmoid(gates[:, 1 * H:2 * H])
        g = jnp.tanh(gates[:, 2 * H:3 * H])
        o = jax.nn.sigmoid(gates[:, 3 * H:4 * H])
        c = f * c + i * g
        h = o * jnp.tanh(c)
        return h, c

    def run(wih, whh, b, xs):
        def step(carry, x_t):
            h, c = carry
            h, c = cell(wih, whh, b, h, c, x_t)
            return (h, c), h
        h0 = jnp.zeros((B, H), jnp.float32)
        _, hs = lax.scan(step, (h0, h0), xs)
        return hs

    x_tm = jnp.transpose(x, (1, 0, 2))
    hf = run(params["wih_f"], params["whh_f"],
             params["bih_f"] + params["bhh_f"], x_tm)
    hb = run(params["wih_b"], params["whh_b"],
             params["bih_b"] + params["bhh_b"], x_tm[::-1])[::-1]
    return jnp.transpose(jnp.concatenate([hf, hb], axis=-1), (1, 0, 2))


if __name__ == "__main__":
    # Small shapes: batch=2, seq=12 (exercises time-chunking + pad masking),
    # hidden_dim=32 (so H per direction = 16).
    B, T, HIDDEN = 2, 12, 32
    key = jax.random.PRNGKey(0)
    k_x, k_p = jax.random.split(key)

    x = jax.random.normal(k_x, (B, T, HIDDEN), dtype=jnp.float32)
    params = init_bilstm_params(k_p, HIDDEN)

    ref = jax.block_until_ready(_reference_bilstm(x, params))

    # f32 run: tight semantics check.
    out = jax.block_until_ready(bilstm_forward(x, params))
    assert out.shape == (B, T, HIDDEN), out.shape
    err = float(jnp.max(jnp.abs(out - ref)))
    assert err < 1e-3, f"f32 max abs err {err}"

    # bf16-MXU-input run (v5e/v6e feedback): matmul operands in bf16,
    # f32 accumulation, f32 gate math and f32 h/c state.
    out_bf16 = jax.block_until_ready(
        bilstm_forward(x, params, compute_dtype=jnp.bfloat16))
    err_bf16 = float(jnp.max(jnp.abs(out_bf16 - ref)))
    assert err_bf16 < 5e-2, f"bf16 max abs err {err_bf16}"

    print("KERNEL_OK")
</pallas_src>

<mosaic_0001>
module attributes {stable_mosaic.version = 11 : i64} {
  func.func @_bilstm_chunk_kernel(%arg0: i32, %arg1: i32, %arg2: memref<8x8x32xf32, #tpu.memory_space<vmem>>, %arg3: memref<8x8x32xf32, #tpu.memory_space<vmem>>, %arg4: memref<32x512xf32, #tpu.memory_space<vmem>>, %arg5: memref<32x512xf32, #tpu.memory_space<vmem>>, %arg6: memref<1x512xf32, #tpu.memory_space<vmem>>, %arg7: memref<1x512xf32, #tpu.memory_space<vmem>>, %arg8: memref<128x512xf32, #tpu.memory_space<vmem>>, %arg9: memref<128x512xf32, #tpu.memory_space<vmem>>, %arg10: memref<8x8x128xf32, #tpu.memory_space<vmem>>, %arg11: memref<8x8x128xf32, #tpu.memory_space<vmem>>, %arg12: memref<8x8x512xf32, #tpu.memory_space<vmem>>, %arg13: memref<8x8x512xf32, #tpu.memory_space<vmem>>, %arg14: memref<8x128xf32, #tpu.memory_space<vmem>>, %arg15: memref<8x128xf32, #tpu.memory_space<vmem>>, %arg16: memref<8x128xf32, #tpu.memory_space<vmem>>, %arg17: memref<8x128xf32, #tpu.memory_space<vmem>>) attributes {dimension_semantics = [#tpu.dimension_semantics<parallel>, #tpu.dimension_semantics<arbitrary>], iteration_bounds = array<i64: 1, 2>, scalar_prefetch = 0 : i64, scratch_operands = 6 : i64, tpu.core_type = #tpu.core_type<tc>, window_params = [{transform_indices = @transform_0, window_bounds = array<i64: 8, 8, 32>}, {transform_indices = @transform_1, window_bounds = array<i64: 8, 8, 32>}, {pipeline_mode = #tpu.pipeline_mode<synchronous>, transform_indices = @transform_2, window_bounds = array<i64: 32, 512>}, {pipeline_mode = #tpu.pipeline_mode<synchronous>, transform_indices = @transform_3, window_bounds = array<i64: 32, 512>}, {pipeline_mode = #tpu.pipeline_mode<synchronous>, transform_indices = @transform_4, window_bounds = array<i64: 1, 512>}, {pipeline_mode = #tpu.pipeline_mode<synchronous>, transform_indices = @transform_5, window_bounds = array<i64: 1, 512>}, {pipeline_mode = #tpu.pipeline_mode<synchronous>, transform_indices = @transform_6, window_bounds = array<i64: 128, 512>}, {pipeline_mode = #tpu.pipeline_mode<synchronous>, transform_indices = @transform_7, window_bounds = array<i64: 128, 512>}, {transform_indices = @transform_8, window_bounds = array<i64: 8, 8, 128>}, {transform_indices = @transform_9, window_bounds = array<i64: 8, 8, 128>}]} {
    %c0_i32 = arith.constant 0 : i32
    %0 = arith.cmpi eq, %arg1, %c0_i32 : i32
    %1 = arith.extui %0 : i1 to i32
    %c0_i32_0 = arith.constant 0 : i32
    %2 = arith.cmpi ne, %1, %c0_i32_0 : i32
    scf.if %2 {
      %cst_201 = arith.constant 0.000000e+00 : f32
      %631 = vector.broadcast %cst_201 : f32 to vector<8x128xf32>
      %c0_202 = arith.constant 0 : index
      %c0_203 = arith.constant 0 : index
      %632 = vector.load %arg14[%c0_202, %c0_203] : memref<8x128xf32, #tpu.memory_space<vmem>>, vector<8x128xf32>
      tpu.vector_store %arg14[%c0_202, %c0_203], %631 {strides = array<i32>} : memref<8x128xf32, #tpu.memory_space<vmem>>, vector<8x128xf32>,
      %c0_204 = arith.constant 0 : index
      %c0_205 = arith.constant 0 : index
      %633 = vector.load %arg15[%c0_204, %c0_205] : memref<8x128xf32, #tpu.memory_space<vmem>>, vector<8x128xf32>
      tpu.vector_store %arg15[%c0_204, %c0_205], %631 {strides = array<i32>} : memref<8x128xf32, #tpu.memory_space<vmem>>, vector<8x128xf32>,
      %c0_206 = arith.constant 0 : index
      %c0_207 = arith.constant 0 : index
      %634 = vector.load %arg16[%c0_206, %c0_207] : memref<8x128xf32, #tpu.memory_space<vmem>>, vector<8x128xf32>
      tpu.vector_store %arg16[%c0_206, %c0_207], %631 {strides = array<i32>} : memref<8x128xf32, #tpu.memory_space<vmem>>, vector<8x128xf32>,
      %c0_208 = arith.constant 0 : index
      %c0_209 = arith.constant 0 : index
      %635 = vector.load %arg17[%c0_208, %c0_209] : memref<8x128xf32, #tpu.memory_space<vmem>>, vector<8x128xf32>
      tpu.vector_store %arg17[%c0_208, %c0_209], %631 {strides = array<i32>} : memref<8x128xf32, #tpu.memory_space<vmem>>, vector<8x128xf32>,
    } else {
    }
    %c0 = arith.constant 0 : index
    %c0_1 = arith.constant 0 : index
    %c0_2 = arith.constant 0 : index
    %3 = vector.load %arg2[%c0, %c0_1, %c0_2] : memref<8x8x32xf32, #tpu.memory_space<vmem>>, vector<8x8x32xf32>
    %4 = vector.shape_cast %3 : vector<8x8x32xf32> to vector<64x32xf32>
    %c0_3 = arith.constant 0 : index
    %c0_4 = arith.constant 0 : index
    %5 = vector.load %arg4[%c0_3, %c0_4] : memref<32x512xf32, #tpu.memory_space<vmem>>, vector<32x512xf32>
    %cst = arith.constant dense<0.000000e+00> : vector<64x512xf32>
    %6 = tpu.matmul %4, %5, %cst {dimension_numbers = #tpu.dot_dimension_numbers<[1], [0], [0], [1], [0, 0, 1, 1], [], []>} : vector<64x32xf32>, vector<32x512xf32>, vector<64x512xf32> -> vector<64x512xf32>
    %c0_5 = arith.constant 0 : index
    %c0_6 = arith.constant 0 : index
    %7 = vector.load %arg6[%c0_5, %c0_6] : memref<1x512xf32, #tpu.memory_space<vmem>>, vector<1x512xf32>
    %8 = vector.broadcast %7 : vector<1x512xf32> to vector<64x512xf32>
    %9 = arith.addf %6, %8 : vector<64x512xf32>
    %10 = vector.shape_cast %9 : vector<64x512xf32> to vector<8x8x512xf32>
    %c0_7 = arith.constant 0 : index
    %c0_8 = arith.constant 0 : index
    %c0_9 = arith.constant 0 : index
    %11 = vector.load %arg12[%c0_7, %c0_8, %c0_9] : memref<8x8x512xf32, #tpu.memory_space<vmem>>, vector<8x8x512xf32>
    tpu.vector_store %arg12[%c0_7, %c0_8, %c0_9], %10 {strides = array<i32>} : memref<8x8x512xf32, #tpu.memory_space<vmem>>, vector<8x8x512xf32>,
    %c0_10 = arith.constant 0 : index
    %c0_11 = arith.constant 0 : index
    %c0_12 = arith.constant 0 : index
    %12 = vector.load %arg3[%c0_10, %c0_11, %c0_12] : memref<8x8x32xf32, #tpu.memory_space<vmem>>, vector<8x8x32xf32>
    %13 = vector.shape_cast %12 : vector<8x8x32xf32> to vector<64x32xf32>
    %c0_13 = arith.constant 0 : index
    %c0_14 = arith.constant 0 : index
    %14 = vector.load %arg5[%c0_13, %c0_14] : memref<32x512xf32, #tpu.memory_space<vmem>>, vector<32x512xf32>
    %cst_15 = arith.constant dense<0.000000e+00> : vector<64x512xf32>
    %15 = tpu.matmul %13, %14, %cst_15 {dimension_numbers = #tpu.dot_dimension_numbers<[1], [0], [0], [1], [0, 0, 1, 1], [], []>} : vector<64x32xf32>, vector<32x512xf32>, vector<64x512xf32> -> vector<64x512xf32>
    %c0_16 = arith.constant 0 : index
    %c0_17 = arith.constant 0 : index
    %16 = vector.load %arg7[%c0_16, %c0_17] : memref<1x512xf32, #tpu.memory_space<vmem>>, vector<1x512xf32>
    %17 = vector.broadcast %16 : vector<1x512xf32> to vector<64x512xf32>
    %18 = arith.addf %15, %17 : vector<64x512xf32>
    %19 = vector.shape_cast %18 : vector<64x512xf32> to vector<8x8x512xf32>
    %c0_18 = arith.constant 0 : index
    %c0_19 = arith.constant 0 : index
    %c0_20 = arith.constant 0 : index
    %20 = vector.load %arg13[%c0_18, %c0_19, %c0_20] : memref<8x8x512xf32, #tpu.memory_space<vmem>>, vector<8x8x512xf32>
    tpu.vector_store %arg13[%c0_18, %c0_19, %c0_20], %19 {strides = array<i32>} : memref<8x8x512xf32, #tpu.memory_space<vmem>>, vector<8x8x512xf32>,
    %c0_21 = arith.constant 0 : index
    %c0_22 = arith.constant 0 : index
    %21 = vector.load %arg8[%c0_21, %c0_22] : memref<128x512xf32, #tpu.memory_space<vmem>>, vector<128x512xf32>
    %c0_23 = arith.constant 0 : index
    %c0_24 = arith.constant 0 : index
    %22 = vector.load %arg9[%c0_23, %c0_24] : memref<128x512xf32, #tpu.memory_space<vmem>>, vector<128x512xf32>
    %c0_25 = arith.constant 0 : index
    %c0_26 = arith.constant 0 : index
    %23 = vector.load %arg14[%c0_25, %c0_26] : memref<8x128xf32, #tpu.memory_space<vmem>>, vector<8x128xf32>
    %c0_27 = arith.constant 0 : index
    %c0_28 = arith.constant 0 : index
    %24 = vector.load %arg15[%c0_27, %c0_28] : memref<8x128xf32, #tpu.memory_space<vmem>>, vector<8x128xf32>
    %c0_29 = arith.constant 0 : index
    %c0_30 = arith.constant 0 : index
    %25 = vector.load %arg16[%c0_29, %c0_30] : memref<8x128xf32, #tpu.memory_space<vmem>>, vector<8x128xf32>
    %c0_31 = arith.constant 0 : index
    %c0_32 = arith.constant 0 : index
    %26 = vector.load %arg17[%c0_31, %c0_32] : memref<8x128xf32, #tpu.memory_space<vmem>>, vector<8x128xf32>
    %c0_i32_33 = arith.constant 0 : i32
    %c7_i32 = arith.constant 7 : i32
    %27 = arith.subi %c7_i32, %c0_i32_33 : i32
    %28 = arith.index_cast %c0_i32_33 : i32 to index
    %c0_34 = arith.constant 0 : index
    %c0_35 = arith.constant 0 : index
    %29 = vector.load %arg12[%28, %c0_34, %c0_35] : memref<8x8x512xf32, #tpu.memory_space<vmem>>, vector<1x8x512xf32>
    %30 = vector.shape_cast %29 : vector<1x8x512xf32> to vector<8x512xf32>
    %cst_36 = arith.constant dense<0.000000e+00> : vector<8x512xf32>
    %31 = tpu.matmul %23, %21, %cst_36 {dimension_numbers = #tpu.dot_dimension_numbers<[1], [0], [0], [1], [0, 0, 1, 1], [], []>} : vector<8x128xf32>, vector<128x512xf32>, vector<8x512xf32> -> vector<8x512xf32>
    %32 = arith.addf %30, %31 : vector<8x512xf32>
    %33 = vector.extract_strided_slice %32 {offsets = [0, 0], sizes = [8, 128], strides = [1, 1]} : vector<8x512xf32> to vector<8x128xf32>
    %34 = arith.negf %33 : vector<8x128xf32>
    %35 = math.exp %34 : vector<8x128xf32>
    %cst_37 = arith.constant 1.000000e+00 : f32
    %36 = vector.broadcast %cst_37 : f32 to vector<8x128xf32>
    %37 = arith.addf %36, %35 : vector<8x128xf32>
    %38 = arith.divf %36, %37 : vector<8x128xf32>
    %39 = vector.extract_strided_slice %32 {offsets = [0, 128], sizes = [8, 128], strides = [1, 1]} : vector<8x512xf32> to vector<8x128xf32>
    %40 = arith.negf %39 : vector<8x128xf32>
    %41 = math.exp %40 : vector<8x128xf32>
    %cst_38 = arith.constant 1.000000e+00 : f32
    %42 = vector.broadcast %cst_38 : f32 to vector<8x128xf32>
    %43 = arith.addf %42, %41 : vector<8x128xf32>
    %44 = arith.divf %42, %43 : vector<8x128xf32>
    %45 = vector.extract_strided_slice %32 {offsets = [0, 256], sizes = [8, 128], strides = [1, 1]} : vector<8x512xf32> to vector<8x128xf32>
    %46 = math.tanh %45 : vector<8x128xf32>
    %47 = vector.extract_strided_slice %32 {offsets = [0, 384], sizes = [8, 128], strides = [1, 1]} : vector<8x512xf32> to vector<8x128xf32>
    %48 = arith.negf %47 : vector<8x128xf32>
    %49 = math.exp %48 : vector<8x128xf32>
    %cst_39 = arith.constant 1.000000e+00 : f32
    %50 = vector.broadcast %cst_39 : f32 to vector<8x128xf32>
    %51 = arith.addf %50, %49 : vector<8x128xf32>
    %52 = arith.divf %50, %51 : vector<8x128xf32>
    %53 = arith.mulf %44, %24 : vector<8x128xf32>
    %54 = arith.mulf %38, %46 : vector<8x128xf32>
    %55 = arith.addf %53, %54 : vector<8x128xf32>
    %56 = math.tanh %55 : vector<8x128xf32>
    %57 = arith.mulf %52, %56 : vector<8x128xf32>
    %58 = arith.index_cast %27 : i32 to index
    %c0_40 = arith.constant 0 : index
    %c0_41 = arith.constant 0 : index
    %59 = vector.load %arg13[%58, %c0_40, %c0_41] : memref<8x8x512xf32, #tpu.memory_space<vmem>>, vector<1x8x512xf32>
    %60 = vector.shape_cast %59 : vector<1x8x512xf32> to vector<8x512xf32>
    %cst_42 = arith.constant dense<0.000000e+00> : vector<8x512xf32>
    %61 = tpu.matmul %25, %22, %cst_42 {dimension_numbers = #tpu.dot_dimension_numbers<[1], [0], [0], [1], [0, 0, 1, 1], [], []>} : vector<8x128xf32>, vector<128x512xf32>, vector<8x512xf32> -> vector<8x512xf32>
    %62 = arith.addf %60, %61 : vector<8x512xf32>
    %63 = vector.extract_strided_slice %62 {offsets = [0, 0], sizes = [8, 128], strides = [1, 1]} : vector<8x512xf32> to vector<8x128xf32>
    %64 = arith.negf %63 : vector<8x128xf32>
    %65 = math.exp %64 : vector<8x128xf32>
    %cst_43 = arith.constant 1.000000e+00 : f32
    %66 = vector.broadcast %cst_43 : f32 to vector<8x128xf32>
    %67 = arith.addf %66, %65 : vector<8x128xf32>
    %68 = arith.divf %66, %67 : vector<8x128xf32>
    %69 = vector.extract_strided_slice %62 {offsets = [0, 128], sizes = [8, 128], strides = [1, 1]} : vector<8x512xf32> to vector<8x128xf32>
    %70 = arith.negf %69 : vector<8x128xf32>
    %71 = math.exp %70 : vector<8x128xf32>
    %cst_44 = arith.constant 1.000000e+00 : f32
    %72 = vector.broadcast %cst_44 : f32 to vector<8x128xf32>
    %73 = arith.addf %72, %71 : vector<8x128xf32>
    %74 = arith.divf %72, %73 : vector<8x128xf32>
    %75 = vector.extract_strided_slice %62 {offsets = [0, 256], sizes = [8, 128], strides = [1, 1]} : vector<8x512xf32> to vector<8x128xf32>
    %76 = math.tanh %75 : vector<8x128xf32>
    %77 = vector.extract_strided_slice %62 {offsets = [0, 384], sizes = [8, 128], strides = [1, 1]} : vector<8x512xf32> to vector<8x128xf32>
    %78 = arith.negf %77 : vector<8x128xf32>
    %79 = math.exp %78 : vector<8x128xf32>
    %cst_45 = arith.constant 1.000000e+00 : f32
    %80 = vector.broadcast %cst_45 : f32 to vector<8x128xf32>
    %81 = arith.addf %80, %79 : vector<8x128xf32>
    %82 = arith.divf %80, %81 : vector<8x128xf32>
    %83 = arith.mulf %74, %26 : vector<8x128xf32>
    %84 = arith.mulf %68, %76 : vector<8x128xf32>
    %85 = arith.addf %83, %84 : vector<8x128xf32>
    %86 = math.tanh %85 : vector<8x128xf32>
    %87 = arith.mulf %82, %86 : vector<8x128xf32>
    %c1_i32 = arith.constant 1 : i32
    %88 = arith.subi %c1_i32, %arg1 : i32
    %c8_i32 = arith.constant 8 : i32
    %89 = arith.muli %88, %c8_i32 : i32
    %90 = arith.addi %89, %27 : i32
    %c12_i32 = arith.constant 12 : i32
    %91 = arith.cmpi slt, %90, %c12_i32 : i32
    %92 = arith.select %91, %87, %25 : vector<8x128xf32>
    %93 = arith.select %91, %85, %26 : vector<8x128xf32>
    %94 = arith.index_cast %c0_i32_33 : i32 to index
    %c0_46 = arith.constant 0 : index
    %c0_47 = arith.constant 0 : index
    %95 = vector.load %arg10[%94, %c0_46, %c0_47] : memref<8x8x128xf32, #tpu.memory_space<vmem>>, vector<1x8x128xf32>
    %96 = vector.shape_cast %95 : vector<1x8x128xf32> to vector<8x128xf32>
    %97 = vector.shape_cast %57 : vector<8x128xf32> to vector<1x8x128xf32>
    tpu.vector_store %arg10[%94, %c0_46, %c0_47], %97 {strides = array<i32>} : memref<8x8x128xf32, #tpu.memory_space<vmem>>, vector<1x8x128xf32>,
    %98 = arith.index_cast %27 : i32 to index
    %c0_48 = arith.constant 0 : index
    %c0_49 = arith.constant 0 : index
    %99 = vector.load %arg11[%98, %c0_48, %c0_49] : memref<8x8x128xf32, #tpu.memory_space<vmem>>, vector<1x8x128xf32>
    %100 = vector.shape_cast %99 : vector<1x8x128xf32> to vector<8x128xf32>
    %101 = vector.shape_cast %92 : vector<8x128xf32> to vector<1x8x128xf32>
    tpu.vector_store %arg11[%98, %c0_48, %c0_49], %101 {strides = array<i32>} : memref<8x8x128xf32, #tpu.memory_space<vmem>>, vector<1x8x128xf32>,
    %c1_i32_50 = arith.constant 1 : i32
    %c7_i32_51 = arith.constant 7 : i32
    %102 = arith.subi %c7_i32_51, %c1_i32_50 : i32
    %103 = arith.index_cast %c1_i32_50 : i32 to index
    %c0_52 = arith.constant 0 : index
    %c0_53 = arith.constant 0 : index
    %104 = vector.load %arg12[%103, %c0_52, %c0_53] : memref<8x8x512xf32, #tpu.memory_space<vmem>>, vector<1x8x512xf32>
    %105 = vector.shape_cast %104 : vector<1x8x512xf32> to vector<8x512xf32>
    %cst_54 = arith.constant dense<0.000000e+00> : vector<8x512xf32>
    %106 = tpu.matmul %57, %21, %cst_54 {dimension_numbers = #tpu.dot_dimension_numbers<[1], [0], [0], [1], [0, 0, 1, 1], [], []>} : vector<8x128xf32>, vector<128x512xf32>, vector<8x512xf32> -> vector<8x512xf32>
    %107 = arith.addf %105, %106 : vector<8x512xf32>
    %108 = vector.extract_strided_slice %107 {offsets = [0, 0], sizes = [8, 128], strides = [1, 1]} : vector<8x512xf32> to vector<8x128xf32>
    %109 = arith.negf %108 : vector<8x128xf32>
    %110 = math.exp %109 : vector<8x128xf32>
    %cst_55 = arith.constant 1.000000e+00 : f32
    %111 = vector.broadcast %cst_55 : f32 to vector<8x128xf32>
    %112 = arith.addf %111, %110 : vector<8x128xf32>
    %113 = arith.divf %111, %112 : vector<8x128xf32>
    %114 = vector.extract_strided_slice %107 {offsets = [0, 128], sizes = [8, 128], strides = [1, 1]} : vector<8x512xf32> to vector<8x128xf32>
    %115 = arith.negf %114 : vector<8x128xf32>
    %116 = math.exp %115 : vector<8x128xf32>
    %cst_56 = arith.constant 1.000000e+00 : f32
    %117 = vector.broadcast %cst_56 : f32 to vector<8x128xf32>
    %118 = arith.addf %117, %116 : vector<8x128xf32>
    %119 = arith.divf %117, %118 : vector<8x128xf32>
    %120 = vector.extract_strided_slice %107 {offsets = [0, 256], sizes = [8, 128], strides = [1, 1]} : vector<8x512xf32> to vector<8x128xf32>
    %121 = math.tanh %120 : vector<8x128xf32>
    %122 = vector.extract_strided_slice %107 {offsets = [0, 384], sizes = [8, 128], strides = [1, 1]} : vector<8x512xf32> to vector<8x128xf32>
    %123 = arith.negf %122 : vector<8x128xf32>
    %124 = math.exp %123 : vector<8x128xf32>
    %cst_57 = arith.constant 1.000000e+00 : f32
    %125 = vector.broadcast %cst_57 : f32 to vector<8x128xf32>
    %126 = arith.addf %125, %124 : vector<8x128xf32>
    %127 = arith.divf %125, %126 : vector<8x128xf32>
    %128 = arith.mulf %119, %55 : vector<8x128xf32>
    %129 = arith.mulf %113, %121 : vector<8x128xf32>
    %130 = arith.addf %128, %129 : vector<8x128xf32>
    %131 = math.tanh %130 : vector<8x128xf32>
    %132 = arith.mulf %127, %131 : vector<8x128xf32>
    %133 = arith.index_cast %102 : i32 to index
    %c0_58 = arith.constant 0 : index
    %c0_59 = arith.constant 0 : index
    %134 = vector.load %arg13[%133, %c0_58, %c0_59] : memref<8x8x512xf32, #tpu.memory_space<vmem>>, vector<1x8x512xf32>
    %135 = vector.shape_cast %134 : vector<1x8x512xf32> to vector<8x512xf32>
    %cst_60 = arith.constant dense<0.000000e+00> : vector<8x512xf32>
    %136 = tpu.matmul %92, %22, %cst_60 {dimension_numbers = #tpu.dot_dimension_numbers<[1], [0], [0], [1], [0, 0, 1, 1], [], []>} : vector<8x128xf32>, vector<128x512xf32>, vector<8x512xf32> -> vector<8x512xf32>
    %137 = arith.addf %135, %136 : vector<8x512xf32>
    %138 = vector.extract_strided_slice %137 {offsets = [0, 0], sizes = [8, 128], strides = [1, 1]} : vector<8x512xf32> to vector<8x128xf32>
    %139 = arith.negf %138 : vector<8x128xf32>
    %140 = math.exp %139 : vector<8x128xf32>
    %cst_61 = arith.constant 1.000000e+00 : f32
    %141 = vector.broadcast %cst_61 : f32 to vector<8x128xf32>
    %142 = arith.addf %141, %140 : vector<8x128xf32>
    %143 = arith.divf %141, %142 : vector<8x128xf32>
    %144 = vector.extract_strided_slice %137 {offsets = [0, 128], sizes = [8, 128], strides = [1, 1]} : vector<8x512xf32> to vector<8x128xf32>
    %145 = arith.negf %144 : vector<8x128xf32>
    %146 = math.exp %145 : vector<8x128xf32>
    %cst_62 = arith.constant 1.000000e+00 : f32
    %147 = vector.broadcast %cst_62 : f32 to vector<8x128xf32>
    %148 = arith.addf %147, %146 : vector<8x128xf32>
    %149 = arith.divf %147, %148 : vector<8x128xf32>
    %150 = vector.extract_strided_slice %137 {offsets = [0, 256], sizes = [8, 128], strides = [1, 1]} : vector<8x512xf32> to vector<8x128xf32>
    %151 = math.tanh %150 : vector<8x128xf32>
    %152 = vector.extract_strided_slice %137 {offsets = [0, 384], sizes = [8, 128], strides = [1, 1]} : vector<8x512xf32> to vector<8x128xf32>
    %153 = arith.negf %152 : vector<8x128xf32>
    %154 = math.exp %153 : vector<8x128xf32>
    %cst_63 = arith.constant 1.000000e+00 : f32
    %155 = vector.broadcast %cst_63 : f32 to vector<8x128xf32>
    %156 = arith.addf %155, %154 : vector<8x128xf32>
    %157 = arith.divf %155, %156 : vector<8x128xf32>
    %158 = arith.mulf %149, %93 : vector<8x128xf32>
    %159 = arith.mulf %143, %151 : vector<8x128xf32>
    %160 = arith.addf %158, %159 : vector<8x128xf32>
    %161 = math.tanh %160 : vector<8x128xf32>
    %162 = arith.mulf %157, %161 : vector<8x128xf32>
    %c1_i32_64 = arith.constant 1 : i32
    %163 = arith.subi %c1_i32_64, %arg1 : i32
    %c8_i32_65 = arith.constant 8 : i32
    %164 = arith.muli %163, %c8_i32_65 : i32
    %165 = arith.addi %164, %102 : i32
    %c12_i32_66 = arith.constant 12 : i32
    %166 = arith.cmpi slt, %165, %c12_i32_66 : i32
    %167 = arith.select %166, %162, %92 : vector<8x128xf32>
    %168 = arith.select %166, %160, %93 : vector<8x128xf32>
    %169 = arith.index_cast %c1_i32_50 : i32 to index
    %c0_67 = arith.constant 0 : index
    %c0_68 = arith.constant 0 : index
    %170 = vector.load %arg10[%169, %c0_67, %c0_68] : memref<8x8x128xf32, #tpu.memory_space<vmem>>, vector<1x8x128xf32>
    %171 = vector.shape_cast %170 : vector<1x8x128xf32> to vector<8x128xf32>
    %172 = vector.shape_cast %132 : vector<8x128xf32> to vector<1x8x128xf32>
    tpu.vector_store %arg10[%169, %c0_67, %c0_68], %172 {strides = array<i32>} : memref<8x8x128xf32, #tpu.memory_space<vmem>>, vector<1x8x128xf32>,
    %173 = arith.index_cast %102 : i32 to index
    %c0_69 = arith.constant 0 : index
    %c0_70 = arith.constant 0 : index
    %174 = vector.load %arg11[%173, %c0_69, %c0_70] : memref<8x8x128xf32, #tpu.memory_space<vmem>>, vector<1x8x128xf32>
    %175 = vector.shape_cast %174 : vector<1x8x128xf32> to vector<8x128xf32>
    %176 = vector.shape_cast %167 : vector<8x128xf32> to vector<1x8x128xf32>
    tpu.vector_store %arg11[%173, %c0_69, %c0_70], %176 {strides = array<i32>} : memref<8x8x128xf32, #tpu.memory_space<vmem>>, vector<1x8x128xf32>,
    %c2_i32 = arith.constant 2 : i32
    %c7_i32_71 = arith.constant 7 : i32
    %177 = arith.subi %c7_i32_71, %c2_i32 : i32
    %178 = arith.index_cast %c2_i32 : i32 to index
    %c0_72 = arith.constant 0 : index
    %c0_73 = arith.constant 0 : index
    %179 = vector.load %arg12[%178, %c0_72, %c0_73] : memref<8x8x512xf32, #tpu.memory_space<vmem>>, vector<1x8x512xf32>
    %180 = vector.shape_cast %179 : vector<1x8x512xf32> to vector<8x512xf32>
    %cst_74 = arith.constant dense<0.000000e+00> : vector<8x512xf32>
    %181 = tpu.matmul %132, %21, %cst_74 {dimension_numbers = #tpu.dot_dimension_numbers<[1], [0], [0], [1], [0, 0, 1, 1], [], []>} : vector<8x128xf32>, vector<128x512xf32>, vector<8x512xf32> -> vector<8x512xf32>
    %182 = arith.addf %180, %181 : vector<8x512xf32>
    %183 = vector.extract_strided_slice %182 {offsets = [0, 0], sizes = [8, 128], strides = [1, 1]} : vector<8x512xf32> to vector<8x128xf32>
    %184 = arith.negf %183 : vector<8x128xf32>
    %185 = math.exp %184 : vector<8x128xf32>
    %cst_75 = arith.constant 1.000000e+00 : f32
    %186 = vector.broadcast %cst_75 : f32 to vector<8x128xf32>
    %187 = arith.addf %186, %185 : vector<8x128xf32>
    %188 = arith.divf %186, %187 : vector<8x128xf32>
    %189 = vector.extract_strided_slice %182 {offsets = [0, 128], sizes = [8, 128], strides = [1, 1]} : vector<8x512xf32> to vector<8x128xf32>
    %190 = arith.negf %189 : vector<8x128xf32>
    %191 = math.exp %190 : vector<8x128xf32>
    %cst_76 = arith.constant 1.000000e+00 : f32
    %192 = vector.broadcast %cst_76 : f32 to vector<8x128xf32>
    %193 = arith.addf %192, %191 : vector<8x128xf32>
    %194 = arith.divf %192, %193 : vector<8x128xf32>
    %195 = vector.extract_strided_slice %182 {offsets = [0, 256], sizes = [8, 128], strides = [1, 1]} : vector<8x512xf32> to vector<8x128xf32>
    %196 = math.tanh %195 : vector<8x128xf32>
    %197 = vector.extract_strided_slice %182 {offsets = [0, 384], sizes = [8, 128], strides = [1, 1]} : vector<8x512xf32> to vector<8x128xf32>
    %198 = arith.negf %197 : vector<8x128xf32>
    %199 = math.exp %198 : vector<8x128xf32>
    %cst_77 = arith.constant 1.000000e+00 : f32
    %200 = vector.broadcast %cst_77 : f32 to vector<8x128xf32>
    %201 = arith.addf %200, %199 : vector<8x128xf32>
    %202 = arith.divf %200, %201 : vector<8x128xf32>
    %203 = arith.mulf %194, %130 : vector<8x128xf32>
    %204 = arith.mulf %188, %196 : vector<8x128xf32>
    %205 = arith.addf %203, %204 : vector<8x128xf32>
    %206 = math.tanh %205 : vector<8x128xf32>
    %207 = arith.mulf %202, %206 : vector<8x128xf32>
    %208 = arith.index_cast %177 : i32 to index
    %c0_78 = arith.constant 0 : index
    %c0_79 = arith.constant 0 : index
    %209 = vector.load %arg13[%208, %c0_78, %c0_79] : memref<8x8x512xf32, #tpu.memory_space<vmem>>, vector<1x8x512xf32>
    %210 = vector.shape_cast %209 : vector<1x8x512xf32> to vector<8x512xf32>
    %cst_80 = arith.constant dense<0.000000e+00> : vector<8x512xf32>
    %211 = tpu.matmul %167, %22, %cst_80 {dimension_numbers = #tpu.dot_dimension_numbers<[1], [0], [0], [1], [0, 0, 1, 1], [], []>} : vector<8x128xf32>, vector<128x512xf32>, vector<8x512xf32> -> vector<8x512xf32>
    %212 = arith.addf %210, %211 : vector<8x512xf32>
    %213 = vector.extract_strided_slice %212 {offsets = [0, 0], sizes = [8, 128], strides = [1, 1]} : vector<8x512xf32> to vector<8x128xf32>
    %214 = arith.negf %213 : vector<8x128xf32>
    %215 = math.exp %214 : vector<8x128xf32>
    %cst_81 = arith.constant 1.000000e+00 : f32
    %216 = vector.broadcast %cst_81 : f32 to vector<8x128xf32>
    %217 = arith.addf %216, %215 : vector<8x128xf32>
    %218 = arith.divf %216, %217 : vector<8x128xf32>
    %219 = vector.extract_strided_slice %212 {offsets = [0, 128], sizes = [8, 128], strides = [1, 1]} : vector<8x512xf32> to vector<8x128xf32>
    %220 = arith.negf %219 : vector<8x128xf32>
    %221 = math.exp %220 : vector<8x128xf32>
    %cst_82 = arith.constant 1.000000e+00 : f32
    %222 = vector.broadcast %cst_82 : f32 to vector<8x128xf32>
    %223 = arith.addf %222, %221 : vector<8x128xf32>
    %224 = arith.divf %222, %223 : vector<8x128xf32>
    %225 = vector.extract_strided_slice %212 {offsets = [0, 256], sizes = [8, 128], strides = [1, 1]} : vector<8x512xf32> to vector<8x128xf32>
    %226 = math.tanh %225 : vector<8x128xf32>
    %227 = vector.extract_strided_slice %212 {offsets = [0, 384], sizes = [8, 128], strides = [1, 1]} : vector<8x512xf32> to vector<8x128xf32>
    %228 = arith.negf %227 : vector<8x128xf32>
    %229 = math.exp %228 : vector<8x128xf32>
    %cst_83 = arith.constant 1.000000e+00 : f32
    %230 = vector.broadcast %cst_83 : f32 to vector<8x128xf32>
    %231 = arith.addf %230, %229 : vector<8x128xf32>
    %232 = arith.divf %230, %231 : vector<8x128xf32>
    %233 = arith.mulf %224, %168 : vector<8x128xf32>
    %234 = arith.mulf %218, %226 : vector<8x128xf32>
    %235 = arith.addf %233, %234 : vector<8x128xf32>
    %236 = math.tanh %235 : vector<8x128xf32>
    %237 = arith.mulf %232, %236 : vector<8x128xf32>
    %c1_i32_84 = arith.constant 1 : i32
    %238 = arith.subi %c1_i32_84, %arg1 : i32
    %c8_i32_85 = arith.constant 8 : i32
    %239 = arith.muli %238, %c8_i32_85 : i32
    %240 = arith.addi %239, %177 : i32
    %c12_i32_86 = arith.constant 12 : i32
    %241 = arith.cmpi slt, %240, %c12_i32_86 : i32
    %242 = arith.select %241, %237, %167 : vector<8x128xf32>
    %243 = arith.select %241, %235, %168 : vector<8x128xf32>
    %244 = arith.index_cast %c2_i32 : i32 to index
    %c0_87 = arith.constant 0 : index
    %c0_88 = arith.constant 0 : index
    %245 = vector.load %arg10[%244, %c0_87, %c0_88] : memref<8x8x128xf32, #tpu.memory_space<vmem>>, vector<1x8x128xf32>
    %246 = vector.shape_cast %245 : vector<1x8x128xf32> to vector<8x128xf32>
    %247 = vector.shape_cast %207 : vector<8x128xf32> to vector<1x8x128xf32>
    tpu.vector_store %arg10[%244, %c0_87, %c0_88], %247 {strides = array<i32>} : memref<8x8x128xf32, #tpu.memory_space<vmem>>, vector<1x8x128xf32>,
    %248 = arith.index_cast %177 : i32 to index
    %c0_89 = arith.constant 0 : index
    %c0_90 = arith.constant 0 : index
    %249 = vector.load %arg11[%248, %c0_89, %c0_90] : memref<8x8x128xf32, #tpu.memory_space<vmem>>, vector<1x8x128xf32>
    %250 = vector.shape_cast %249 : vector<1x8x128xf32> to vector<8x128xf32>
    %251 = vector.shape_cast %242 : vector<8x128xf32> to vector<1x8x128xf32>
    tpu.vector_store %arg11[%248, %c0_89, %c0_90], %251 {strides = array<i32>} : memref<8x8x128xf32, #tpu.memory_space<vmem>>, vector<1x8x128xf32>,
    %c3_i32 = arith.constant 3 : i32
    %c7_i32_91 = arith.constant 7 : i32
    %252 = arith.subi %c7_i32_91, %c3_i32 : i32
    %253 = arith.index_cast %c3_i32 : i32 to index
    %c0_92 = arith.constant 0 : index
    %c0_93 = arith.constant 0 : index
    %254 = vector.load %arg12[%253, %c0_92, %c0_93] : memref<8x8x512xf32, #tpu.memory_space<vmem>>, vector<1x8x512xf32>
    %255 = vector.shape_cast %254 : vector<1x8x512xf32> to vector<8x512xf32>
    %cst_94 = arith.constant dense<0.000000e+00> : vector<8x512xf32>
    %256 = tpu.matmul %207, %21, %cst_94 {dimension_numbers = #tpu.dot_dimension_numbers<[1], [0], [0], [1], [0, 0, 1, 1], [], []>} : vector<8x128xf32>, vector<128x512xf32>, vector<8x512xf32> -> vector<8x512xf32>
    %257 = arith.addf %255, %256 : vector<8x512xf32>
    %258 = vector.extract_strided_slice %257 {offsets = [0, 0], sizes = [8, 128], strides = [1, 1]} : vector<8x512xf32> to vector<8x128xf32>
    %259 = arith.negf %258 : vector<8x128xf32>
    %260 = math.exp %259 : vector<8x128xf32>
    %cst_95 = arith.constant 1.000000e+00 : f32
    %261 = vector.broadcast %cst_95 : f32 to vector<8x128xf32>
    %262 = arith.addf %261, %260 : vector<8x128xf32>
    %263 = arith.divf %261, %262 : vector<8x128xf32>
    %264 = vector.extract_strided_slice %257 {offsets = [0, 128], sizes = [8, 128], strides = [1, 1]} : vector<8x512xf32> to vector<8x128xf32>
    %265 = arith.negf %264 : vector<8x128xf32>
    %266 = math.exp %265 : vector<8x128xf32>
    %cst_96 = arith.constant 1.000000e+00 : f32
    %267 = vector.broadcast %cst_96 : f32 to vector<8x128xf32>
    %268 = arith.addf %267, %266 : vector<8x128xf32>
    %269 = arith.divf %267, %268 : vector<8x128xf32>
    %270 = vector.extract_strided_slice %257 {offsets = [0, 256], sizes = [8, 128], strides = [1, 1]} : vector<8x512xf32> to vector<8x128xf32>
    %271 = math.tanh %270 : vector<8x128xf32>
    %272 = vector.extract_strided_slice %257 {offsets = [0, 384], sizes = [8, 128], strides = [1, 1]} : vector<8x512xf32> to vector<8x128xf32>
    %273 = arith.negf %272 : vector<8x128xf32>
    %274 = math.exp %273 : vector<8x128xf32>
    %cst_97 = arith.constant 1.000000e+00 : f32
    %275 = vector.broadcast %cst_97 : f32 to vector<8x128xf32>
    %276 = arith.addf %275, %274 : vector<8x128xf32>
    %277 = arith.divf %275, %276 : vector<8x128xf32>
    %278 = arith.mulf %269, %205 : vector<8x128xf32>
    %279 = arith.mulf %263, %271 : vector<8x128xf32>
    %280 = arith.addf %278, %279 : vector<8x128xf32>
    %281 = math.tanh %280 : vector<8x128xf32>
    %282 = arith.mulf %277, %281 : vector<8x128xf32>
    %283 = arith.index_cast %252 : i32 to index
    %c0_98 = arith.constant 0 : index
    %c0_99 = arith.constant 0 : index
    %284 = vector.load %arg13[%283, %c0_98, %c0_99] : memref<8x8x512xf32, #tpu.memory_space<vmem>>, vector<1x8x512xf32>
    %285 = vector.shape_cast %284 : vector<1x8x512xf32> to vector<8x512xf32>
    %cst_100 = arith.constant dense<0.000000e+00> : vector<8x512xf32>
    %286 = tpu.matmul %242, %22, %cst_100 {dimension_numbers = #tpu.dot_dimension_numbers<[1], [0], [0], [1], [0, 0, 1, 1], [], []>} : vector<8x128xf32>, vector<128x512xf32>, vector<8x512xf32> -> vector<8x512xf32>
    %287 = arith.addf %285, %286 : vector<8x512xf32>
    %288 = vector.extract_strided_slice %287 {offsets = [0, 0], sizes = [8, 128], strides = [1, 1]} : vector<8x512xf32> to vector<8x128xf32>
    %289 = arith.negf %288 : vector<8x128xf32>
    %290 = math.exp %289 : vector<8x128xf32>
    %cst_101 = arith.constant 1.000000e+00 : f32
    %291 = vector.broadcast %cst_101 : f32 to vector<8x128xf32>
    %292 = arith.addf %291, %290 : vector<8x128xf32>
    %293 = arith.divf %291, %292 : vector<8x128xf32>
    %294 = vector.extract_strided_slice %287 {offsets = [0, 128], sizes = [8, 128], strides = [1, 1]} : vector<8x512xf32> to vector<8x128xf32>
    %295 = arith.negf %294 : vector<8x128xf32>
    %296 = math.exp %295 : vector<8x128xf32>
    %cst_102 = arith.constant 1.000000e+00 : f32
    %297 = vector.broadcast %cst_102 : f32 to vector<8x128xf32>
    %298 = arith.addf %297, %296 : vector<8x128xf32>
    %299 = arith.divf %297, %298 : vector<8x128xf32>
    %300 = vector.extract_strided_slice %287 {offsets = [0, 256], sizes = [8, 128], strides = [1, 1]} : vector<8x512xf32> to vector<8x128xf32>
    %301 = math.tanh %300 : vector<8x128xf32>
    %302 = vector.extract_strided_slice %287 {offsets = [0, 384], sizes = [8, 128], strides = [1, 1]} : vector<8x512xf32> to vector<8x128xf32>
    %303 = arith.negf %302 : vector<8x128xf32>
    %304 = math.exp %303 : vector<8x128xf32>
    %cst_103 = arith.constant 1.000000e+00 : f32
    %305 = vector.broadcast %cst_103 : f32 to vector<8x128xf32>
    %306 = arith.addf %305, %304 : vector<8x128xf32>
    %307 = arith.divf %305, %306 : vector<8x128xf32>
    %308 = arith.mulf %299, %243 : vector<8x128xf32>
    %309 = arith.mulf %293, %301 : vector<8x128xf32>
    %310 = arith.addf %308, %309 : vector<8x128xf32>
    %311 = math.tanh %310 : vector<8x128xf32>
    %312 = arith.mulf %307, %311 : vector<8x128xf32>
    %c1_i32_104 = arith.constant 1 : i32
    %313 = arith.subi %c1_i32_104, %arg1 : i32
    %c8_i32_105 = arith.constant 8 : i32
    %314 = arith.muli %313, %c8_i32_105 : i32
    %315 = arith.addi %314, %252 : i32
    %c12_i32_106 = arith.constant 12 : i32
    %316 = arith.cmpi slt, %315, %c12_i32_106 : i32
    %317 = arith.select %316, %312, %242 : vector<8x128xf32>
    %318 = arith.select %316, %310, %243 : vector<8x128xf32>
    %319 = arith.index_cast %c3_i32 : i32 to index
    %c0_107 = arith.constant 0 : index
    %c0_108 = arith.constant 0 : index
    %320 = vector.load %arg10[%319, %c0_107, %c0_108] : memref<8x8x128xf32, #tpu.memory_space<vmem>>, vector<1x8x128xf32>
    %321 = vector.shape_cast %320 : vector<1x8x128xf32> to vector<8x128xf32>
    %322 = vector.shape_cast %282 : vector<8x128xf32> to vector<1x8x128xf32>
    tpu.vector_store %arg10[%319, %c0_107, %c0_108], %322 {strides = array<i32>} : memref<8x8x128xf32, #tpu.memory_space<vmem>>, vector<1x8x128xf32>,
    %323 = arith.index_cast %252 : i32 to index
    %c0_109 = arith.constant 0 : index
    %c0_110 = arith.constant 0 : index
    %324 = vector.load %arg11[%323, %c0_109, %c0_110] : memref<8x8x128xf32, #tpu.memory_space<vmem>>, vector<1x8x128xf32>
    %325 = vector.shape_cast %324 : vector<1x8x128xf32> to vector<8x128xf32>
    %326 = vector.shape_cast %317 : vector<8x128xf32> to vector<1x8x128xf32>
    tpu.vector_store %arg11[%323, %c0_109, %c0_110], %326 {strides = array<i32>} : memref<8x8x128xf32, #tpu.memory_space<vmem>>, vector<1x8x128xf32>,
    %c4_i32 = arith.constant 4 : i32
    %c7_i32_111 = arith.constant 7 : i32
    %327 = arith.subi %c7_i32_111, %c4_i32 : i32
    %328 = arith.index_cast %c4_i32 : i32 to index
    %c0_112 = arith.constant 0 : index
    %c0_113 = arith.constant 0 : index
    %329 = vector.load %arg12[%328, %c0_112, %c0_113] : memref<8x8x512xf32, #tpu.memory_space<vmem>>, vector<1x8x512xf32>
    %330 = vector.shape_cast %329 : vector<1x8x512xf32> to vector<8x512xf32>
    %cst_114 = arith.constant dense<0.000000e+00> : vector<8x512xf32>
    %331 = tpu.matmul %282, %21, %cst_114 {dimension_numbers = #tpu.dot_dimension_numbers<[1], [0], [0], [1], [0, 0, 1, 1], [], []>} : vector<8x128xf32>, vector<128x512xf32>, vector<8x512xf32> -> vector<8x512xf32>
    %332 = arith.addf %330, %331 : vector<8x512xf32>
    %333 = vector.extract_strided_slice %332 {offsets = [0, 0], sizes = [8, 128], strides = [1, 1]} : vector<8x512xf32> to vector<8x128xf32>
    %334 = arith.negf %333 : vector<8x128xf32>
    %335 = math.exp %334 : vector<8x128xf32>
    %cst_115 = arith.constant 1.000000e+00 : f32
    %336 = vector.broadcast %cst_115 : f32 to vector<8x128xf32>
    %337 = arith.addf %336, %335 : vector<8x128xf32>
    %338 = arith.divf %336, %337 : vector<8x128xf32>
    %339 = vector.extract_strided_slice %332 {offsets = [0, 128], sizes = [8, 128], strides = [1, 1]} : vector<8x512xf32> to vector<8x128xf32>
    %340 = arith.negf %339 : vector<8x128xf32>
    %341 = math.exp %340 : vector<8x128xf32>
    %cst_116 = arith.constant 1.000000e+00 : f32
    %342 = vector.broadcast %cst_116 : f32 to vector<8x128xf32>
    %343 = arith.addf %342, %341 : vector<8x128xf32>
    %344 = arith.divf %342, %343 : vector<8x128xf32>
    %345 = vector.extract_strided_slice %332 {offsets = [0, 256], sizes = [8, 128], strides = [1, 1]} : vector<8x512xf32> to vector<8x128xf32>
    %346 = math.tanh %345 : vector<8x128xf32>
    %347 = vector.extract_strided_slice %332 {offsets = [0, 384], sizes = [8, 128], strides = [1, 1]} : vector<8x512xf32> to vector<8x128xf32>
    %348 = arith.negf %347 : vector<8x128xf32>
    %349 = math.exp %348 : vector<8x128xf32>
    %cst_117 = arith.constant 1.000000e+00 : f32
    %350 = vector.broadcast %cst_117 : f32 to vector<8x128xf32>
    %351 = arith.addf %350, %349 : vector<8x128xf32>
    %352 = arith.divf %350, %351 : vector<8x128xf32>
    %353 = arith.mulf %344, %280 : vector<8x128xf32>
    %354 = arith.mulf %338, %346 : vector<8x128xf32>
    %355 = arith.addf %353, %354 : vector<8x128xf32>
    %356 = math.tanh %355 : vector<8x128xf32>
    %357 = arith.mulf %352, %356 : vector<8x128xf32>
    %358 = arith.index_cast %327 : i32 to index
    %c0_118 = arith.constant 0 : index
    %c0_119 = arith.constant 0 : index
    %359 = vector.load %arg13[%358, %c0_118, %c0_119] : memref<8x8x512xf32, #tpu.memory_space<vmem>>, vector<1x8x512xf32>
    %360 = vector.shape_cast %359 : vector<1x8x512xf32> to vector<8x512xf32>
    %cst_120 = arith.constant dense<0.000000e+00> : vector<8x512xf32>
    %361 = tpu.matmul %317, %22, %cst_120 {dimension_numbers = #tpu.dot_dimension_numbers<[1], [0], [0], [1], [0, 0, 1, 1], [], []>} : vector<8x128xf32>, vector<128x512xf32>, vector<8x512xf32> -> vector<8x512xf32>
    %362 = arith.addf %360, %361 : vector<8x512xf32>
    %363 = vector.extract_strided_slice %362 {offsets = [0, 0], sizes = [8, 128], strides = [1, 1]} : vector<8x512xf32> to vector<8x128xf32>
    %364 = arith.negf %363 : vector<8x128xf32>
    %365 = math.exp %364 : vector<8x128xf32>
    %cst_121 = arith.constant 1.000000e+00 : f32
    %366 = vector.broadcast %cst_121 : f32 to vector<8x128xf32>
    %367 = arith.addf %366, %365 : vector<8x128xf32>
    %368 = arith.divf %366, %367 : vector<8x128xf32>
    %369 = vector.extract_strided_slice %362 {offsets = [0, 128], sizes = [8, 128], strides = [1, 1]} : vector<8x512xf32> to vector<8x128xf32>
    %370 = arith.negf %369 : vector<8x128xf32>
    %371 = math.exp %370 : vector<8x128xf32>
    %cst_122 = arith.constant 1.000000e+00 : f32
    %372 = vector.broadcast %cst_122 : f32 to vector<8x128xf32>
    %373 = arith.addf %372, %371 : vector<8x128xf32>
    %374 = arith.divf %372, %373 : vector<8x128xf32>
    %375 = vector.extract_strided_slice %362 {offsets = [0, 256], sizes = [8, 128], strides = [1, 1]} : vector<8x512xf32> to vector<8x128xf32>
    %376 = math.tanh %375 : vector<8x128xf32>
    %377 = vector.extract_strided_slice %362 {offsets = [0, 384], sizes = [8, 128], strides = [1, 1]} : vector<8x512xf32> to vector<8x128xf32>
    %378 = arith.negf %377 : vector<8x128xf32>
    %379 = math.exp %378 : vector<8x128xf32>
    %cst_123 = arith.constant 1.000000e+00 : f32
    %380 = vector.broadcast %cst_123 : f32 to vector<8x128xf32>
    %381 = arith.addf %380, %379 : vector<8x128xf32>
    %382 = arith.divf %380, %381 : vector<8x128xf32>
    %383 = arith.mulf %374, %318 : vector<8x128xf32>
    %384 = arith.mulf %368, %376 : vector<8x128xf32>
    %385 = arith.addf %383, %384 : vector<8x128xf32>
    %386 = math.tanh %385 : vector<8x128xf32>
    %387 = arith.mulf %382, %386 : vector<8x128xf32>
    %c1_i32_124 = arith.constant 1 : i32
    %388 = arith.subi %c1_i32_124, %arg1 : i32
    %c8_i32_125 = arith.constant 8 : i32
    %389 = arith.muli %388, %c8_i32_125 : i32
    %390 = arith.addi %389, %327 : i32
    %c12_i32_126 = arith.constant 12 : i32
    %391 = arith.cmpi slt, %390, %c12_i32_126 : i32
    %392 = arith.select %391, %387, %317 : vector<8x128xf32>
    %393 = arith.select %391, %385, %318 : vector<8x128xf32>
    %394 = arith.index_cast %c4_i32 : i32 to index
    %c0_127 = arith.constant 0 : index
    %c0_128 = arith.constant 0 : index
    %395 = vector.load %arg10[%394, %c0_127, %c0_128] : memref<8x8x128xf32, #tpu.memory_space<vmem>>, vector<1x8x128xf32>
    %396 = vector.shape_cast %395 : vector<1x8x128xf32> to vector<8x128xf32>
    %397 = vector.shape_cast %357 : vector<8x128xf32> to vector<1x8x128xf32>
    tpu.vector_store %arg10[%394, %c0_127, %c0_128], %397 {strides = array<i32>} : memref<8x8x128xf32, #tpu.memory_space<vmem>>, vector<1x8x128xf32>,
    %398 = arith.index_cast %327 : i32 to index
    %c0_129 = arith.constant 0 : index
    %c0_130 = arith.constant 0 : index
    %399 = vector.load %arg11[%398, %c0_129, %c0_130] : memref<8x8x128xf32, #tpu.memory_space<vmem>>, vector<1x8x128xf32>
    %400 = vector.shape_cast %399 : vector<1x8x128xf32> to vector<8x128xf32>
    %401 = vector.shape_cast %392 : vector<8x128xf32> to vector<1x8x128xf32>
    tpu.vector_store %arg11[%398, %c0_129, %c0_130], %401 {strides = array<i32>} : memref<8x8x128xf32, #tpu.memory_space<vmem>>, vector<1x8x128xf32>,
    %c5_i32 = arith.constant 5 : i32
    %c7_i32_131 = arith.constant 7 : i32
    %402 = arith.subi %c7_i32_131, %c5_i32 : i32
    %403 = arith.index_cast %c5_i32 : i32 to index
    %c0_132 = arith.constant 0 : index
    %c0_133 = arith.constant 0 : index
    %404 = vector.load %arg12[%403, %c0_132, %c0_133] : memref<8x8x512xf32, #tpu.memory_space<vmem>>, vector<1x8x512xf32>
    %405 = vector.shape_cast %404 : vector<1x8x512xf32> to vector<8x512xf32>
    %cst_134 = arith.constant dense<0.000000e+00> : vector<8x512xf32>
    %406 = tpu.matmul %357, %21, %cst_134 {dimension_numbers = #tpu.dot_dimension_numbers<[1], [0], [0], [1], [0, 0, 1, 1], [], []>} : vector<8x128xf32>, vector<128x512xf32>, vector<8x512xf32> -> vector<8x512xf32>
    %407 = arith.addf %405, %406 : vector<8x512xf32>
    %408 = vector.extract_strided_slice %407 {offsets = [0, 0], sizes = [8, 128], strides = [1, 1]} : vector<8x512xf32> to vector<8x128xf32>
    %409 = arith.negf %408 : vector<8x128xf32>
    %410 = math.exp %409 : vector<8x128xf32>
    %cst_135 = arith.constant 1.000000e+00 : f32
    %411 = vector.broadcast %cst_135 : f32 to vector<8x128xf32>
    %412 = arith.addf %411, %410 : vector<8x128xf32>
    %413 = arith.divf %411, %412 : vector<8x128xf32>
    %414 = vector.extract_strided_slice %407 {offsets = [0, 128], sizes = [8, 128], strides = [1, 1]} : vector<8x512xf32> to vector<8x128xf32>
    %415 = arith.negf %414 : vector<8x128xf32>
    %416 = math.exp %415 : vector<8x128xf32>
    %cst_136 = arith.constant 1.000000e+00 : f32
    %417 = vector.broadcast %cst_136 : f32 to vector<8x128xf32>
    %418 = arith.addf %417, %416 : vector<8x128xf32>
    %419 = arith.divf %417, %418 : vector<8x128xf32>
    %420 = vector.extract_strided_slice %407 {offsets = [0, 256], sizes = [8, 128], strides = [1, 1]} : vector<8x512xf32> to vector<8x128xf32>
    %421 = math.tanh %420 : vector<8x128xf32>
    %422 = vector.extract_strided_slice %407 {offsets = [0, 384], sizes = [8, 128], strides = [1, 1]} : vector<8x512xf32> to vector<8x128xf32>
    %423 = arith.negf %422 : vector<8x128xf32>
    %424 = math.exp %423 : vector<8x128xf32>
    %cst_137 = arith.constant 1.000000e+00 : f32
    %425 = vector.broadcast %cst_137 : f32 to vector<8x128xf32>
    %426 = arith.addf %425, %424 : vector<8x128xf32>
    %427 = arith.divf %425, %426 : vector<8x128xf32>
    %428 = arith.mulf %419, %355 : vector<8x128xf32>
    %429 = arith.mulf %413, %421 : vector<8x128xf32>
    %430 = arith.addf %428, %429 : vector<8x128xf32>
    %431 = math.tanh %430 : vector<8x128xf32>
    %432 = arith.mulf %427, %431 : vector<8x128xf32>
    %433 = arith.index_cast %402 : i32 to index
    %c0_138 = arith.constant 0 : index
    %c0_139 = arith.constant 0 : index
    %434 = vector.load %arg13[%433, %c0_138, %c0_139] : memref<8x8x512xf32, #tpu.memory_space<vmem>>, vector<1x8x512xf32>
    %435 = vector.shape_cast %434 : vector<1x8x512xf32> to vector<8x512xf32>
    %cst_140 = arith.constant dense<0.000000e+00> : vector<8x512xf32>
    %436 = tpu.matmul %392, %22, %cst_140 {dimension_numbers = #tpu.dot_dimension_numbers<[1], [0], [0], [1], [0, 0, 1, 1], [], []>} : vector<8x128xf32>, vector<128x512xf32>, vector<8x512xf32> -> vector<8x512xf32>
    %437 = arith.addf %435, %436 : vector<8x512xf32>
    %438 = vector.extract_strided_slice %437 {offsets = [0, 0], sizes = [8, 128], strides = [1, 1]} : vector<8x512xf32> to vector<8x128xf32>
    %439 = arith.negf %438 : vector<8x128xf32>
    %440 = math.exp %439 : vector<8x128xf32>
    %cst_141 = arith.constant 1.000000e+00 : f32
    %441 = vector.broadcast %cst_141 : f32 to vector<8x128xf32>
    %442 = arith.addf %441, %440 : vector<8x128xf32>
    %443 = arith.divf %441, %442 : vector<8x128xf32>
    %444 = vector.extract_strided_slice %437 {offsets = [0, 128], sizes = [8, 128], strides = [1, 1]} : vector<8x512xf32> to vector<8x128xf32>
    %445 = arith.negf %444 : vector<8x128xf32>
    %446 = math.exp %445 : vector<8x128xf32>
    %cst_142 = arith.constant 1.000000e+00 : f32
    %447 = vector.broadcast %cst_142 : f32 to vector<8x128xf32>
    %448 = arith.addf %447, %446 : vector<8x128xf32>
    %449 = arith.divf %447, %448 : vector<8x128xf32>
    %450 = vector.extract_strided_slice %437 {offsets = [0, 256], sizes = [8, 128], strides = [1, 1]} : vector<8x512xf32> to vector<8x128xf32>
    %451 = math.tanh %450 : vector<8x128xf32>
    %452 = vector.extract_strided_slice %437 {offsets = [0, 384], sizes = [8, 128], strides = [1, 1]} : vector<8x512xf32> to vector<8x128xf32>
    %453 = arith.negf %452 : vector<8x128xf32>
    %454 = math.exp %453 : vector<8x128xf32>
    %cst_143 = arith.constant 1.000000e+00 : f32
    %455 = vector.broadcast %cst_143 : f32 to vector<8x128xf32>
    %456 = arith.addf %455, %454 : vector<8x128xf32>
    %457 = arith.divf %455, %456 : vector<8x128xf32>
    %458 = arith.mulf %449, %393 : vector<8x128xf32>
    %459 = arith.mulf %443, %451 : vector<8x128xf32>
    %460 = arith.addf %458, %459 : vector<8x128xf32>
    %461 = math.tanh %460 : vector<8x128xf32>
    %462 = arith.mulf %457, %461 : vector<8x128xf32>
    %c1_i32_144 = arith.constant 1 : i32
    %463 = arith.subi %c1_i32_144, %arg1 : i32
    %c8_i32_145 = arith.constant 8 : i32
    %464 = arith.muli %463, %c8_i32_145 : i32
    %465 = arith.addi %464, %402 : i32
    %c12_i32_146 = arith.constant 12 : i32
    %466 = arith.cmpi slt, %465, %c12_i32_146 : i32
    %467 = arith.select %466, %462, %392 : vector<8x128xf32>
    %468 = arith.select %466, %460, %393 : vector<8x128xf32>
    %469 = arith.index_cast %c5_i32 : i32 to index
    %c0_147 = arith.constant 0 : index
    %c0_148 = arith.constant 0 : index
    %470 = vector.load %arg10[%469, %c0_147, %c0_148] : memref<8x8x128xf32, #tpu.memory_space<vmem>>, vector<1x8x128xf32>
    %471 = vector.shape_cast %470 : vector<1x8x128xf32> to vector<8x128xf32>
    %472 = vector.shape_cast %432 : vector<8x128xf32> to vector<1x8x128xf32>
    tpu.vector_store %arg10[%469, %c0_147, %c0_148], %472 {strides = array<i32>} : memref<8x8x128xf32, #tpu.memory_space<vmem>>, vector<1x8x128xf32>,
    %473 = arith.index_cast %402 : i32 to index
    %c0_149 = arith.constant 0 : index
    %c0_150 = arith.constant 0 : index
    %474 = vector.load %arg11[%473, %c0_149, %c0_150] : memref<8x8x128xf32, #tpu.memory_space<vmem>>, vector<1x8x128xf32>
    %475 = vector.shape_cast %474 : vector<1x8x128xf32> to vector<8x128xf32>
    %476 = vector.shape_cast %467 : vector<8x128xf32> to vector<1x8x128xf32>
    tpu.vector_store %arg11[%473, %c0_149, %c0_150], %476 {strides = array<i32>} : memref<8x8x128xf32, #tpu.memory_space<vmem>>, vector<1x8x128xf32>,
    %c6_i32 = arith.constant 6 : i32
    %c7_i32_151 = arith.constant 7 : i32
    %477 = arith.subi %c7_i32_151, %c6_i32 : i32
    %478 = arith.index_cast %c6_i32 : i32 to index
    %c0_152 = arith.constant 0 : index
    %c0_153 = arith.constant 0 : index
    %479 = vector.load %arg12[%478, %c0_152, %c0_153] : memref<8x8x512xf32, #tpu.memory_space<vmem>>, vector<1x8x512xf32>
    %480 = vector.shape_cast %479 : vector<1x8x512xf32> to vector<8x512xf32>
    %cst_154 = arith.constant dense<0.000000e+00> : vector<8x512xf32>
    %481 = tpu.matmul %432, %21, %cst_154 {dimension_numbers = #tpu.dot_dimension_numbers<[1], [0], [0], [1], [0, 0, 1, 1], [], []>} : vector<8x128xf32>, vector<128x512xf32>, vector<8x512xf32> -> vector<8x512xf32>
    %482 = arith.addf %480, %481 : vector<8x512xf32>
    %483 = vector.extract_strided_slice %482 {offsets = [0, 0], sizes = [8, 128], strides = [1, 1]} : vector<8x512xf32> to vector<8x128xf32>
    %484 = arith.negf %483 : vector<8x128xf32>
    %485 = math.exp %484 : vector<8x128xf32>
    %cst_155 = arith.constant 1.000000e+00 : f32
    %486 = vector.broadcast %cst_155 : f32 to vector<8x128xf32>
    %487 = arith.addf %486, %485 : vector<8x128xf32>
    %488 = arith.divf %486, %487 : vector<8x128xf32>
    %489 = vector.extract_strided_slice %482 {offsets = [0, 128], sizes = [8, 128], strides = [1, 1]} : vector<8x512xf32> to vector<8x128xf32>
    %490 = arith.negf %489 : vector<8x128xf32>
    %491 = math.exp %490 : vector<8x128xf32>
    %cst_156 = arith.constant 1.000000e+00 : f32
    %492 = vector.broadcast %cst_156 : f32 to vector<8x128xf32>
    %493 = arith.addf %492, %491 : vector<8x128xf32>
    %494 = arith.divf %492, %493 : vector<8x128xf32>
    %495 = vector.extract_strided_slice %482 {offsets = [0, 256], sizes = [8, 128], strides = [1, 1]} : vector<8x512xf32> to vector<8x128xf32>
    %496 = math.tanh %495 : vector<8x128xf32>
    %497 = vector.extract_strided_slice %482 {offsets = [0, 384], sizes = [8, 128], strides = [1, 1]} : vector<8x512xf32> to vector<8x128xf32>
    %498 = arith.negf %497 : vector<8x128xf32>
    %499 = math.exp %498 : vector<8x128xf32>
    %cst_157 = arith.constant 1.000000e+00 : f32
    %500 = vector.broadcast %cst_157 : f32 to vector<8x128xf32>
    %501 = arith.addf %500, %499 : vector<8x128xf32>
    %502 = arith.divf %500, %501 : vector<8x128xf32>
    %503 = arith.mulf %494, %430 : vector<8x128xf32>
    %504 = arith.mulf %488, %496 : vector<8x128xf32>
    %505 = arith.addf %503, %504 : vector<8x128xf32>
    %506 = math.tanh %505 : vector<8x128xf32>
    %507 = arith.mulf %502, %506 : vector<8x128xf32>
    %508 = arith.index_cast %477 : i32 to index
    %c0_158 = arith.constant 0 : index
    %c0_159 = arith.constant 0 : index
    %509 = vector.load %arg13[%508, %c0_158, %c0_159] : memref<8x8x512xf32, #tpu.memory_space<vmem>>, vector<1x8x512xf32>
    %510 = vector.shape_cast %509 : vector<1x8x512xf32> to vector<8x512xf32>
    %cst_160 = arith.constant dense<0.000000e+00> : vector<8x512xf32>
    %511 = tpu.matmul %467, %22, %cst_160 {dimension_numbers = #tpu.dot_dimension_numbers<[1], [0], [0], [1], [0, 0, 1, 1], [], []>} : vector<8x128xf32>, vector<128x512xf32>, vector<8x512xf32> -> vector<8x512xf32>
    %512 = arith.addf %510, %511 : vector<8x512xf32>
    %513 = vector.extract_strided_slice %512 {offsets = [0, 0], sizes = [8, 128], strides = [1, 1]} : vector<8x512xf32> to vector<8x128xf32>
    %514 = arith.negf %513 : vector<8x128xf32>
    %515 = math.exp %514 : vector<8x128xf32>
    %cst_161 = arith.constant 1.000000e+00 : f32
    %516 = vector.broadcast %cst_161 : f32 to vector<8x128xf32>
    %517 = arith.addf %516, %515 : vector<8x128xf32>
    %518 = arith.divf %516, %517 : vector<8x128xf32>
    %519 = vector.extract_strided_slice %512 {offsets = [0, 128], sizes = [8, 128], strides = [1, 1]} : vector<8x512xf32> to vector<8x128xf32>
    %520 = arith.negf %519 : vector<8x128xf32>
    %521 = math.exp %520 : vector<8x128xf32>
    %cst_162 = arith.constant 1.000000e+00 : f32
    %522 = vector.broadcast %cst_162 : f32 to vector<8x128xf32>
    %523 = arith.addf %522, %521 : vector<8x128xf32>
    %524 = arith.divf %522, %523 : vector<8x128xf32>
    %525 = vector.extract_strided_slice %512 {offsets = [0, 256], sizes = [8, 128], strides = [1, 1]} : vector<8x512xf32> to vector<8x128xf32>
    %526 = math.tanh %525 : vector<8x128xf32>
    %527 = vector.extract_strided_slice %512 {offsets = [0, 384], sizes = [8, 128], strides = [1, 1]} : vector<8x512xf32> to vector<8x128xf32>
    %528 = arith.negf %527 : vector<8x128xf32>
    %529 = math.exp %528 : vector<8x128xf32>
    %cst_163 = arith.constant 1.000000e+00 : f32
    %530 = vector.broadcast %cst_163 : f32 to vector<8x128xf32>
    %531 = arith.addf %530, %529 : vector<8x128xf32>
    %532 = arith.divf %530, %531 : vector<8x128xf32>
    %533 = arith.mulf %524, %468 : vector<8x128xf32>
    %534 = arith.mulf %518, %526 : vector<8x128xf32>
    %535 = arith.addf %533, %534 : vector<8x128xf32>
    %536 = math.tanh %535 : vector<8x128xf32>
    %537 = arith.mulf %532, %536 : vector<8x128xf32>
    %c1_i32_164 = arith.constant 1 : i32
    %538 = arith.subi %c1_i32_164, %arg1 : i32
    %c8_i32_165 = arith.constant 8 : i32
    %539 = arith.muli %538, %c8_i32_165 : i32
    %540 = arith.addi %539, %477 : i32
    %c12_i32_166 = arith.constant 12 : i32
    %541 = arith.cmpi slt, %540, %c12_i32_166 : i32
    %542 = arith.select %541, %537, %467 : vector<8x128xf32>
    %543 = arith.select %541, %535, %468 : vector<8x128xf32>
    %544 = arith.index_cast %c6_i32 : i32 to index
    %c0_167 = arith.constant 0 : index
    %c0_168 = arith.constant 0 : index
    %545 = vector.load %arg10[%544, %c0_167, %c0_168] : memref<8x8x128xf32, #tpu.memory_space<vmem>>, vector<1x8x128xf32>
    %546 = vector.shape_cast %545 : vector<1x8x128xf32> to vector<8x128xf32>
    %547 = vector.shape_cast %507 : vector<8x128xf32> to vector<1x8x128xf32>
    tpu.vector_store %arg10[%544, %c0_167, %c0_168], %547 {strides = array<i32>} : memref<8x8x128xf32, #tpu.memory_space<vmem>>, vector<1x8x128xf32>,
    %548 = arith.index_cast %477 : i32 to index
    %c0_169 = arith.constant 0 : index
    %c0_170 = arith.constant 0 : index
    %549 = vector.load %arg11[%548, %c0_169, %c0_170] : memref<8x8x128xf32, #tpu.memory_space<vmem>>, vector<1x8x128xf32>
    %550 = vector.shape_cast %549 : vector<1x8x128xf32> to vector<8x128xf32>
    %551 = vector.shape_cast %542 : vector<8x128xf32> to vector<1x8x128xf32>
    tpu.vector_store %arg11[%548, %c0_169, %c0_170], %551 {strides = array<i32>} : memref<8x8x128xf32, #tpu.memory_space<vmem>>, vector<1x8x128xf32>,
    %c7_i32_171 = arith.constant 7 : i32
    %c7_i32_172 = arith.constant 7 : i32
    %552 = arith.subi %c7_i32_172, %c7_i32_171 : i32
    %553 = arith.index_cast %c7_i32_171 : i32 to index
    %c0_173 = arith.constant 0 : index
    %c0_174 = arith.constant 0 : index
    %554 = vector.load %arg12[%553, %c0_173, %c0_174] : memref<8x8x512xf32, #tpu.memory_space<vmem>>, vector<1x8x512xf32>
    %555 = vector.shape_cast %554 : vector<1x8x512xf32> to vector<8x512xf32>
    %cst_175 = arith.constant dense<0.000000e+00> : vector<8x512xf32>
    %556 = tpu.matmul %507, %21, %cst_175 {dimension_numbers = #tpu.dot_dimension_numbers<[1], [0], [0], [1], [0, 0, 1, 1], [], []>} : vector<8x128xf32>, vector<128x512xf32>, vector<8x512xf32> -> vector<8x512xf32>
    %557 = arith.addf %555, %556 : vector<8x512xf32>
    %558 = vector.extract_strided_slice %557 {offsets = [0, 0], sizes = [8, 128], strides = [1, 1]} : vector<8x512xf32> to vector<8x128xf32>
    %559 = arith.negf %558 : vector<8x128xf32>
    %560 = math.exp %559 : vector<8x128xf32>
    %cst_176 = arith.constant 1.000000e+00 : f32
    %561 = vector.broadcast %cst_176 : f32 to vector<8x128xf32>
    %562 = arith.addf %561, %560 : vector<8x128xf32>
    %563 = arith.divf %561, %562 : vector<8x128xf32>
    %564 = vector.extract_strided_slice %557 {offsets = [0, 128], sizes = [8, 128], strides = [1, 1]} : vector<8x512xf32> to vector<8x128xf32>
    %565 = arith.negf %564 : vector<8x128xf32>
    %566 = math.exp %565 : vector<8x128xf32>
    %cst_177 = arith.constant 1.000000e+00 : f32
    %567 = vector.broadcast %cst_177 : f32 to vector<8x128xf32>
    %568 = arith.addf %567, %566 : vector<8x128xf32>
    %569 = arith.divf %567, %568 : vector<8x128xf32>
    %570 = vector.extract_strided_slice %557 {offsets = [0, 256], sizes = [8, 128], strides = [1, 1]} : vector<8x512xf32> to vector<8x128xf32>
    %571 = math.tanh %570 : vector<8x128xf32>
    %572 = vector.extract_strided_slice %557 {offsets = [0, 384], sizes = [8, 128], strides = [1, 1]} : vector<8x512xf32> to vector<8x128xf32>
    %573 = arith.negf %572 : vector<8x128xf32>
    %574 = math.exp %573 : vector<8x128xf32>
    %cst_178 = arith.constant 1.000000e+00 : f32
    %575 = vector.broadcast %cst_178 : f32 to vector<8x128xf32>
    %576 = arith.addf %575, %574 : vector<8x128xf32>
    %577 = arith.divf %575, %576 : vector<8x128xf32>
    %578 = arith.mulf %569, %505 : vector<8x128xf32>
    %579 = arith.mulf %563, %571 : vector<8x128xf32>
    %580 = arith.addf %578, %579 : vector<8x128xf32>
    %581 = math.tanh %580 : vector<8x128xf32>
    %582 = arith.mulf %577, %581 : vector<8x128xf32>
    %583 = arith.index_cast %552 : i32 to index
    %c0_179 = arith.constant 0 : index
    %c0_180 = arith.constant 0 : index
    %584 = vector.load %arg13[%583, %c0_179, %c0_180] : memref<8x8x512xf32, #tpu.memory_space<vmem>>, vector<1x8x512xf32>
    %585 = vector.shape_cast %584 : vector<1x8x512xf32> to vector<8x512xf32>
    %cst_181 = arith.constant dense<0.000000e+00> : vector<8x512xf32>
    %586 = tpu.matmul %542, %22, %cst_181 {dimension_numbers = #tpu.dot_dimension_numbers<[1], [0], [0], [1], [0, 0, 1, 1], [], []>} : vector<8x128xf32>, vector<128x512xf32>, vector<8x512xf32> -> vector<8x512xf32>
    %587 = arith.addf %585, %586 : vector<8x512xf32>
    %588 = vector.extract_strided_slice %587 {offsets = [0, 0], sizes = [8, 128], strides = [1, 1]} : vector<8x512xf32> to vector<8x128xf32>
    %589 = arith.negf %588 : vector<8x128xf32>
    %590 = math.exp %589 : vector<8x128xf32>
    %cst_182 = arith.constant 1.000000e+00 : f32
    %591 = vector.broadcast %cst_182 : f32 to vector<8x128xf32>
    %592 = arith.addf %591, %590 : vector<8x128xf32>
    %593 = arith.divf %591, %592 : vector<8x128xf32>
    %594 = vector.extract_strided_slice %587 {offsets = [0, 128], sizes = [8, 128], strides = [1, 1]} : vector<8x512xf32> to vector<8x128xf32>
    %595 = arith.negf %594 : vector<8x128xf32>
    %596 = math.exp %595 : vector<8x128xf32>
    %cst_183 = arith.constant 1.000000e+00 : f32
    %597 = vector.broadcast %cst_183 : f32 to vector<8x128xf32>
    %598 = arith.addf %597, %596 : vector<8x128xf32>
    %599 = arith.divf %597, %598 : vector<8x128xf32>
    %600 = vector.extract_strided_slice %587 {offsets = [0, 256], sizes = [8, 128], strides = [1, 1]} : vector<8x512xf32> to vector<8x128xf32>
    %601 = math.tanh %600 : vector<8x128xf32>
    %602 = vector.extract_strided_slice %587 {offsets = [0, 384], sizes = [8, 128], strides = [1, 1]} : vector<8x512xf32> to vector<8x128xf32>
    %603 = arith.negf %602 : vector<8x128xf32>
    %604 = math.exp %603 : vector<8x128xf32>
    %cst_184 = arith.constant 1.000000e+00 : f32
    %605 = vector.broadcast %cst_184 : f32 to vector<8x128xf32>
    %606 = arith.addf %605, %604 : vector<8x128xf32>
    %607 = arith.divf %605, %606 : vector<8x128xf32>
    %608 = arith.mulf %599, %543 : vector<8x128xf32>
    %609 = arith.mulf %593, %601 : vector<8x128xf32>
    %610 = arith.addf %608, %609 : vector<8x128xf32>
    %611 = math.tanh %610 : vector<8x128xf32>
    %612 = arith.mulf %607, %611 : vector<8x128xf32>
    %c1_i32_185 = arith.constant 1 : i32
    %613 = arith.subi %c1_i32_185, %arg1 : i32
    %c8_i32_186 = arith.constant 8 : i32
    %614 = arith.muli %613, %c8_i32_186 : i32
    %615 = arith.addi %614, %552 : i32
    %c12_i32_187 = arith.constant 12 : i32
    %616 = arith.cmpi slt, %615, %c12_i32_187 : i32
    %617 = arith.select %616, %612, %542 : vector<8x128xf32>
    %618 = arith.select %616, %610, %543 : vector<8x128xf32>
    %619 = arith.index_cast %c7_i32_171 : i32 to index
    %c0_188 = arith.constant 0 : index
    %c0_189 = arith.constant 0 : index
    %620 = vector.load %arg10[%619, %c0_188, %c0_189] : memref<8x8x128xf32, #tpu.memory_space<vmem>>, vector<1x8x128xf32>
    %621 = vector.shape_cast %620 : vector<1x8x128xf32> to vector<8x128xf32>
    %622 = vector.shape_cast %582 : vector<8x128xf32> to vector<1x8x128xf32>
    tpu.vector_store %arg10[%619, %c0_188, %c0_189], %622 {strides = array<i32>} : memref<8x8x128xf32, #tpu.memory_space<vmem>>, vector<1x8x128xf32>,
    %623 = arith.index_cast %552 : i32 to index
    %c0_190 = arith.constant 0 : index
    %c0_191 = arith.constant 0 : index
    %624 = vector.load %arg11[%623, %c0_190, %c0_191] : memref<8x8x128xf32, #tpu.memory_space<vmem>>, vector<1x8x128xf32>
    %625 = vector.shape_cast %624 : vector<1x8x128xf32> to vector<8x128xf32>
    %626 = vector.shape_cast %617 : vector<8x128xf32> to vector<1x8x128xf32>
    tpu.vector_store %arg11[%623, %c0_190, %c0_191], %626 {strides = array<i32>} : memref<8x8x128xf32, #tpu.memory_space<vmem>>, vector<1x8x128xf32>,
    %c8_i32_192 = arith.constant 8 : i32
    %c0_193 = arith.constant 0 : index
    %c0_194 = arith.constant 0 : index
    %627 = vector.load %arg14[%c0_193, %c0_194] : memref<8x128xf32, #tpu.memory_space<vmem>>, vector<8x128xf32>
    tpu.vector_store %arg14[%c0_193, %c0_194], %582 {strides = array<i32>} : memref<8x128xf32, #tpu.memory_space<vmem>>, vector<8x128xf32>,
    %c0_195 = arith.constant 0 : index
    %c0_196 = arith.constant 0 : index
    %628 = vector.load %arg15[%c0_195, %c0_196] : memref<8x128xf32, #tpu.memory_space<vmem>>, vector<8x128xf32>
    tpu.vector_store %arg15[%c0_195, %c0_196], %580 {strides = array<i32>} : memref<8x128xf32, #tpu.memory_space<vmem>>, vector<8x128xf32>,
    %c0_197 = arith.constant 0 : index
    %c0_198 = arith.constant 0 : index
    %629 = vector.load %arg16[%c0_197, %c0_198] : memref<8x128xf32, #tpu.memory_space<vmem>>, vector<8x128xf32>
    tpu.vector_store %arg16[%c0_197, %c0_198], %617 {strides = array<i32>} : memref<8x128xf32, #tpu.memory_space<vmem>>, vector<8x128xf32>,
    %c0_199 = arith.constant 0 : index
    %c0_200 = arith.constant 0 : index
    %630 = vector.load %arg17[%c0_199, %c0_200] : memref<8x128xf32, #tpu.memory_space<vmem>>, vector<8x128xf32>
    tpu.vector_store %arg17[%c0_199, %c0_200], %618 {strides = array<i32>} : memref<8x128xf32, #tpu.memory_space<vmem>>, vector<8x128xf32>,
    return
  }
  func.func @transform_0(%arg0: i32, %arg1: i32) -> (i32, i32, i32) {
    %c0_i32 = arith.constant 0 : i32
    %c0_i32_0 = arith.constant 0 : i32
    return %arg1, %arg0, %c0_i32 : i32, i32, i32
  }
  func.func @transform_1(%arg0: i32, %arg1: i32) -> (i32, i32, i32) {
    %c1_i32 = arith.constant 1 : i32
    %0 = arith.subi %c1_i32, %arg1 : i32
    %c0_i32 = arith.constant 0 : i32
    %c0_i32_0 = arith.constant 0 : i32
    return %0, %arg0, %c0_i32 : i32, i32, i32
  }
  func.func @transform_2(%arg0: i32, %arg1: i32) -> (i32, i32) {
    %c0_i32 = arith.constant 0 : i32
    %c0_i32_0 = arith.constant 0 : i32
    %c0_i32_1 = arith.constant 0 : i32
    return %c0_i32, %c0_i32_0 : i32, i32
  }
  func.func @transform_3(%arg0: i32, %arg1: i32) -> (i32, i32) {
    %c0_i32 = arith.constant 0 : i32
    %c0_i32_0 = arith.constant 0 : i32
    %c0_i32_1 = arith.constant 0 : i32
    return %c0_i32, %c0_i32_0 : i32, i32
  }
  func.func @transform_4(%arg0: i32, %arg1: i32) -> (i32, i32) {
    %c0_i32 = arith.constant 0 : i32
    %c0_i32_0 = arith.constant 0 : i32
    %c0_i32_1 = arith.constant 0 : i32
    return %c0_i32, %c0_i32_0 : i32, i32
  }
  func.func @transform_5(%arg0: i32, %arg1: i32) -> (i32, i32) {
    %c0_i32 = arith.constant 0 : i32
    %c0_i32_0 = arith.constant 0 : i32
    %c0_i32_1 = arith.constant 0 : i32
    return %c0_i32, %c0_i32_0 : i32, i32
  }
  func.func @transform_6(%arg0: i32, %arg1: i32) -> (i32, i32) {
    %c0_i32 = arith.constant 0 : i32
    %c0_i32_0 = arith.constant 0 : i32
    %c0_i32_1 = arith.constant 0 : i32
    return %c0_i32, %c0_i32_0 : i32, i32
  }
  func.func @transform_7(%arg0: i32, %arg1: i32) -> (i32, i32) {
    %c0_i32 = arith.constant 0 : i32
    %c0_i32_0 = arith.constant 0 : i32
    %c0_i32_1 = arith.constant 0 : i32
    return %c0_i32, %c0_i32_0 : i32, i32
  }
  func.func @transform_8(%arg0: i32, %arg1: i32) -> (i32, i32, i32) {
    %c0_i32 = arith.constant 0 : i32
    %c0_i32_0 = arith.constant 0 : i32
    return %arg1, %arg0, %c0_i32 : i32, i32, i32
  }
  func.func @transform_9(%arg0: i32, %arg1: i32) -> (i32, i32, i32) {
    %c1_i32 = arith.constant 1 : i32
    %0 = arith.subi %c1_i32, %arg1 : i32
    %c0_i32 = arith.constant 0 : i32
    %c0_i32_0 = arith.constant 0 : i32
    return %0, %arg0, %c0_i32 : i32, i32, i32
  }
}

</mosaic_0001>

<llo_original>
// kernel: bilstm_forward.1
$region0: #{bilstm_forward.1}
  #allocation0 [shape = 'u32[]', space=smem, size = 0x4, offset = 0x4, fixed_abs, tag = 'smem constant byte address 0x4 - core index']
  #allocation1 [shape = 'u32[144,128]{1,0:T(1,128)}', space=vmem, size = 0x12000, scoped, tag = 'internal scratch']
  #allocation2 [shape = 'f32[8,8,512]{2,1,0:T(8,128)}', space=vmem, size = 0x20000, scoped, tag = 'scratch operand']
  #allocation3 [shape = 'f32[8,8,512]{2,1,0:T(8,128)}', space=vmem, size = 0x20000, scoped, tag = 'scratch operand']
  #allocation4 [shape = 'f32[8,128]{1,0:T(8,128)}', space=vmem, size = 0x1000, scoped, tag = 'scratch operand']
  #allocation5 [shape = 'f32[8,128]{1,0:T(8,128)}', space=vmem, size = 0x1000, scoped, tag = 'scratch operand']
  #allocation6 [shape = 'f32[8,128]{1,0:T(8,128)}', space=vmem, size = 0x1000, scoped, tag = 'scratch operand']
  #allocation7 [shape = 'f32[8,128]{1,0:T(8,128)}', space=vmem, size = 0x1000, scoped, tag = 'scratch operand']
  %s0 = inlined_call_operand.vmem [shape: f32[16,8,32], index: 0, kind: input, shape index: {}, may-alias: {0,1}]
  %s1 = inlined_call_operand.vmem [shape: f32[16,8,32], index: 1, kind: input, shape index: {}, may-alias: {0,1}]
  %s2 = inlined_call_operand.vmem [shape: f32[32,512], index: 2, kind: input, shape index: {}]
  %s3 = inlined_call_operand.vmem [shape: f32[32,512], index: 3, kind: input, shape index: {}]
  %s4 = inlined_call_operand.vmem [shape: f32[1,512], index: 4, kind: input, shape index: {}]
  %s5 = inlined_call_operand.vmem [shape: f32[1,512], index: 5, kind: input, shape index: {}]
  %s6 = inlined_call_operand.vmem [shape: f32[128,512], index: 6, kind: input, shape index: {}]
  %s7 = inlined_call_operand.vmem [shape: f32[128,512], index: 7, kind: input, shape index: {}]
  %s8 = inlined_call_operand.vmem [shape: f32[16,8,128], index: 8, kind: output, shape index: {0}]
  %s9 = inlined_call_operand.vmem [shape: f32[16,8,128], index: 9, kind: output, shape index: {1}]
  %10 = xla_tuple %s8, %s9
  %s11 = sld [smem:[#allocation0]]
  $region77: #{bilstm_forward.1} parent=0
    _
  %s13 = ssub.s32 1, %s11
  %s14 = scalar_select 0, %s13, %s11
  loop: start=0, step=1, limit=4
  $region2: #{bilstm_forward.1} parent=0 // loop_pre_header
    _
  $region3: #{bilstm_forward.1} parent=0 // loop_header
    %s16 = sphi 0, %s20
    %p17 = scmp.ge.s32.totalorder %s16, 4
    %s23 = sphi 0, %s35
    %s24 = sphi 0, %s31
    %s25 = sphi 0, %s23
    %s26 = sphi 0, %s24
    %s27 = sphi 0, %s25
    %s28 = sphi 0, %s26
    %s40 = sphi 0, %s42
    %s43 = sphi 0, %s40
    %s44 = sphi 0, %s43
    %s60 = sphi 0, %s44
    %s70 = sphi 0, %s72
    %s73 = sphi 0, %s70
    %s74 = sphi 0, %s73
    %s90 = sphi 0, %s74
    %s94 = sphi 0, %s94
    %s96 = sphi 0, %s94
    %s97 = sphi 0, %s96
    %s111 = sphi 0, %s97
    %s115 = sphi 0, %s115
    %s117 = sphi 0, %s115
    %s118 = sphi 0, %s117
    %s132 = sphi 0, %s118
    %s136 = sphi 0, %s136
    %s138 = sphi 0, %s136
    %s139 = sphi 0, %s138
    %s153 = sphi 0, %s139
    %s157 = sphi 0, %s157
    %s159 = sphi 0, %s157
    %s160 = sphi 0, %s159
    %s174 = sphi 0, %s160
    %s178 = sphi 0, %s178
    %s180 = sphi 0, %s178
    %s181 = sphi 0, %s180
    %s195 = sphi 0, %s181
    %s199 = sphi 0, %s199
    %s201 = sphi 0, %s199
    %s202 = sphi 0, %s201
    %s216 = sphi 0, %s202
    %s224 = sphi 0, %s226
    %s227 = sphi 0, %s224
    %s228 = sphi 0, %s227
    %s244 = sphi 0, %s228
    %s254 = sphi 0, %s256
    %s257 = sphi 0, %s254
    %s258 = sphi 0, %s257
    %s274 = sphi 0, %s258
  $region4: #{bilstm_forward.1} parent=0 // loop_header_branch
    %19 = sbr.rel (%p17) target = $region8
  $region5: #{bilstm_forward.1} parent=0 // loop_body
    %s21 = ssub.s32 %s16, 1
    %s22 = ssub.s32 %s16, 2
    %s29 = sadd.s32 1, %s24
    %p30 = scmp.ge.s32.totalorder %s29, 2
    %s31 = scalar_select %p30, 0, %s29
    %s32 = sadd.s32 1, %s23
    %s33 = scalar_select %p30, %s32, %s23
    %p34 = scmp.ge.s32.totalorder %s33, 1
    %s35 = scalar_select %p34, 0, %s33
    %s36 = ssub.s32 %s24, %s31
    %s37 = ssub.s32 %s23, %s35
    %s38 = sor.u32 %s36, %s37
    %p39 = scmp.eq.s32.totalorder %s38, 0
    %s41 = sadd.s32 %s40, 1
    %s42 = scalar_select %p39, %s40, %s41
    %p45 = pneg %p39
    %p46 = scmp.eq.s32.totalorder %s16, 1
    %p47 = por %p45, %p46
    %p48 = scmp.ne.s32.totalorder %s40, %s43
    %p49 = scmp.eq.s32.totalorder %s16, 0
    %p50 = por %p48, %p49
    %p51 = scmp.ne.s32.totalorder %s40, %s43
    %p52 = scmp.eq.s32.totalorder %s21, 1
    %p53 = por %p51, %p52
    %p54 = scmp.ne.s32.totalorder %s43, %s44
    %p55 = scmp.eq.s32.totalorder %s21, 0
    %p56 = por %p54, %p55
    %p57 = scmp.ne.s32.totalorder %s43, %s44
    %p58 = scmp.eq.s32.totalorder %s22, 1
    %p59 = por %p57, %p58
    %p61 = scmp.ne.s32.totalorder %s44, %s60
    %p62 = scmp.eq.s32.totalorder %s22, 0
    %p63 = por %p61, %p62
    %s64 = ssub.s32 1, %s24
    %s65 = ssub.s32 1, %s31
    %s66 = ssub.s32 %s64, %s65
    %s67 = ssub.s32 %s23, %s35
    %s68 = sor.u32 %s66, %s67
    %p69 = scmp.eq.s32.totalorder %s68, 0
    %s71 = sadd.s32 %s70, 1
    %s72 = scalar_select %p69, %s70, %s71
    %p75 = pneg %p69
    %p76 = scmp.eq.s32.totalorder %s16, 1
    %p77 = por %p75, %p76
    %p78 = scmp.ne.s32.totalorder %s70, %s73
    %p79 = scmp.eq.s32.totalorder %s16, 0
    %p80 = por %p78, %p79
    %p81 = scmp.ne.s32.totalorder %s70, %s73
    %p82 = scmp.eq.s32.totalorder %s21, 1
    %p83 = por %p81, %p82
    %p84 = scmp.ne.s32.totalorder %s73, %s74
    %p85 = scmp.eq.s32.totalorder %s21, 0
    %p86 = por %p84, %p85
    %p87 = scmp.ne.s32.totalorder %s73, %s74
    %p88 = scmp.eq.s32.totalorder %s22, 1
    %p89 = por %p87, %p88
    %p91 = scmp.ne.s32.totalorder %s74, %s90
    %p92 = scmp.eq.s32.totalorder %s22, 0
    %p93 = por %p91, %p92
    %s95 = sadd.s32 %s94, 1
    %p98 = scmp.eq.s32.totalorder %s16, 1
    %p99 = scmp.ne.s32.totalorder %s94, %s96
    %p100 = scmp.eq.s32.totalorder %s16, 0
    %p101 = por %p99, %p100
    %p102 = scmp.ne.s32.totalorder %s94, %s96
    %p103 = scmp.eq.s32.totalorder %s21, 1
    %p104 = por %p102, %p103
    %p105 = scmp.ne.s32.totalorder %s96, %s97
    %p106 = scmp.eq.s32.totalorder %s21, 0
    %p107 = por %p105, %p106
    %p108 = scmp.ne.s32.totalorder %s96, %s97
    %p109 = scmp.eq.s32.totalorder %s22, 1
    %p110 = por %p108, %p109
    %p112 = scmp.ne.s32.totalorder %s97, %s111
    %p113 = scmp.eq.s32.totalorder %s22, 0
    %p114 = por %p112, %p113
    %s116 = sadd.s32 %s115, 1
    %p119 = scmp.eq.s32.totalorder %s16, 1
    %p120 = scmp.ne.s32.totalorder %s115, %s117
    %p121 = scmp.eq.s32.totalorder %s16, 0
    %p122 = por %p120, %p121
    %p123 = scmp.ne.s32.totalorder %s115, %s117
    %p124 = scmp.eq.s32.totalorder %s21, 1
    %p125 = por %p123, %p124
    %p126 = scmp.ne.s32.totalorder %s117, %s118
    %p127 = scmp.eq.s32.totalorder %s21, 0
    %p128 = por %p126, %p127
    %p129 = scmp.ne.s32.totalorder %s117, %s118
    %p130 = scmp.eq.s32.totalorder %s22, 1
    %p131 = por %p129, %p130
    %p133 = scmp.ne.s32.totalorder %s118, %s132
    %p134 = scmp.eq.s32.totalorder %s22, 0
    %p135 = por %p133, %p134
    %s137 = sadd.s32 %s136, 1
    %p140 = scmp.eq.s32.totalorder %s16, 1
    %p141 = scmp.ne.s32.totalorder %s136, %s138
    %p142 = scmp.eq.s32.totalorder %s16, 0
    %p143 = por %p141, %p142
    %p144 = scmp.ne.s32.totalorder %s136, %s138
    %p145 = scmp.eq.s32.totalorder %s21, 1
    %p146 = por %p144, %p145
    %p147 = scmp.ne.s32.totalorder %s138, %s139
    %p148 = scmp.eq.s32.totalorder %s21, 0
    %p149 = por %p147, %p148
    %p150 = scmp.ne.s32.totalorder %s138, %s139
    %p151 = scmp.eq.s32.totalorder %s22, 1
    %p152 = por %p150, %p151
    %p154 = scmp.ne.s32.totalorder %s139, %s153
    %p155 = scmp.eq.s32.totalorder %s22, 0
    %p156 = por %p154, %p155
    %s158 = sadd.s32 %s157, 1
    %p161 = scmp.eq.s32.totalorder %s16, 1
    %p162 = scmp.ne.s32.totalorder %s157, %s159
    %p163 = scmp.eq.s32.totalorder %s16, 0
    %p164 = por %p162, %p163
    %p165 = scmp.ne.s32.totalorder %s157, %s159
    %p166 = scmp.eq.s32.totalorder %s21, 1
    %p167 = por %p165, %p166
    %p168 = scmp.ne.s32.totalorder %s159, %s160
    %p169 = scmp.eq.s32.totalorder %s21, 0
    %p170 = por %p168, %p169
    %p171 = scmp.ne.s32.totalorder %s159, %s160
    %p172 = scmp.eq.s32.totalorder %s22, 1
    %p173 = por %p171, %p172
    %p175 = scmp.ne.s32.totalorder %s160, %s174
    %p176 = scmp.eq.s32.totalorder %s22, 0
    %p177 = por %p175, %p176
    %s179 = sadd.s32 %s178, 1
    %p182 = scmp.eq.s32.totalorder %s16, 1
    %p183 = scmp.ne.s32.totalorder %s178, %s180
    %p184 = scmp.eq.s32.totalorder %s16, 0
    %p185 = por %p183, %p184
    %p186 = scmp.ne.s32.totalorder %s178, %s180
    %p187 = scmp.eq.s32.totalorder %s21, 1
    %p188 = por %p186, %p187
    %p189 = scmp.ne.s32.totalorder %s180, %s181
    %p190 = scmp.eq.s32.totalorder %s21, 0
    %p191 = por %p189, %p190
    %p192 = scmp.ne.s32.totalorder %s180, %s181
    %p193 = scmp.eq.s32.totalorder %s22, 1
    %p194 = por %p192, %p193
    %p196 = scmp.ne.s32.totalorder %s181, %s195
    %p197 = scmp.eq.s32.totalorder %s22, 0
    %p198 = por %p196, %p197
    %s200 = sadd.s32 %s199, 1
    %p203 = scmp.eq.s32.totalorder %s16, 1
    %p204 = scmp.ne.s32.totalorder %s199, %s201
    %p205 = scmp.eq.s32.totalorder %s16, 0
    %p206 = por %p204, %p205
    %p207 = scmp.ne.s32.totalorder %s199, %s201
    %p208 = scmp.eq.s32.totalorder %s21, 1
    %p209 = por %p207, %p208
    %p210 = scmp.ne.s32.totalorder %s201, %s202
    %p211 = scmp.eq.s32.totalorder %s21, 0
    %p212 = por %p210, %p211
    %p213 = scmp.ne.s32.totalorder %s201, %s202
    %p214 = scmp.eq.s32.totalorder %s22, 1
    %p215 = por %p213, %p214
    %p217 = scmp.ne.s32.totalorder %s202, %s216
    %p218 = scmp.eq.s32.totalorder %s22, 0
    %p219 = por %p217, %p218
    %s220 = ssub.s32 %s24, %s31
    %s221 = ssub.s32 %s23, %s35
    %s222 = sor.u32 %s220, %s221
    %p223 = scmp.eq.s32.totalorder %s222, 0
    %s225 = sadd.s32 %s224, 1
    %s226 = scalar_select %p223, %s224, %s225
    %p229 = pneg %p223
    %p230 = scmp.eq.s32.totalorder %s16, 1
    %p231 = por %p229, %p230
    %p232 = scmp.ne.s32.totalorder %s224, %s227
    %p233 = scmp.eq.s32.totalorder %s16, 0
    %p234 = por %p232, %p233
    %p235 = scmp.ne.s32.totalorder %s224, %s227
    %p236 = scmp.eq.s32.totalorder %s21, 1
    %p237 = por %p235, %p236
    %p238 = scmp.ne.s32.totalorder %s227, %s228
    %p239 = scmp.eq.s32.totalorder %s21, 0
    %p240 = por %p238, %p239
    %p241 = scmp.ne.s32.totalorder %s227, %s228
    %p242 = scmp.eq.s32.totalorder %s22, 1
    %p243 = por %p241, %p242
    %p245 = scmp.ne.s32.totalorder %s228, %s244
    %p246 = scmp.eq.s32.totalorder %s22, 0
    %p247 = por %p245, %p246
    %s248 = ssub.s32 1, %s24
    %s249 = ssub.s32 1, %s31
    %s250 = ssub.s32 %s248, %s249
    %s251 = ssub.s32 %s23, %s35
    %s252 = sor.u32 %s250, %s251
    %p253 = scmp.eq.s32.totalorder %s252, 0
    %s255 = sadd.s32 %s254, 1
    %s256 = scalar_select %p253, %s254, %s255
    %p259 = pneg %p253
    %p260 = scmp.eq.s32.totalorder %s16, 1
    %p261 = por %p259, %p260
    %p262 = scmp.ne.s32.totalorder %s254, %s257
    %p263 = scmp.eq.s32.totalorder %s16, 0
    %p264 = por %p262, %p263
    %p265 = scmp.ne.s32.totalorder %s254, %s257
    %p266 = scmp.eq.s32.totalorder %s21, 1
    %p267 = por %p265, %p266
    %p268 = scmp.ne.s32.totalorder %s257, %s258
    %p269 = scmp.eq.s32.totalorder %s21, 0
    %p270 = por %p268, %p269
    %p271 = scmp.ne.s32.totalorder %s257, %s258
    %p272 = scmp.eq.s32.totalorder %s22, 1
    %p273 = por %p271, %p272
    %p275 = scmp.ne.s32.totalorder %s258, %s274
    %p276 = scmp.eq.s32.totalorder %s22, 0
    %p277 = por %p275, %p276
    %p278 = scmp.le.s32.totalorder 1, %s16
    %p279 = scmp.lt.s32.totalorder %s16, 3
    %p280 = pnand %p278, %p279
    %p281 = pneg %p280
    // Predicated region
    $region9: #{bilstm_forward.1} parent=5 // pred_check
      _
    $region10: #{bilstm_forward.1} parent=5 // pred_check_branch
      %283 = sbr.rel (%p280) target = $region12
    $region11: #{bilstm_forward.1} parent=5 // pred_region
      %s284 = ssub.s32 %s16, 1
      // Predicated region
      $region13: #{bilstm_forward.1} parent=11 // pred_check
        %p285 = pneg %p107
      $region14: #{bilstm_forward.1} parent=11 // pred_check_branch
        %287 = sbr.rel (%p285) target = $region16
      $region15: #{bilstm_forward.1} parent=11 // pred_region
        _
      $region16: #{bilstm_forward.1} parent=11 // pred_fallthru
        _
      // Predicated region
      $region17: #{bilstm_forward.1} parent=11 // pred_check
        %p288 = pneg %p128
      $region18: #{bilstm_forward.1} parent=11 // pred_check_branch
        %290 = sbr.rel (%p288) target = $region20
      $region19: #{bilstm_forward.1} parent=11 // pred_region
        _
      $region20: #{bilstm_forward.1} parent=11 // pred_fallthru
        _
      // Predicated region
      $region21: #{bilstm_forward.1} parent=11 // pred_check
        %p291 = pneg %p149
      $region22: #{bilstm_forward.1} parent=11 // pred_check_branch
        %293 = sbr.rel (%p291) target = $region24
      $region23: #{bilstm_forward.1} parent=11 // pred_region
        _
      $region24: #{bilstm_forward.1} parent=11 // pred_fallthru
        _
      // Predicated region
      $region25: #{bilstm_forward.1} parent=11 // pred_check
        %p294 = pneg %p170
      $region26: #{bilstm_forward.1} parent=11 // pred_check_branch
        %296 = sbr.rel (%p294) target = $region28
      $region27: #{bilstm_forward.1} parent=11 // pred_region
        _
      $region28: #{bilstm_forward.1} parent=11 // pred_fallthru
        _
      // Predicated region
      $region29: #{bilstm_forward.1} parent=11 // pred_check
        %p297 = pneg %p191
      $region30: #{bilstm_forward.1} parent=11 // pred_check_branch
        %299 = sbr.rel (%p297) target = $region32
      $region31: #{bilstm_forward.1} parent=11 // pred_region
        _
      $region32: #{bilstm_forward.1} parent=11 // pred_fallthru
        _
      // Predicated region
      $region33: #{bilstm_forward.1} parent=11 // pred_check
        %p300 = pneg %p212
      $region34: #{bilstm_forward.1} parent=11 // pred_check_branch
        %302 = sbr.rel (%p300) target = $region36
      $region35: #{bilstm_forward.1} parent=11 // pred_region
        _
      $region36: #{bilstm_forward.1} parent=11 // pred_fallthru
        _
    $region12: #{bilstm_forward.1} parent=5 // pred_fallthru
      _
    %p303 = scmp.lt.s32.totalorder %s16, 2
    // Predicated region
    $region37: #{bilstm_forward.1} parent=5 // pred_check
      %p304 = pneg %p303
    $region38: #{bilstm_forward.1} parent=5 // pred_check_branch
      %306 = sbr.rel (%p304) target = $region40
    $region39: #{bilstm_forward.1} parent=5 // pred_region
      // Predicated region
      $region41: #{bilstm_forward.1} parent=39 // pred_check
        %p307 = pneg %p50
      $region42: #{bilstm_forward.1} parent=39 // pred_check_branch
        %309 = sbr.rel (%p307) target = $region44
      $region43: #{bilstm_forward.1} parent=39 // pred_region
        %s310 = smul.u32 8, %s24
        %p311 = scmp.lt.s32.totalorder %s310, 15
        %s312 = scalar_select %p311, %s310, 15
        %p313 = scmp.lt.s32.totalorder %s23, 0
        %s314 = scalar_select %p313, %s23, 0
        %s315 = sadd.s32 %s314, %s312
        %s316 = smul.addr %s315, 8
        %s317 = scalar_lea.vmem %s0, %s316
        %s318 = smul.u32 8, %s24
      $region44: #{bilstm_forward.1} parent=39 // pred_fallthru
        _
      // Predicated region
      $region45: #{bilstm_forward.1} parent=39 // pred_check
        %p319 = pneg %p80
      $region46: #{bilstm_forward.1} parent=39 // pred_check_branch
        %321 = sbr.rel (%p319) target = $region48
      $region47: #{bilstm_forward.1} parent=39 // pred_region
        %s322 = ssub.s32 1, %s24
        %s323 = smul.u32 8, %s322
        %p324 = scmp.lt.s32.totalorder %s323, 15
        %s325 = scalar_select %p324, %s323, 15
        %p326 = scmp.lt.s32.totalorder %s23, 0
        %s327 = scalar_select %p326, %s23, 0
        %s328 = sadd.s32 %s327, %s325
        %s329 = smul.addr %s328, 8
        %s330 = scalar_lea.vmem %s1, %s329
        %s331 = ssub.s32 1, %s24
        %s332 = smul.u32 8, %s331
      $region48: #{bilstm_forward.1} parent=39 // pred_fallthru
        _
    $region40: #{bilstm_forward.1} parent=5 // pred_fallthru
      _
    %p333 = scmp.le.s32.totalorder 1, %s16
    %p334 = scmp.lt.s32.totalorder %s16, 3
    %p335 = pnand %p333, %p334
    %p336 = pneg %p335
    // Predicated region
    $region49: #{bilstm_forward.1} parent=5 // pred_check
      _
    $region50: #{bilstm_forward.1} parent=5 // pred_check_branch
      %338 = sbr.rel (%p335) target = $region52
    $region51: #{bilstm_forward.1} parent=5 // pred_region
      %s339 = ssub.s32 %s16, 1
      %s340 = smul.u32 8, %s26
      %p341 = scmp.lt.s32.totalorder %s340, 15
      %s342 = scalar_select %p341, %s340, 15
      %p343 = scmp.lt.s32.totalorder %s25, 0
      %s344 = scalar_select %p343, %s25, 0
      %s345 = sadd.s32 %s344, %s342
      %s346 = smul.addr %s345, 8
      %s347 = scalar_lea.vmem %s0, %s346
      %p348 = pneg %p56
      %p349 = pneg %p53
      %s350 = ssub.s32 1, %s26
      %s351 = smul.u32 8, %s350
      %p352 = scmp.lt.s32.totalorder %s351, 15
      %s353 = scalar_select %p352, %s351, 15
      %p354 = scmp.lt.s32.totalorder %s25, 0
      %s355 = scalar_select %p354, %s25, 0
      %s356 = sadd.s32 %s355, %s353
      %s357 = smul.addr %s356, 8
      %s358 = scalar_lea.vmem %s1, %s357
      %p359 = pneg %p86
      %p360 = pneg %p83
      %p361 = pneg %p107
      %p362 = pneg %p104
      %p363 = pneg %p128
      %p364 = pneg %p125
      %p365 = pneg %p149
      %p366 = pneg %p146
      %p367 = pneg %p170
      %p368 = pneg %p167
      %p369 = pneg %p191
      %p370 = pneg %p188
      %p371 = pneg %p212
      %p372 = pneg %p209
      %p373 = pneg %p240
      %p374 = pneg %p237
      %s375 = smul.u32 8, %s26
      %p376 = scmp.lt.s32.totalorder %s375, 15
      %s377 = scalar_select %p376, %s375, 15
      %p378 = scmp.lt.s32.totalorder %s25, 0
      %s379 = scalar_select %p378, %s25, 0
      %s380 = sadd.s32 %s379, %s377
      %s381 = smul.addr %s380, 8
      %s382 = scalar_lea.vmem %s8, %s381
      %p383 = pneg %p270
      %p384 = pneg %p267
      %s385 = ssub.s32 1, %s26
      %s386 = smul.u32 8, %s385
      %p387 = scmp.lt.s32.totalorder %s386, 15
      %s388 = scalar_select %p387, %s386, 15
      %p389 = scmp.lt.s32.totalorder %s25, 0
      %s390 = scalar_select %p389, %s25, 0
      %s391 = sadd.s32 %s390, %s388
      %s392 = smul.addr %s391, 8
      %s393 = scalar_lea.vmem %s9, %s392
      %s394 = smul.u32 8, %s26
      %p395 = scmp.lt.s32.totalorder %s394, 15
      %s396 = scalar_select %p395, %s394, 15
      %p397 = scmp.lt.s32.totalorder %s25, 0
      %s398 = scalar_select %p397, %s25, 0
      %s399 = sadd.s32 %s398, %s396
      %s400 = smul.addr %s399, 8
      %s401 = scalar_lea.vmem %s0, %s400
      %s402 = smul.u32 8, %s26
      %s403 = ssub.s32 1, %s26
      %s404 = smul.u32 8, %s403
      %p405 = scmp.lt.s32.totalorder %s404, 15
      %s406 = scalar_select %p405, %s404, 15
      %p407 = scmp.lt.s32.totalorder %s25, 0
      %s408 = scalar_select %p407, %s25, 0
      %s409 = sadd.s32 %s408, %s406
      %s410 = smul.addr %s409, 8
      %s411 = scalar_lea.vmem %s1, %s410
      %s412 = ssub.s32 1, %s26
      %s413 = smul.u32 8, %s412
      %s414 = smul.u32 8, %s26
      %p415 = scmp.lt.s32.totalorder %s414, 15
      %s416 = scalar_select %p415, %s414, 15
      %p417 = scmp.lt.s32.totalorder %s25, 0
      %s418 = scalar_select %p417, %s25, 0
      %s419 = sadd.s32 %s418, %s416
      %s420 = smul.addr %s419, 8
      %s421 = scalar_lea.vmem %s8, %s420
      %s422 = smul.u32 8, %s26
      %s423 = ssub.s32 1, %s26
      %s424 = smul.u32 8, %s423
      %p425 = scmp.lt.s32.totalorder %s424, 15
      %s426 = scalar_select %p425, %s424, 15
      %p427 = scmp.lt.s32.totalorder %s25, 0
      %s428 = scalar_select %p427, %s25, 0
      %s429 = sadd.s32 %s428, %s426
      %s430 = smul.addr %s429, 8
      %s431 = scalar_lea.vmem %s9, %s430
      %s432 = ssub.s32 1, %s26
      %s433 = smul.u32 8, %s432
      %p434 = scmp.eq.s32.totalorder %s26, 0
      // Predicated region
      $region53: #{bilstm_forward.1} parent=51 // pred_check
        %p435 = pneg %p434
      $region54: #{bilstm_forward.1} parent=51 // pred_check_branch
        %437 = sbr.rel (%p435) target = $region56
      $region55: #{bilstm_forward.1} parent=51 // pred_region
        %438 = vst [vmem:[#allocation4] sm:$0xff] 0.0
        %439 = vst [vmem:[#allocation5] sm:$0xff] 0.0
        %440 = vst [vmem:[#allocation6] sm:$0xff] 0.0
        %441 = vst [vmem:[#allocation7] sm:$0xff] 0.0
      $region56: #{bilstm_forward.1} parent=51 // pred_fallthru
        _
      %v442 = vld [vmem:[%s401] sm:$0xff]
      %v443 = vld [vmem:[%s401 + $0x8] sm:$0xff]
      %v444 = vld [vmem:[%s401 + $0x10] sm:$0xff]
      %v445 = vld [vmem:[%s401 + $0x18] sm:$0xff]
      %v446 = vld [vmem:[%s401 + $0x20] sm:$0xff]
      %v447 = vld [vmem:[%s401 + $0x28] sm:$0xff]
      %v448 = vld [vmem:[%s401 + $0x30] sm:$0xff]
      %v449 = vld [vmem:[%s401 + $0x38] sm:$0xff]
      %v450 = vld [vmem:[%s2] sm:$0xff]
      %v451 = vld [vmem:[%s2 + $0x8] sm:$0xff]
      %v452 = vld [vmem:[%s2 + $0x10] sm:$0xff]
      %v453 = vld [vmem:[%s2 + $0x18] sm:$0xff]
      %v454 = vld [vmem:[%s2 + $0x20] sm:$0xff]
      %v455 = vld [vmem:[%s2 + $0x28] sm:$0xff]
      %v456 = vld [vmem:[%s2 + $0x30] sm:$0xff]
      %v457 = vld [vmem:[%s2 + $0x38] sm:$0xff]
      %v458 = vld [vmem:[%s2 + $0x40] sm:$0xff]
      %v459 = vld [vmem:[%s2 + $0x48] sm:$0xff]
      %v460 = vld [vmem:[%s2 + $0x50] sm:$0xff]
      %v461 = vld [vmem:[%s2 + $0x58] sm:$0xff]
      %v462 = vld [vmem:[%s2 + $0x60] sm:$0xff]
      %v463 = vld [vmem:[%s2 + $0x68] sm:$0xff]
      %v464 = vld [vmem:[%s2 + $0x70] sm:$0xff]
      %v465 = vld [vmem:[%s2 + $0x78] sm:$0xff]
      %v466 = vld [vmem:[%s4] sm:$0xf]
      %v468 = vlaneseq
      %v469 = vshrl.u32 %v468, 7
      %v470 = vsub.s32 0, %v469
      %v471 = vrot.slane %v466, %v470
      %v472 = vlaneseq
      %v473 = vshrl.u32 %v472, 7
      %v474 = vsub.s32 1, %v473
      %v475 = vrot.slane %v466, %v474
      %v476 = vlaneseq
      %v477 = vshrl.u32 %v476, 7
      %v478 = vsub.s32 2, %v477
      %v479 = vrot.slane %v466, %v478
      %v480 = vlaneseq
      %v481 = vshrl.u32 %v480, 7
      %v482 = vsub.s32 3, %v481
      %v483 = vrot.slane %v466, %v482
      %vm488 = vcmask 261120
      %v490 = vsel %vm488, %v442, 0
      %v493 = vsel %vm488, %v443, 0
      %v496 = vsel %vm488, %v444, 0
      %v499 = vsel %vm488, %v445, 0
      %v502 = vsel %vm488, %v446, 0
      %v505 = vsel %vm488, %v447, 0
      %v508 = vsel %vm488, %v448, 0
      %v511 = vsel %vm488, %v449, 0
      %513 = vmatprep.subr.mxu0 0.0
      %514 = vmatpush1.msra.mxu0 0.0
      %515 = vmatprep.subr.mxu0 0.0
      %516 = vmatpush1.msra.mxu0 0.0
      %517 = vmatprep.subr.mxu0 0.0
      %518 = vmatpush1.msra.mxu0 0.0
      %519 = vmatprep.subr.mxu0 0.0
      %520 = vmatpush1.msra.mxu0 0.0
      %521 = vmatprep.subr.mxu0 0.0
      %522 = vmatpush1.msra.mxu0 0.0
      %523 = vmatprep.subr.mxu0 0.0
      %524 = vmatpush1.msra.mxu0 0.0
      %525 = vmatprep.subr.mxu0 0.0
      %526 = vmatpush1.msra.mxu0 0.0
      %527 = vmatprep.subr.mxu0 0.0
      %528 = vmatpush1.msra.mxu0 0.0
      %529 = vmatprep.subr.mxu0 0.0
      %530 = vmatpush1.msra.mxu0 0.0
      %531 = vmatprep.subr.mxu0 0.0
      %532 = vmatpush1.msra.mxu0 0.0
      %533 = vmatprep.subr.mxu0 0.0
      %534 = vmatpush1.msra.mxu0 0.0
      %535 = vmatprep.subr.mxu0 0.0
      %536 = vmatpush1.msra.mxu0 0.0
      %537 = vmatprep.subr.mxu0 %v463
      %538 = vmatpush1.msra.mxu0 %v462
      %539 = vmatprep.subr.mxu0 %v459
      %540 = vmatpush1.msra.mxu0 %v458
      %541 = vmatprep.subr.mxu0 %v455
      %542 = vmatpush1.msra.mxu0 %v454
      %543 = vmatprep.subr.mxu0 %v451
      %544 = vmatpush1.msra.mxu0 %v450
      %545 = vmatprep.subr.mxu0 0.0
      %546 = vmatpush2.msra.mxu0 0.0
      %547 = vmatprep.subr.mxu0 0.0
      %548 = vmatpush2.msra.mxu0 0.0
      %549 = vmatprep.subr.mxu0 0.0
      %550 = vmatpush2.msra.mxu0 0.0
      %551 = vmatprep.subr.mxu0 0.0
      %552 = vmatpush2.msra.mxu0 0.0
      %553 = vmatprep.subr.mxu0 0.0
      %554 = vmatpush2.msra.mxu0 0.0
      %555 = vmatprep.subr.mxu0 0.0
      %556 = vmatpush2.msra.mxu0 0.0
      %557 = vmatprep.subr.mxu0 0.0
      %558 = vmatpush2.msra.mxu0 0.0
      %559 = vmatprep.subr.mxu0 0.0
      %560 = vmatpush2.msra.mxu0 0.0
      %561 = vmatprep.subr.mxu0 0.0
      %562 = vmatpush2.msra.mxu0 0.0
      %563 = vmatprep.subr.mxu0 0.0
      %564 = vmatpush2.msra.mxu0 0.0
      %565 = vmatprep.subr.mxu0 0.0
      %566 = vmatpush2.msra.mxu0 0.0
      %567 = vmatprep.subr.mxu0 0.0
      %568 = vmatpush2.msra.mxu0 0.0
      %569 = vmatprep.subr.mxu0 0.0
      %570 = vmatpush2.msra.mxu0 0.0
      %571 = vmatprep.subr.mxu0 0.0
      %572 = vmatpush2.msra.mxu0 0.0
      %573 = vmatprep.subr.mxu0 0.0
      %574 = vmatpush2.msra.mxu0 0.0
      %575 = vmatprep.subr.mxu0 0.0
      %576 = vmatpush2.msra.mxu0 0.0
      %577 = vmatprep.mubr.f32.mxu0 0.0
      %578 = vmatmul.mubr.f32.gmra.mxu0 %v490
      %v579 = vpop.f32.mrf.mxu0
      %v580 = vadd.f32 %v471, %v579
      %v581 = vpop.f32.mrf.mxu0
      %v582 = vadd.f32 %v475, %v581
      %583 = vmatprep.mubr.f32.mxu0 0.0
      %584 = vmatmul.mubr.f32.gmra.mxu0 %v493
      %v585 = vpop.f32.mrf.mxu0
      %v586 = vadd.f32 %v471, %v585
      %v587 = vpop.f32.mrf.mxu0
      %v588 = vadd.f32 %v475, %v587
      %589 = vmatprep.mubr.f32.mxu0 0.0
      %590 = vmatmul.mubr.f32.gmra.mxu0 %v496
      %v591 = vpop.f32.mrf.mxu0
      %v592 = vadd.f32 %v471, %v591
      %v593 = vpop.f32.mrf.mxu0
      %v594 = vadd.f32 %v475, %v593
      %595 = vmatprep.mubr.f32.mxu0 0.0
      %596 = vmatmul.mubr.f32.gmra.mxu0 %v499
      %v597 = vpop.f32.mrf.mxu0
      %v598 = vadd.f32 %v471, %v597
      %v599 = vpop.f32.mrf.mxu0
      %v600 = vadd.f32 %v475, %v599
      %601 = vmatprep.mubr.f32.mxu0 0.0
      %602 = vmatmul.mubr.f32.gmra.mxu0 %v502
      %v603 = vpop.f32.mrf.mxu0
      %v604 = vadd.f32 %v471, %v603
      %v605 = vpop.f32.mrf.mxu0
      %v606 = vadd.f32 %v475, %v605
      %607 = vmatprep.mubr.f32.mxu0 0.0
      %608 = vmatmul.mubr.f32.gmra.mxu0 %v505
      %v609 = vpop.f32.mrf.mxu0
      %v610 = vadd.f32 %v471, %v609
      %v611 = vpop.f32.mrf.mxu0
      %v612 = vadd.f32 %v475, %v611
      %613 = vmatprep.mubr.f32.mxu0 0.0
      %614 = vmatmul.mubr.f32.gmra.mxu0 %v508
      %v615 = vpop.f32.mrf.mxu0
      %v616 = vadd.f32 %v471, %v615
      %v617 = vpop.f32.mrf.mxu0
      %v618 = vadd.f32 %v475, %v617
      %619 = vmatprep.mubr.f32.mxu0 0.0
      %620 = vmatmul.mubr.f32.gmra.mxu0 %v511
      %v621 = vpop.f32.mrf.mxu0
      %v622 = vadd.f32 %v471, %v621
      %v623 = vpop.f32.mrf.mxu0
      %v624 = vadd.f32 %v475, %v623
      %625 = vdwg.mxu0
      %626 = vmatprep.subr.mxu0 0.0
      %627 = vmatpush1.msra.mxu0 0.0
      %628 = vmatprep.subr.mxu0 0.0
      %629 = vmatpush1.msra.mxu0 0.0
      %630 = vmatprep.subr.mxu0 0.0
      %631 = vmatpush1.msra.mxu0 0.0
      %632 = vmatprep.subr.mxu0 0.0
      %633 = vmatpush1.msra.mxu0 0.0
      %634 = vmatprep.subr.mxu0 0.0
      %635 = vmatpush1.msra.mxu0 0.0
      %636 = vmatprep.subr.mxu0 0.0
      %637 = vmatpush1.msra.mxu0 0.0
      %638 = vmatprep.subr.mxu0 0.0
      %639 = vmatpush1.msra.mxu0 0.0
      %640 = vmatprep.subr.mxu0 0.0
      %641 = vmatpush1.msra.mxu0 0.0
      %642 = vmatprep.subr.mxu0 0.0
      %643 = vmatpush1.msra.mxu0 0.0
      %644 = vmatprep.subr.mxu0 0.0
      %645 = vmatpush1.msra.mxu0 0.0
      %646 = vmatprep.subr.mxu0 0.0
      %647 = vmatpush1.msra.mxu0 0.0
      %648 = vmatprep.subr.mxu0 0.0
      %649 = vmatpush1.msra.mxu0 0.0
      %650 = vmatprep.subr.mxu0 %v465
      %651 = vmatpush1.msra.mxu0 %v464
      %652 = vmatprep.subr.mxu0 %v461
      %653 = vmatpush1.msra.mxu0 %v460
      %654 = vmatprep.subr.mxu0 %v457
      %655 = vmatpush1.msra.mxu0 %v456
      %656 = vmatprep.subr.mxu0 %v453
      %657 = vmatpush1.msra.mxu0 %v452
      %658 = vmatprep.subr.mxu0 0.0
      %659 = vmatpush2.msra.mxu0 0.0
      %660 = vmatprep.subr.mxu0 0.0
      %661 = vmatpush2.msra.mxu0 0.0
      %662 = vmatprep.subr.mxu0 0.0
      %663 = vmatpush2.msra.mxu0 0.0
      %664 = vmatprep.subr.mxu0 0.0
      %665 = vmatpush2.msra.mxu0 0.0
      %666 = vmatprep.subr.mxu0 0.0
      %667 = vmatpush2.msra.mxu0 0.0
      %668 = vmatprep.subr.mxu0 0.0
      %669 = vmatpush2.msra.mxu0 0.0
      %670 = vmatprep.subr.mxu0 0.0
      %671 = vmatpush2.msra.mxu0 0.0
      %672 = vmatprep.subr.mxu0 0.0
      %673 = vmatpush2.msra.mxu0 0.0
      %674 = vmatprep.subr.mxu0 0.0
      %675 = vmatpush2.msra.mxu0 0.0
      %676 = vmatprep.subr.mxu0 0.0
      %677 = vmatpush2.msra.mxu0 0.0
      %678 = vmatprep.subr.mxu0 0.0
      %679 = vmatpush2.msra.mxu0 0.0
      %680 = vmatprep.subr.mxu0 0.0
      %681 = vmatpush2.msra.mxu0 0.0
      %682 = vmatprep.subr.mxu0 0.0
      %683 = vmatpush2.msra.mxu0 0.0
      %684 = vmatprep.subr.mxu0 0.0
      %685 = vmatpush2.msra.mxu0 0.0
      %686 = vmatprep.subr.mxu0 0.0
      %687 = vmatpush2.msra.mxu0 0.0
      %688 = vmatprep.subr.mxu0 0.0
      %689 = vmatpush2.msra.mxu0 0.0
      %690 = vmatprep.mubr.f32.mxu0 0.0
      %691 = vmatmul.mubr.f32.gmra.mxu0 %v490
      %v692 = vpop.f32.mrf.mxu0
      %v693 = vadd.f32 %v479, %v692
      %v694 = vpop.f32.mrf.mxu0
      %v695 = vadd.f32 %v483, %v694
      %696 = vmatprep.mubr.f32.mxu0 0.0
      %697 = vmatmul.mubr.f32.gmra.mxu0 %v493
      %v698 = vpop.f32.mrf.mxu0
      %v699 = vadd.f32 %v479, %v698
      %v700 = vpop.f32.mrf.mxu0
      %v701 = vadd.f32 %v483, %v700
      %702 = vmatprep.mubr.f32.mxu0 0.0
      %703 = vmatmul.mubr.f32.gmra.mxu0 %v496
      %v704 = vpop.f32.mrf.mxu0
      %v705 = vadd.f32 %v479, %v704
      %v706 = vpop.f32.mrf.mxu0
      %v707 = vadd.f32 %v483, %v706
      %708 = vmatprep.mubr.f32.mxu0 0.0
      %709 = vmatmul.mubr.f32.gmra.mxu0 %v499
      %v710 = vpop.f32.mrf.mxu0
      %v711 = vadd.f32 %v479, %v710
      %v712 = vpop.f32.mrf.mxu0
      %v713 = vadd.f32 %v483, %v712
      %714 = vmatprep.mubr.f32.mxu0 0.0
      %715 = vmatmul.mubr.f32.gmra.mxu0 %v502
      %v716 = vpop.f32.mrf.mxu0
      %v717 = vadd.f32 %v479, %v716
      %v718 = vpop.f32.mrf.mxu0
      %v719 = vadd.f32 %v483, %v718
      %720 = vmatprep.mubr.f32.mxu0 0.0
      %721 = vmatmul.mubr.f32.gmra.mxu0 %v505
      %v722 = vpop.f32.mrf.mxu0
      %v723 = vadd.f32 %v479, %v722
      %v724 = vpop.f32.mrf.mxu0
      %v725 = vadd.f32 %v483, %v724
      %726 = vmatprep.mubr.f32.mxu0 0.0
      %727 = vmatmul.mubr.f32.gmra.mxu0 %v508
      %v728 = vpop.f32.mrf.mxu0
      %v729 = vadd.f32 %v479, %v728
      %v730 = vpop.f32.mrf.mxu0
      %v731 = vadd.f32 %v483, %v730
      %732 = vmatprep.mubr.f32.mxu0 0.0
      %733 = vmatmul.mubr.f32.gmra.mxu0 %v511
      %v734 = vpop.f32.mrf.mxu0
      %v735 = vadd.f32 %v479, %v734
      %v736 = vpop.f32.mrf.mxu0
      %v737 = vadd.f32 %v483, %v736
      %738 = vdwg.mxu0
      %739 = vst [vmem:[#allocation2] sm:$0xff] %v580
      %740 = vst [vmem:[#allocation2 + $0x8] sm:$0xff] %v582
      %741 = vst [vmem:[#allocation2 + $0x10] sm:$0xff] %v693
      %742 = vst [vmem:[#allocation2 + $0x18] sm:$0xff] %v695
      %743 = vst [vmem:[#allocation2 + $0x20] sm:$0xff] %v586
      %744 = vst [vmem:[#allocation2 + $0x28] sm:$0xff] %v588
      %745 = vst [vmem:[#allocation2 + $0x30] sm:$0xff] %v699
      %746 = vst [vmem:[#allocation2 + $0x38] sm:$0xff] %v701
      %747 = vst [vmem:[#allocation2 + $0x40] sm:$0xff] %v592
      %748 = vst [vmem:[#allocation2 + $0x48] sm:$0xff] %v594
      %749 = vst [vmem:[#allocation2 + $0x50] sm:$0xff] %v705
      %750 = vst [vmem:[#allocation2 + $0x58] sm:$0xff] %v707
      %751 = vst [vmem:[#allocation2 + $0x60] sm:$0xff] %v598
      %752 = vst [vmem:[#allocation2 + $0x68] sm:$0xff] %v600
      %753 = vst [vmem:[#allocation2 + $0x70] sm:$0xff] %v711
      %754 = vst [vmem:[#allocation2 + $0x78] sm:$0xff] %v713
      %755 = vst [vmem:[#allocation2 + $0x80] sm:$0xff] %v604
      %756 = vst [vmem:[#allocation2 + $0x88] sm:$0xff] %v606
      %757 = vst [vmem:[#allocation2 + $0x90] sm:$0xff] %v717
      %758 = vst [vmem:[#allocation2 + $0x98] sm:$0xff] %v719
      %759 = vst [vmem:[#allocation2 + $0xa0] sm:$0xff] %v610
      %760 = vst [vmem:[#allocation2 + $0xa8] sm:$0xff] %v612
      %761 = vst [vmem:[#allocation2 + $0xb0] sm:$0xff] %v723
      %762 = vst [vmem:[#allocation2 + $0xb8] sm:$0xff] %v725
      %763 = vst [vmem:[#allocation2 + $0xc0] sm:$0xff] %v616
      %764 = vst [vmem:[#allocation2 + $0xc8] sm:$0xff] %v618
      %765 = vst [vmem:[#allocation2 + $0xd0] sm:$0xff] %v729
      %766 = vst [vmem:[#allocation2 + $0xd8] sm:$0xff] %v731
      %767 = vst [vmem:[#allocation2 + $0xe0] sm:$0xff] %v622
      %768 = vst [vmem:[#allocation2 + $0xe8] sm:$0xff] %v624
      %769 = vst [vmem:[#allocation2 + $0xf0] sm:$0xff] %v735
      %770 = vst [vmem:[#allocation2 + $0xf8] sm:$0xff] %v737
      %v771 = vld [vmem:[%s411] sm:$0xff]
      %v772 = vld [vmem:[%s411 + $0x8] sm:$0xff]
      %v773 = vld [vmem:[%s411 + $0x10] sm:$0xff]
      %v774 = vld [vmem:[%s411 + $0x18] sm:$0xff]
      %v775 = vld [vmem:[%s411 + $0x20] sm:$0xff]
      %v776 = vld [vmem:[%s411 + $0x28] sm:$0xff]
      %v777 = vld [vmem:[%s411 + $0x30] sm:$0xff]
      %v778 = vld [vmem:[%s411 + $0x38] sm:$0xff]
      %v779 = vld [vmem:[%s3] sm:$0xff]
      %v780 = vld [vmem:[%s3 + $0x8] sm:$0xff]
      %v781 = vld [vmem:[%s3 + $0x10] sm:$0xff]
      %v782 = vld [vmem:[%s3 + $0x18] sm:$0xff]
      %v783 = vld [vmem:[%s3 + $0x20] sm:$0xff]
      %v784 = vld [vmem:[%s3 + $0x28] sm:$0xff]
      %v785 = vld [vmem:[%s3 + $0x30] sm:$0xff]
      %v786 = vld [vmem:[%s3 + $0x38] sm:$0xff]
      %v787 = vld [vmem:[%s3 + $0x40] sm:$0xff]
      %v788 = vld [vmem:[%s3 + $0x48] sm:$0xff]
      %v789 = vld [vmem:[%s3 + $0x50] sm:$0xff]
      %v790 = vld [vmem:[%s3 + $0x58] sm:$0xff]
      %v791 = vld [vmem:[%s3 + $0x60] sm:$0xff]
      %v792 = vld [vmem:[%s3 + $0x68] sm:$0xff]
      %v793 = vld [vmem:[%s3 + $0x70] sm:$0xff]
      %v794 = vld [vmem:[%s3 + $0x78] sm:$0xff]
      %v795 = vld [vmem:[%s5] sm:$0xf]
      %v797 = vlaneseq
      %v798 = vshrl.u32 %v797, 7
      %v799 = vsub.s32 0, %v798
      %v800 = vrot.slane %v795, %v799
      %v801 = vlaneseq
      %v802 = vshrl.u32 %v801, 7
      %v803 = vsub.s32 1, %v802
      %v804 = vrot.slane %v795, %v803
      %v805 = vlaneseq
      %v806 = vshrl.u32 %v805, 7
      %v807 = vsub.s32 2, %v806
      %v808 = vrot.slane %v795, %v807
      %v809 = vlaneseq
      %v810 = vshrl.u32 %v809, 7
      %v811 = vsub.s32 3, %v810
      %v812 = vrot.slane %v795, %v811
      %v818 = vsel %vm488, %v771, 0
      %v821 = vsel %vm488, %v772, 0
      %v824 = vsel %vm488, %v773, 0
      %v827 = vsel %vm488, %v774, 0
      %v830 = vsel %vm488, %v775, 0
      %v833 = vsel %vm488, %v776, 0
      %v836 = vsel %vm488, %v777, 0
      %v839 = vsel %vm488, %v778, 0
      %841 = vmatprep.subr.mxu0 0.0
      %842 = vmatpush1.msra.mxu0 0.0
      %843 = vmatprep.subr.mxu0 0.0
      %844 = vmatpush1.msra.mxu0 0.0
      %845 = vmatprep.subr.mxu0 0.0
      %846 = vmatpush1.msra.mxu0 0.0
      %847 = vmatprep.subr.mxu0 0.0
      %848 = vmatpush1.msra.mxu0 0.0
      %849 = vmatprep.subr.mxu0 0.0
      %850 = vmatpush1.msra.mxu0 0.0
      %851 = vmatprep.subr.mxu0 0.0
      %852 = vmatpush1.msra.mxu0 0.0
      %853 = vmatprep.subr.mxu0 0.0
      %854 = vmatpush1.msra.mxu0 0.0
      %855 = vmatprep.subr.mxu0 0.0
      %856 = vmatpush1.msra.mxu0 0.0
      %857 = vmatprep.subr.mxu0 0.0
      %858 = vmatpush1.msra.mxu0 0.0
      %859 = vmatprep.subr.mxu0 0.0
      %860 = vmatpush1.msra.mxu0 0.0
      %861 = vmatprep.subr.mxu0 0.0
      %862 = vmatpush1.msra.mxu0 0.0
      %863 = vmatprep.subr.mxu0 0.0
      %864 = vmatpush1.msra.mxu0 0.0
      %865 = vmatprep.subr.mxu0 %v792
      %866 = vmatpush1.msra.mxu0 %v791
      %867 = vmatprep.subr.mxu0 %v788
      %868 = vmatpush1.msra.mxu0 %v787
      %869 = vmatprep.subr.mxu0 %v784
      %870 = vmatpush1.msra.mxu0 %v783
      %871 = vmatprep.subr.mxu0 %v780
      %872 = vmatpush1.msra.mxu0 %v779
      %873 = vmatprep.subr.mxu0 0.0
      %874 = vmatpush2.msra.mxu0 0.0
      %875 = vmatprep.subr.mxu0 0.0
      %876 = vmatpush2.msra.mxu0 0.0
      %877 = vmatprep.subr.mxu0 0.0
      %878 = vmatpush2.msra.mxu0 0.0
      %879 = vmatprep.subr.mxu0 0.0
      %880 = vmatpush2.msra.mxu0 0.0
      %881 = vmatprep.subr.mxu0 0.0
      %882 = vmatpush2.msra.mxu0 0.0
      %883 = vmatprep.subr.mxu0 0.0
      %884 = vmatpush2.msra.mxu0 0.0
      %885 = vmatprep.subr.mxu0 0.0
      %886 = vmatpush2.msra.mxu0 0.0
      %887 = vmatprep.subr.mxu0 0.0
      %888 = vmatpush2.msra.mxu0 0.0
      %889 = vmatprep.subr.mxu0 0.0
      %890 = vmatpush2.msra.mxu0 0.0
      %891 = vmatprep.subr.mxu0 0.0
      %892 = vmatpush2.msra.mxu0 0.0
      %893 = vmatprep.subr.mxu0 0.0
      %894 = vmatpush2.msra.mxu0 0.0
      %895 = vmatprep.subr.mxu0 0.0
      %896 = vmatpush2.msra.mxu0 0.0
      %897 = vmatprep.subr.mxu0 0.0
      %898 = vmatpush2.msra.mxu0 0.0
      %899 = vmatprep.subr.mxu0 0.0
      %900 = vmatpush2.msra.mxu0 0.0
      %901 = vmatprep.subr.mxu0 0.0
      %902 = vmatpush2.msra.mxu0 0.0
      %903 = vmatprep.subr.mxu0 0.0
      %904 = vmatpush2.msra.mxu0 0.0
      %905 = vmatprep.mubr.f32.mxu0 0.0
      %906 = vmatmul.mubr.f32.gmra.mxu0 %v818
      %v907 = vpop.f32.mrf.mxu0
      %v908 = vadd.f32 %v800, %v907
      %v909 = vpop.f32.mrf.mxu0
      %v910 = vadd.f32 %v804, %v909
      %911 = vmatprep.mubr.f32.mxu0 0.0
      %912 = vmatmul.mubr.f32.gmra.mxu0 %v821
      %v913 = vpop.f32.mrf.mxu0
      %v914 = vadd.f32 %v800, %v913
      %v915 = vpop.f32.mrf.mxu0
      %v916 = vadd.f32 %v804, %v915
      %917 = vmatprep.mubr.f32.mxu0 0.0
      %918 = vmatmul.mubr.f32.gmra.mxu0 %v824
      %v919 = vpop.f32.mrf.mxu0
      %v920 = vadd.f32 %v800, %v919
      %v921 = vpop.f32.mrf.mxu0
      %v922 = vadd.f32 %v804, %v921
      %923 = vmatprep.mubr.f32.mxu0 0.0
      %924 = vmatmul.mubr.f32.gmra.mxu0 %v827
      %v925 = vpop.f32.mrf.mxu0
      %v926 = vadd.f32 %v800, %v925
      %v927 = vpop.f32.mrf.mxu0
      %v928 = vadd.f32 %v804, %v927
      %929 = vmatprep.mubr.f32.mxu0 0.0
      %930 = vmatmul.mubr.f32.gmra.mxu0 %v830
      %v931 = vpop.f32.mrf.mxu0
      %v932 = vadd.f32 %v800, %v931
      %v933 = vpop.f32.mrf.mxu0
      %v934 = vadd.f32 %v804, %v933
      %935 = vmatprep.mubr.f32.mxu0 0.0
      %936 = vmatmul.mubr.f32.gmra.mxu0 %v833
      %v937 = vpop.f32.mrf.mxu0
      %v938 = vadd.f32 %v800, %v937
      %v939 = vpop.f32.mrf.mxu0
      %v940 = vadd.f32 %v804, %v939
      %941 = vmatprep.mubr.f32.mxu0 0.0
      %942 = vmatmul.mubr.f32.gmra.mxu0 %v836
      %v943 = vpop.f32.mrf.mxu0
      %v944 = vadd.f32 %v800, %v943
      %v945 = vpop.f32.mrf.mxu0
      %v946 = vadd.f32 %v804, %v945
      %947 = vmatprep.mubr.f32.mxu0 0.0
      %948 = vmatmul.mubr.f32.gmra.mxu0 %v839
      %v949 = vpop.f32.mrf.mxu0
      %v950 = vadd.f32 %v800, %v949
      %v951 = vpop.f32.mrf.mxu0
      %v952 = vadd.f32 %v804, %v951
      %953 = vdwg.mxu0
      %954 = vmatprep.subr.mxu0 0.0
      %955 = vmatpush1.msra.mxu0 0.0
      %956 = vmatprep.subr.mxu0 0.0
      %957 = vmatpush1.msra.mxu0 0.0
      %958 = vmatprep.subr.mxu0 0.0
      %959 = vmatpush1.msra.mxu0 0.0
      %960 = vmatprep.subr.mxu0 0.0
      %961 = vmatpush1.msra.mxu0 0.0
      %962 = vmatprep.subr.mxu0 0.0
      %963 = vmatpush1.msra.mxu0 0.0
      %964 = vmatprep.subr.mxu0 0.0
      %965 = vmatpush1.msra.mxu0 0.0
      %966 = vmatprep.subr.mxu0 0.0
      %967 = vmatpush1.msra.mxu0 0.0
      %968 = vmatprep.subr.mxu0 0.0
      %969 = vmatpush1.msra.mxu0 0.0
      %970 = vmatprep.subr.mxu0 0.0
      %971 = vmatpush1.msra.mxu0 0.0
      %972 = vmatprep.subr.mxu0 0.0
      %973 = vmatpush1.msra.mxu0 0.0
      %974 = vmatprep.subr.mxu0 0.0
      %975 = vmatpush1.msra.mxu0 0.0
      %976 = vmatprep.subr.mxu0 0.0
      %977 = vmatpush1.msra.mxu0 0.0
      %978 = vmatprep.subr.mxu0 %v794
      %979 = vmatpush1.msra.mxu0 %v793
      %980 = vmatprep.subr.mxu0 %v790
      %981 = vmatpush1.msra.mxu0 %v789
      %982 = vmatprep.subr.mxu0 %v786
      %983 = vmatpush1.msra.mxu0 %v785
      %984 = vmatprep.subr.mxu0 %v782
      %985 = vmatpush1.msra.mxu0 %v781
      %986 = vmatprep.subr.mxu0 0.0
      %987 = vmatpush2.msra.mxu0 0.0
      %988 = vmatprep.subr.mxu0 0.0
      %989 = vmatpush2.msra.mxu0 0.0
      %990 = vmatprep.subr.mxu0 0.0
      %991 = vmatpush2.msra.mxu0 0.0
      %992 = vmatprep.subr.mxu0 0.0
      %993 = vmatpush2.msra.mxu0 0.0
      %994 = vmatprep.subr.mxu0 0.0
      %995 = vmatpush2.msra.mxu0 0.0
      %996 = vmatprep.subr.mxu0 0.0
      %997 = vmatpush2.msra.mxu0 0.0
      %998 = vmatprep.subr.mxu0 0.0
      %999 = vmatpush2.msra.mxu0 0.0
      %1000 = vmatprep.subr.mxu0 0.0
      %1001 = vmatpush2.msra.mxu0 0.0
      %1002 = vmatprep.subr.mxu0 0.0
      %1003 = vmatpush2.msra.mxu0 0.0
      %1004 = vmatprep.subr.mxu0 0.0
      %1005 = vmatpush2.msra.mxu0 0.0
      %1006 = vmatprep.subr.mxu0 0.0
      %1007 = vmatpush2.msra.mxu0 0.0
      %1008 = vmatprep.subr.mxu0 0.0
      %1009 = vmatpush2.msra.mxu0 0.0
      %1010 = vmatprep.subr.mxu0 0.0
      %1011 = vmatpush2.msra.mxu0 0.0
      %1012 = vmatprep.subr.mxu0 0.0
      %1013 = vmatpush2.msra.mxu0 0.0
      %1014 = vmatprep.subr.mxu0 0.0
      %1015 = vmatpush2.msra.mxu0 0.0
      %1016 = vmatprep.subr.mxu0 0.0
      %1017 = vmatpush2.msra.mxu0 0.0
      %1018 = vmatprep.mubr.f32.mxu0 0.0
      %1019 = vmatmul.mubr.f32.gmra.mxu0 %v818
      %v1020 = vpop.f32.mrf.mxu0
      %v1021 = vadd.f32 %v808, %v1020
      %v1022 = vpop.f32.mrf.mxu0
      %v1023 = vadd.f32 %v812, %v1022
      %1024 = vmatprep.mubr.f32.mxu0 0.0
      %1025 = vmatmul.mubr.f32.gmra.mxu0 %v821
      %v1026 = vpop.f32.mrf.mxu0
      %v1027 = vadd.f32 %v808, %v1026
      %v1028 = vpop.f32.mrf.mxu0
      %v1029 = vadd.f32 %v812, %v1028
      %1030 = vmatprep.mubr.f32.mxu0 0.0
      %1031 = vmatmul.mubr.f32.gmra.mxu0 %v824
      %v1032 = vpop.f32.mrf.mxu0
      %v1033 = vadd.f32 %v808, %v1032
      %v1034 = vpop.f32.mrf.mxu0
      %v1035 = vadd.f32 %v812, %v1034
      %1036 = vmatprep.mubr.f32.mxu0 0.0
      %1037 = vmatmul.mubr.f32.gmra.mxu0 %v827
      %v1038 = vpop.f32.mrf.mxu0
      %v1039 = vadd.f32 %v808, %v1038
      %v1040 = vpop.f32.mrf.mxu0
      %v1041 = vadd.f32 %v812, %v1040
      %1042 = vmatprep.mubr.f32.mxu0 0.0
      %1043 = vmatmul.mubr.f32.gmra.mxu0 %v830
      %v1044 = vpop.f32.mrf.mxu0
      %v1045 = vadd.f32 %v808, %v1044
      %v1046 = vpop.f32.mrf.mxu0
      %v1047 = vadd.f32 %v812, %v1046
      %1048 = vmatprep.mubr.f32.mxu0 0.0
      %1049 = vmatmul.mubr.f32.gmra.mxu0 %v833
      %v1050 = vpop.f32.mrf.mxu0
      %v1051 = vadd.f32 %v808, %v1050
      %v1052 = vpop.f32.mrf.mxu0
      %v1053 = vadd.f32 %v812, %v1052
      %1054 = vmatprep.mubr.f32.mxu0 0.0
      %1055 = vmatmul.mubr.f32.gmra.mxu0 %v836
      %v1056 = vpop.f32.mrf.mxu0
      %v1057 = vadd.f32 %v808, %v1056
      %v1058 = vpop.f32.mrf.mxu0
      %v1059 = vadd.f32 %v812, %v1058
      %1060 = vmatprep.mubr.f32.mxu0 0.0
      %1061 = vmatmul.mubr.f32.gmra.mxu0 %v839
      %v1062 = vpop.f32.mrf.mxu0
      %v1063 = vadd.f32 %v808, %v1062
      %v1064 = vpop.f32.mrf.mxu0
      %v1065 = vadd.f32 %v812, %v1064
      %1066 = vdwg.mxu0
      %1067 = vst [vmem:[#allocation3] sm:$0xff] %v908
      %1068 = vst [vmem:[#allocation3 + $0x8] sm:$0xff] %v910
      %1069 = vst [vmem:[#allocation3 + $0x10] sm:$0xff] %v1021
      %1070 = vst [vmem:[#allocation3 + $0x18] sm:$0xff] %v1023
      %1071 = vst [vmem:[#allocation3 + $0x20] sm:$0xff] %v914
      %1072 = vst [vmem:[#allocation3 + $0x28] sm:$0xff] %v916
      %1073 = vst [vmem:[#allocation3 + $0x30] sm:$0xff] %v1027
      %1074 = vst [vmem:[#allocation3 + $0x38] sm:$0xff] %v1029
      %1075 = vst [vmem:[#allocation3 + $0x40] sm:$0xff] %v920
      %1076 = vst [vmem:[#allocation3 + $0x48] sm:$0xff] %v922
      %1077 = vst [vmem:[#allocation3 + $0x50] sm:$0xff] %v1033
      %1078 = vst [vmem:[#allocation3 + $0x58] sm:$0xff] %v1035
      %1079 = vst [vmem:[#allocation3 + $0x60] sm:$0xff] %v926
      %1080 = vst [vmem:[#allocation3 + $0x68] sm:$0xff] %v928
      %1081 = vst [vmem:[#allocation3 + $0x70] sm:$0xff] %v1039
      %1082 = vst [vmem:[#allocation3 + $0x78] sm:$0xff] %v1041
      %1083 = vst [vmem:[#allocation3 + $0x80] sm:$0xff] %v932
      %1084 = vst [vmem:[#allocation3 + $0x88] sm:$0xff] %v934
      %1085 = vst [vmem:[#allocation3 + $0x90] sm:$0xff] %v1045
      %1086 = vst [vmem:[#allocation3 + $0x98] sm:$0xff] %v1047
      %1087 = vst [vmem:[#allocation3 + $0xa0] sm:$0xff] %v938
      %1088 = vst [vmem:[#allocation3 + $0xa8] sm:$0xff] %v940
      %1089 = vst [vmem:[#allocation3 + $0xb0] sm:$0xff] %v1051
      %1090 = vst [vmem:[#allocation3 + $0xb8] sm:$0xff] %v1053
      %1091 = vst [vmem:[#allocation3 + $0xc0] sm:$0xff] %v944
      %1092 = vst [vmem:[#allocation3 + $0xc8] sm:$0xff] %v946
      %1093 = vst [vmem:[#allocation3 + $0xd0] sm:$0xff] %v1057
      %1094 = vst [vmem:[#allocation3 + $0xd8] sm:$0xff] %v1059
      %1095 = vst [vmem:[#allocation3 + $0xe0] sm:$0xff] %v950
      %1096 = vst [vmem:[#allocation3 + $0xe8] sm:$0xff] %v952
      %1097 = vst [vmem:[#allocation3 + $0xf0] sm:$0xff] %v1063
      %1098 = vst [vmem:[#allocation3 + $0xf8] sm:$0xff] %v1065
      %v1099 = vld [vmem:[%s6] sm:$0xff]
      %v1100 = vld [vmem:[%s6 + $0x8] sm:$0xff]
      %v1101 = vld [vmem:[%s6 + $0x10] sm:$0xff]
      %v1102 = vld [vmem:[%s6 + $0x18] sm:$0xff]
      %v1103 = vld [vmem:[%s6 + $0x20] sm:$0xff]
      %v1104 = vld [vmem:[%s6 + $0x28] sm:$0xff]
      %v1105 = vld [vmem:[%s6 + $0x30] sm:$0xff]
      %v1106 = vld [vmem:[%s6 + $0x38] sm:$0xff]
      %v1107 = vld [vmem:[%s6 + $0x40] sm:$0xff]
      %v1108 = vld [vmem:[%s6 + $0x48] sm:$0xff]
      %v1109 = vld [vmem:[%s6 + $0x50] sm:$0xff]
      %v1110 = vld [vmem:[%s6 + $0x58] sm:$0xff]
      %v1111 = vld [vmem:[%s6 + $0x60] sm:$0xff]
      %v1112 = vld [vmem:[%s6 + $0x68] sm:$0xff]
      %v1113 = vld [vmem:[%s6 + $0x70] sm:$0xff]
      %v1114 = vld [vmem:[%s6 + $0x78] sm:$0xff]
      %v1115 = vld [vmem:[%s6 + $0x80] sm:$0xff]
      %v1116 = vld [vmem:[%s6 + $0x88] sm:$0xff]
      %v1117 = vld [vmem:[%s6 + $0x90] sm:$0xff]
      %v1118 = vld [vmem:[%s6 + $0x98] sm:$0xff]
      %v1119 = vld [vmem:[%s6 + $0xa0] sm:$0xff]
      %v1120 = vld [vmem:[%s6 + $0xa8] sm:$0xff]
      %v1121 = vld [vmem:[%s6 + $0xb0] sm:$0xff]
      %v1122 = vld [vmem:[%s6 + $0xb8] sm:$0xff]
      %v1123 = vld [vmem:[%s6 + $0xc0] sm:$0xff]
      %v1124 = vld [vmem:[%s6 + $0xc8] sm:$0xff]
      %v1125 = vld [vmem:[%s6 + $0xd0] sm:$0xff]
      %v1126 = vld [vmem:[%s6 + $0xd8] sm:$0xff]
      %v1127 = vld [vmem:[%s6 + $0xe0] sm:$0xff]
      %v1128 = vld [vmem:[%s6 + $0xe8] sm:$0xff]
      %v1129 = vld [vmem:[%s6 + $0xf0] sm:$0xff]
      %v1130 = vld [vmem:[%s6 + $0xf8] sm:$0xff]
      %v1131 = vld [vmem:[%s6 + $0x100] sm:$0xff]
      %v1132 = vld [vmem:[%s6 + $0x108] sm:$0xff]
      %v1133 = vld [vmem:[%s6 + $0x110] sm:$0xff]
      %v1134 = vld [vmem:[%s6 + $0x118] sm:$0xff]
      %v1135 = vld [vmem:[%s6 + $0x120] sm:$0xff]
      %v1136 = vld [vmem:[%s6 + $0x128] sm:$0xff]
      %v1137 = vld [vmem:[%s6 + $0x130] sm:$0xff]
      %v1138 = vld [vmem:[%s6 + $0x138] sm:$0xff]
      %v1139 = vld [vmem:[%s6 + $0x140] sm:$0xff]
      %v1140 = vld [vmem:[%s6 + $0x148] sm:$0xff]
      %v1141 = vld [vmem:[%s6 + $0x150] sm:$0xff]
      %v1142 = vld [vmem:[%s6 + $0x158] sm:$0xff]
      %v1143 = vld [vmem:[%s6 + $0x160] sm:$0xff]
      %v1144 = vld [vmem:[%s6 + $0x168] sm:$0xff]
      %v1145 = vld [vmem:[%s6 + $0x170] sm:$0xff]
      %v1146 = vld [vmem:[%s6 + $0x178] sm:$0xff]
      %v1147 = vld [vmem:[%s6 + $0x180] sm:$0xff]
      %v1148 = vld [vmem:[%s6 + $0x188] sm:$0xff]
      %v1149 = vld [vmem:[%s6 + $0x190] sm:$0xff]
      %v1150 = vld [vmem:[%s6 + $0x198] sm:$0xff]
      %v1151 = vld [vmem:[%s6 + $0x1a0] sm:$0xff]
      %v1152 = vld [vmem:[%s6 + $0x1a8] sm:$0xff]
      %v1153 = vld [vmem:[%s6 + $0x1b0] sm:$0xff]
      %v1154 = vld [vmem:[%s6 + $0x1b8] sm:$0xff]
      %v1155 = vld [vmem:[%s6 + $0x1c0] sm:$0xff]
      %v1156 = vld [vmem:[%s6 + $0x1c8] sm:$0xff]
      %v1157 = vld [vmem:[%s6 + $0x1d0] sm:$0xff]
      %v1158 = vld [vmem:[%s6 + $0x1d8] sm:$0xff]
      %v1159 = vld [vmem:[%s6 + $0x1e0] sm:$0xff]
      %v1160 = vld [vmem:[%s6 + $0x1e8] sm:$0xff]
      %v1161 = vld [vmem:[%s6 + $0x1f0] sm:$0xff]
      %v1162 = vld [vmem:[%s6 + $0x1f8] sm:$0xff]
      %v1163 = vld [vmem:[%s7] sm:$0xff]
      %v1164 = vld [vmem:[%s7 + $0x8] sm:$0xff]
      %v1165 = vld [vmem:[%s7 + $0x10] sm:$0xff]
      %v1166 = vld [vmem:[%s7 + $0x18] sm:$0xff]
      %v1167 = vld [vmem:[%s7 + $0x20] sm:$0xff]
      %v1168 = vld [vmem:[%s7 + $0x28] sm:$0xff]
      %v1169 = vld [vmem:[%s7 + $0x30] sm:$0xff]
      %v1170 = vld [vmem:[%s7 + $0x38] sm:$0xff]
      %v1171 = vld [vmem:[%s7 + $0x40] sm:$0xff]
      %v1172 = vld [vmem:[%s7 + $0x48] sm:$0xff]
      %v1173 = vld [vmem:[%s7 + $0x50] sm:$0xff]
      %v1174 = vld [vmem:[%s7 + $0x58] sm:$0xff]
      %v1175 = vld [vmem:[%s7 + $0x60] sm:$0xff]
      %v1176 = vld [vmem:[%s7 + $0x68] sm:$0xff]
      %v1177 = vld [vmem:[%s7 + $0x70] sm:$0xff]
      %v1178 = vld [vmem:[%s7 + $0x78] sm:$0xff]
      %v1179 = vld [vmem:[%s7 + $0x80] sm:$0xff]
      %v1180 = vld [vmem:[%s7 + $0x88] sm:$0xff]
      %v1181 = vld [vmem:[%s7 + $0x90] sm:$0xff]
      %v1182 = vld [vmem:[%s7 + $0x98] sm:$0xff]
      %v1183 = vld [vmem:[%s7 + $0xa0] sm:$0xff]
      %v1184 = vld [vmem:[%s7 + $0xa8] sm:$0xff]
      %v1185 = vld [vmem:[%s7 + $0xb0] sm:$0xff]
      %v1186 = vld [vmem:[%s7 + $0xb8] sm:$0xff]
      %v1187 = vld [vmem:[%s7 + $0xc0] sm:$0xff]
      %v1188 = vld [vmem:[%s7 + $0xc8] sm:$0xff]
      %v1189 = vld [vmem:[%s7 + $0xd0] sm:$0xff]
      %v1190 = vld [vmem:[%s7 + $0xd8] sm:$0xff]
      %v1191 = vld [vmem:[%s7 + $0xe0] sm:$0xff]
      %v1192 = vld [vmem:[%s7 + $0xe8] sm:$0xff]
      %v1193 = vld [vmem:[%s7 + $0xf0] sm:$0xff]
      %v1194 = vld [vmem:[%s7 + $0xf8] sm:$0xff]
      %v1195 = vld [vmem:[%s7 + $0x100] sm:$0xff]
      %v1196 = vld [vmem:[%s7 + $0x108] sm:$0xff]
      %v1197 = vld [vmem:[%s7 + $0x110] sm:$0xff]
      %v1198 = vld [vmem:[%s7 + $0x118] sm:$0xff]
      %v1199 = vld [vmem:[%s7 + $0x120] sm:$0xff]
      %v1200 = vld [vmem:[%s7 + $0x128] sm:$0xff]
      %v1201 = vld [vmem:[%s7 + $0x130] sm:$0xff]
      %v1202 = vld [vmem:[%s7 + $0x138] sm:$0xff]
      %v1203 = vld [vmem:[%s7 + $0x140] sm:$0xff]
      %v1204 = vld [vmem:[%s7 + $0x148] sm:$0xff]
      %v1205 = vld [vmem:[%s7 + $0x150] sm:$0xff]
      %v1206 = vld [vmem:[%s7 + $0x158] sm:$0xff]
      %v1207 = vld [vmem:[%s7 + $0x160] sm:$0xff]
      %v1208 = vld [vmem:[%s7 + $0x168] sm:$0xff]
      %v1209 = vld [vmem:[%s7 + $0x170] sm:$0xff]
      %v1210 = vld [vmem:[%s7 + $0x178] sm:$0xff]
      %v1211 = vld [vmem:[%s7 + $0x180] sm:$0xff]
      %v1212 = vld [vmem:[%s7 + $0x188] sm:$0xff]
      %v1213 = vld [vmem:[%s7 + $0x190] sm:$0xff]
      %v1214 = vld [vmem:[%s7 + $0x198] sm:$0xff]
      %v1215 = vld [vmem:[%s7 + $0x1a0] sm:$0xff]
      %v1216 = vld [vmem:[%s7 + $0x1a8] sm:$0xff]
      %v1217 = vld [vmem:[%s7 + $0x1b0] sm:$0xff]
      %v1218 = vld [vmem:[%s7 + $0x1b8] sm:$0xff]
      %v1219 = vld [vmem:[%s7 + $0x1c0] sm:$0xff]
      %v1220 = vld [vmem:[%s7 + $0x1c8] sm:$0xff]
      %v1221 = vld [vmem:[%s7 + $0x1d0] sm:$0xff]
      %v1222 = vld [vmem:[%s7 + $0x1d8] sm:$0xff]
      %v1223 = vld [vmem:[%s7 + $0x1e0] sm:$0xff]
      %v1224 = vld [vmem:[%s7 + $0x1e8] sm:$0xff]
      %v1225 = vld [vmem:[%s7 + $0x1f0] sm:$0xff]
      %v1226 = vld [vmem:[%s7 + $0x1f8] sm:$0xff]
      %v1227 = vld [vmem:[#allocation4] sm:$0xff]
      %v1228 = vld [vmem:[#allocation5] sm:$0xff]
      %v1229 = vld [vmem:[#allocation6] sm:$0xff]
      %v1230 = vld [vmem:[#allocation7] sm:$0xff]
      %v1231 = vld [vmem:[#allocation2] sm:$0xff]
      %v1232 = vld [vmem:[#allocation2 + $0x8] sm:$0xff]
      %v1233 = vld [vmem:[#allocation2 + $0x10] sm:$0xff]
      %v1234 = vld [vmem:[#allocation2 + $0x18] sm:$0xff]
      %1235 = vmatprep.subr.mxu0 %v1160
      %1236 = vmatpush1.msra.mxu0 %v1159
      %1237 = vmatprep.subr.mxu0 %v1156
      %1238 = vmatpush1.msra.mxu0 %v1155
      %1239 = vmatprep.subr.mxu0 %v1152
      %1240 = vmatpush1.msra.mxu0 %v1151
      %1241 = vmatprep.subr.mxu0 %v1148
      %1242 = vmatpush1.msra.mxu0 %v1147
      %1243 = vmatprep.subr.mxu0 %v1144
      %1244 = vmatpush1.msra.mxu0 %v1143
      %1245 = vmatprep.subr.mxu0 %v1140
      %1246 = vmatpush1.msra.mxu0 %v1139
      %1247 = vmatprep.subr.mxu0 %v1136
      %1248 = vmatpush1.msra.mxu0 %v1135
      %1249 = vmatprep.subr.mxu0 %v1132
      %1250 = vmatpush1.msra.mxu0 %v1131
      %1251 = vmatprep.subr.mxu0 %v1128
      %1252 = vmatpush1.msra.mxu0 %v1127
      %1253 = vmatprep.subr.mxu0 %v1124
      %1254 = vmatpush1.msra.mxu0 %v1123
      %1255 = vmatprep.subr.mxu0 %v1120
      %1256 = vmatpush1.msra.mxu0 %v1119
      %1257 = vmatprep.subr.mxu0 %v1116
      %1258 = vmatpush1.msra.mxu0 %v1115
      %1259 = vmatprep.subr.mxu0 %v1112
      %1260 = vmatpush1.msra.mxu0 %v1111
      %1261 = vmatprep.subr.mxu0 %v1108
      %1262 = vmatpush1.msra.mxu0 %v1107
      %1263 = vmatprep.subr.mxu0 %v1104
      %1264 = vmatpush1.msra.mxu0 %v1103
      %1265 = vmatprep.subr.mxu0 %v1100
      %1266 = vmatpush1.msra.mxu0 %v1099
      %1267 = vmatprep.subr.mxu0 0.0
      %1268 = vmatpush2.msra.mxu0 0.0
      %1269 = vmatprep.subr.mxu0 0.0
      %1270 = vmatpush2.msra.mxu0 0.0
      %1271 = vmatprep.subr.mxu0 0.0
      %1272 = vmatpush2.msra.mxu0 0.0
      %1273 = vmatprep.subr.mxu0 0.0
      %1274 = vmatpush2.msra.mxu0 0.0
      %1275 = vmatprep.subr.mxu0 0.0
      %1276 = vmatpush2.msra.mxu0 0.0
      %1277 = vmatprep.subr.mxu0 0.0
      %1278 = vmatpush2.msra.mxu0 0.0
      %1279 = vmatprep.subr.mxu0 0.0
      %1280 = vmatpush2.msra.mxu0 0.0
      %1281 = vmatprep.subr.mxu0 0.0
      %1282 = vmatpush2.msra.mxu0 0.0
      %1283 = vmatprep.subr.mxu0 0.0
      %1284 = vmatpush2.msra.mxu0 0.0
      %1285 = vmatprep.subr.mxu0 0.0
      %1286 = vmatpush2.msra.mxu0 0.0
      %1287 = vmatprep.subr.mxu0 0.0
      %1288 = vmatpush2.msra.mxu0 0.0
      %1289 = vmatprep.subr.mxu0 0.0
      %1290 = vmatpush2.msra.mxu0 0.0
      %1291 = vmatprep.subr.mxu0 0.0
      %1292 = vmatpush2.msra.mxu0 0.0
      %1293 = vmatprep.subr.mxu0 0.0
      %1294 = vmatpush2.msra.mxu0 0.0
      %1295 = vmatprep.subr.mxu0 0.0
      %1296 = vmatpush2.msra.mxu0 0.0
      %1297 = vmatprep.subr.mxu0 0.0
      %1298 = vmatpush2.msra.mxu0 0.0
      %1299 = vmatprep.mubr.f32.mxu0 0.0
      %1300 = vmatmul.mubr.f32.gmra.mxu0 %v1227
      %v1301 = vpop.f32.mrf.mxu0
      %v1302 = vadd.f32 0.0, %v1301
      %v1303 = vpop.f32.mrf.mxu0
      %v1304 = vadd.f32 0.0, %v1303
      %1305 = vdwg.mxu0
      %1306 = vmatprep.subr.mxu0 %v1162
      %1307 = vmatpush1.msra.mxu0 %v1161
      %1308 = vmatprep.subr.mxu0 %v1158
      %1309 = vmatpush1.msra.mxu0 %v1157
      %1310 = vmatprep.subr.mxu0 %v1154
      %1311 = vmatpush1.msra.mxu0 %v1153
      %1312 = vmatprep.subr.mxu0 %v1150
      %1313 = vmatpush1.msra.mxu0 %v1149
      %1314 = vmatprep.subr.mxu0 %v1146
      %1315 = vmatpush1.msra.mxu0 %v1145
      %1316 = vmatprep.subr.mxu0 %v1142
      %1317 = vmatpush1.msra.mxu0 %v1141
      %1318 = vmatprep.subr.mxu0 %v1138
      %1319 = vmatpush1.msra.mxu0 %v1137
      %1320 = vmatprep.subr.mxu0 %v1134
      %1321 = vmatpush1.msra.mxu0 %v1133
      %1322 = vmatprep.subr.mxu0 %v1130
      %1323 = vmatpush1.msra.mxu0 %v1129
      %1324 = vmatprep.subr.mxu0 %v1126
      %1325 = vmatpush1.msra.mxu0 %v1125
      %1326 = vmatprep.subr.mxu0 %v1122
      %1327 = vmatpush1.msra.mxu0 %v1121
      %1328 = vmatprep.subr.mxu0 %v1118
      %1329 = vmatpush1.msra.mxu0 %v1117
      %1330 = vmatprep.subr.mxu0 %v1114
      %1331 = vmatpush1.msra.mxu0 %v1113
      %1332 = vmatprep.subr.mxu0 %v1110
      %1333 = vmatpush1.msra.mxu0 %v1109
      %1334 = vmatprep.subr.mxu0 %v1106
      %1335 = vmatpush1.msra.mxu0 %v1105
      %1336 = vmatprep.subr.mxu0 %v1102
      %1337 = vmatpush1.msra.mxu0 %v1101
      %1338 = vmatprep.subr.mxu0 0.0
      %1339 = vmatpush2.msra.mxu0 0.0
      %1340 = vmatprep.subr.mxu0 0.0
      %1341 = vmatpush2.msra.mxu0 0.0
      %1342 = vmatprep.subr.mxu0 0.0
      %1343 = vmatpush2.msra.mxu0 0.0
      %1344 = vmatprep.subr.mxu0 0.0
      %1345 = vmatpush2.msra.mxu0 0.0
      %1346 = vmatprep.subr.mxu0 0.0
      %1347 = vmatpush2.msra.mxu0 0.0
      %1348 = vmatprep.subr.mxu0 0.0
      %1349 = vmatpush2.msra.mxu0 0.0
      %1350 = vmatprep.subr.mxu0 0.0
      %1351 = vmatpush2.msra.mxu0 0.0
      %1352 = vmatprep.subr.mxu0 0.0
      %1353 = vmatpush2.msra.mxu0 0.0
      %1354 = vmatprep.subr.mxu0 0.0
      %1355 = vmatpush2.msra.mxu0 0.0
      %1356 = vmatprep.subr.mxu0 0.0
      %1357 = vmatpush2.msra.mxu0 0.0
      %1358 = vmatprep.subr.mxu0 0.0
      %1359 = vmatpush2.msra.mxu0 0.0
      %1360 = vmatprep.subr.mxu0 0.0
      %1361 = vmatpush2.msra.mxu0 0.0
      %1362 = vmatprep.subr.mxu0 0.0
      %1363 = vmatpush2.msra.mxu0 0.0
      %1364 = vmatprep.subr.mxu0 0.0
      %1365 = vmatpush2.msra.mxu0 0.0
      %1366 = vmatprep.subr.mxu0 0.0
      %1367 = vmatpush2.msra.mxu0 0.0
      %1368 = vmatprep.subr.mxu0 0.0
      %1369 = vmatpush2.msra.mxu0 0.0
      %1370 = vmatprep.mubr.f32.mxu0 0.0
      %1371 = vmatmul.mubr.f32.gmra.mxu0 %v1227
      %v1372 = vpop.f32.mrf.mxu0
      %v1373 = vadd.f32 0.0, %v1372
      %v1374 = vpop.f32.mrf.mxu0
      %v1375 = vadd.f32 0.0, %v1374
      %1376 = vdwg.mxu0
      %v1377 = vadd.f32 %v1231, %v1302
      %v1378 = vadd.f32 %v1232, %v1304
      %v1379 = vadd.f32 %v1233, %v1373
      %v1380 = vadd.f32 %v1234, %v1375
      %v1381 = vxor.u32 %v1377, 2147483648
      %v1382 = vmul.f32 %v1381, 1.442695
      %v1383 = vpow.pop %v1382
      %v1384 = vadd.f32 %v1383, 1.0
      %v1385 = vrcp.pop %v1384
      %v1386 = vmul.f32 1.0, %v1385
      %v1387 = vxor.u32 %v1378, 2147483648
      %v1388 = vmul.f32 %v1387, 1.442695
      %v1389 = vpow.pop %v1388
      %v1390 = vadd.f32 %v1389, 1.0
      %v1391 = vrcp.pop %v1390
      %v1392 = vmul.f32 1.0, %v1391
      %v1393 = vtanh.pop %v1379
      %v1394 = vxor.u32 %v1380, 2147483648
      %v1395 = vmul.f32 %v1394, 1.442695
      %v1396 = vpow.pop %v1395
      %v1397 = vadd.f32 %v1396, 1.0
      %v1398 = vrcp.pop %v1397
      %v1399 = vmul.f32 1.0, %v1398
      %v1400 = vmul.f32 %v1392, %v1228
      %v1401 = vmul.f32 %v1386, %v1393
      %v1402 = vadd.f32 %v1400, %v1401
      %v1403 = vtanh.pop %v1402
      %v1404 = vmul.f32 %v1399, %v1403
      %s1405 = scalar_lea.vmem [#allocation3], 224
      %v1406 = vld [vmem:[%s1405] sm:$0xff]
      %v1407 = vld [vmem:[%s1405 + $0x8] sm:$0xff]
      %v1408 = vld [vmem:[%s1405 + $0x10] sm:$0xff]
      %v1409 = vld [vmem:[%s1405 + $0x18] sm:$0xff]
      %1410 = vmatprep.subr.mxu0 %v1224
      %1411 = vmatpush1.msra.mxu0 %v1223
      %1412 = vmatprep.subr.mxu0 %v1220
      %1413 = vmatpush1.msra.mxu0 %v1219
      %1414 = vmatprep.subr.mxu0 %v1216
      %1415 = vmatpush1.msra.mxu0 %v1215
      %1416 = vmatprep.subr.mxu0 %v1212
      %1417 = vmatpush1.msra.mxu0 %v1211
      %1418 = vmatprep.subr.mxu0 %v1208
      %1419 = vmatpush1.msra.mxu0 %v1207
      %1420 = vmatprep.subr.mxu0 %v1204
      %1421 = vmatpush1.msra.mxu0 %v1203
      %1422 = vmatprep.subr.mxu0 %v1200
      %1423 = vmatpush1.msra.mxu0 %v1199
      %1424 = vmatprep.subr.mxu0 %v1196
      %1425 = vmatpush1.msra.mxu0 %v1195
      %1426 = vmatprep.subr.mxu0 %v1192
      %1427 = vmatpush1.msra.mxu0 %v1191
      %1428 = vmatprep.subr.mxu0 %v1188
      %1429 = vmatpush1.msra.mxu0 %v1187
      %1430 = vmatprep.subr.mxu0 %v1184
      %1431 = vmatpush1.msra.mxu0 %v1183
      %1432 = vmatprep.subr.mxu0 %v1180
      %1433 = vmatpush1.msra.mxu0 %v1179
      %1434 = vmatprep.subr.mxu0 %v1176
      %1435 = vmatpush1.msra.mxu0 %v1175
      %1436 = vmatprep.subr.mxu0 %v1172
      %1437 = vmatpush1.msra.mxu0 %v1171
      %1438 = vmatprep.subr.mxu0 %v1168
      %1439 = vmatpush1.msra.mxu0 %v1167
      %1440 = vmatprep.subr.mxu0 %v1164
      %1441 = vmatpush1.msra.mxu0 %v1163
      %1442 = vmatprep.subr.mxu0 0.0
      %1443 = vmatpush2.msra.mxu0 0.0
      %1444 = vmatprep.subr.mxu0 0.0
      %1445 = vmatpush2.msra.mxu0 0.0
      %1446 = vmatprep.subr.mxu0 0.0
      %1447 = vmatpush2.msra.mxu0 0.0
      %1448 = vmatprep.subr.mxu0 0.0
      %1449 = vmatpush2.msra.mxu0 0.0
      %1450 = vmatprep.subr.mxu0 0.0
      %1451 = vmatpush2.msra.mxu0 0.0
      %1452 = vmatprep.subr.mxu0 0.0
      %1453 = vmatpush2.msra.mxu0 0.0
      %1454 = vmatprep.subr.mxu0 0.0
      %1455 = vmatpush2.msra.mxu0 0.0
      %1456 = vmatprep.subr.mxu0 0.0
      %1457 = vmatpush2.msra.mxu0 0.0
      %1458 = vmatprep.subr.mxu0 0.0
      %1459 = vmatpush2.msra.mxu0 0.0
      %1460 = vmatprep.subr.mxu0 0.0
      %1461 = vmatpush2.msra.mxu0 0.0
      %1462 = vmatprep.subr.mxu0 0.0
      %1463 = vmatpush2.msra.mxu0 0.0
      %1464 = vmatprep.subr.mxu0 0.0
      %1465 = vmatpush2.msra.mxu0 0.0
      %1466 = vmatprep.subr.mxu0 0.0
      %1467 = vmatpush2.msra.mxu0 0.0
      %1468 = vmatprep.subr.mxu0 0.0
      %1469 = vmatpush2.msra.mxu0 0.0
      %1470 = vmatprep.subr.mxu0 0.0
      %1471 = vmatpush2.msra.mxu0 0.0
      %1472 = vmatprep.subr.mxu0 0.0
      %1473 = vmatpush2.msra.mxu0 0.0
      %1474 = vmatprep.mubr.f32.mxu0 0.0
      %1475 = vmatmul.mubr.f32.gmra.mxu0 %v1229
      %v1476 = vpop.f32.mrf.mxu0
      %v1477 = vadd.f32 0.0, %v1476
      %v1478 = vpop.f32.mrf.mxu0
      %v1479 = vadd.f32 0.0, %v1478
      %1480 = vdwg.mxu0
      %1481 = vmatprep.subr.mxu0 %v1226
      %1482 = vmatpush1.msra.mxu0 %v1225
      %1483 = vmatprep.subr.mxu0 %v1222
      %1484 = vmatpush1.msra.mxu0 %v1221
      %1485 = vmatprep.subr.mxu0 %v1218
      %1486 = vmatpush1.msra.mxu0 %v1217
      %1487 = vmatprep.subr.mxu0 %v1214
      %1488 = vmatpush1.msra.mxu0 %v1213
      %1489 = vmatprep.subr.mxu0 %v1210
      %1490 = vmatpush1.msra.mxu0 %v1209
      %1491 = vmatprep.subr.mxu0 %v1206
      %1492 = vmatpush1.msra.mxu0 %v1205
      %1493 = vmatprep.subr.mxu0 %v1202
      %1494 = vmatpush1.msra.mxu0 %v1201
      %1495 = vmatprep.subr.mxu0 %v1198
      %1496 = vmatpush1.msra.mxu0 %v1197
      %1497 = vmatprep.subr.mxu0 %v1194
      %1498 = vmatpush1.msra.mxu0 %v1193
      %1499 = vmatprep.subr.mxu0 %v1190
      %1500 = vmatpush1.msra.mxu0 %v1189
      %1501 = vmatprep.subr.mxu0 %v1186
      %1502 = vmatpush1.msra.mxu0 %v1185
      %1503 = vmatprep.subr.mxu0 %v1182
      %1504 = vmatpush1.msra.mxu0 %v1181
      %1505 = vmatprep.subr.mxu0 %v1178
      %1506 = vmatpush1.msra.mxu0 %v1177
      %1507 = vmatprep.subr.mxu0 %v1174
      %1508 = vmatpush1.msra.mxu0 %v1173
      %1509 = vmatprep.subr.mxu0 %v1170
      %1510 = vmatpush1.msra.mxu0 %v1169
      %1511 = vmatprep.subr.mxu0 %v1166
      %1512 = vmatpush1.msra.mxu0 %v1165
      %1513 = vmatprep.subr.mxu0 0.0
      %1514 = vmatpush2.msra.mxu0 0.0
      %1515 = vmatprep.subr.mxu0 0.0
      %1516 = vmatpush2.msra.mxu0 0.0
      %1517 = vmatprep.subr.mxu0 0.0
      %1518 = vmatpush2.msra.mxu0 0.0
      %1519 = vmatprep.subr.mxu0 0.0
      %1520 = vmatpush2.msra.mxu0 0.0
      %1521 = vmatprep.subr.mxu0 0.0
      %1522 = vmatpush2.msra.mxu0 0.0
      %1523 = vmatprep.subr.mxu0 0.0
      %1524 = vmatpush2.msra.mxu0 0.0
      %1525 = vmatprep.subr.mxu0 0.0
      %1526 = vmatpush2.msra.mxu0 0.0
      %1527 = vmatprep.subr.mxu0 0.0
      %1528 = vmatpush2.msra.mxu0 0.0
      %1529 = vmatprep.subr.mxu0 0.0
      %1530 = vmatpush2.msra.mxu0 0.0
      %1531 = vmatprep.subr.mxu0 0.0
      %1532 = vmatpush2.msra.mxu0 0.0
      %1533 = vmatprep.subr.mxu0 0.0
      %1534 = vmatpush2.msra.mxu0 0.0
      %1535 = vmatprep.subr.mxu0 0.0
      %1536 = vmatpush2.msra.mxu0 0.0
      %1537 = vmatprep.subr.mxu0 0.0
      %1538 = vmatpush2.msra.mxu0 0.0
      %1539 = vmatprep.subr.mxu0 0.0
      %1540 = vmatpush2.msra.mxu0 0.0
      %1541 = vmatprep.subr.mxu0 0.0
      %1542 = vmatpush2.msra.mxu0 0.0
      %1543 = vmatprep.subr.mxu0 0.0
      %1544 = vmatpush2.msra.mxu0 0.0
      %1545 = vmatprep.mubr.f32.mxu0 0.0
      %1546 = vmatmul.mubr.f32.gmra.mxu0 %v1229
      %v1547 = vpop.f32.mrf.mxu0
      %v1548 = vadd.f32 0.0, %v1547
      %v1549 = vpop.f32.mrf.mxu0
      %v1550 = vadd.f32 0.0, %v1549
      %1551 = vdwg.mxu0
      %v1552 = vadd.f32 %v1406, %v1477
      %v1553 = vadd.f32 %v1407, %v1479
      %v1554 = vadd.f32 %v1408, %v1548
      %v1555 = vadd.f32 %v1409, %v1550
      %v1556 = vxor.u32 %v1552, 2147483648
      %v1557 = vmul.f32 %v1556, 1.442695
      %v1558 = vpow.pop %v1557
      %v1559 = vadd.f32 %v1558, 1.0
      %v1560 = vrcp.pop %v1559
      %v1561 = vmul.f32 1.0, %v1560
      %v1562 = vxor.u32 %v1553, 2147483648
      %v1563 = vmul.f32 %v1562, 1.442695
      %v1564 = vpow.pop %v1563
      %v1565 = vadd.f32 %v1564, 1.0
      %v1566 = vrcp.pop %v1565
      %v1567 = vmul.f32 1.0, %v1566
      %v1568 = vtanh.pop %v1554
      %v1569 = vxor.u32 %v1555, 2147483648
      %v1570 = vmul.f32 %v1569, 1.442695
      %v1571 = vpow.pop %v1570
      %v1572 = vadd.f32 %v1571, 1.0
      %v1573 = vrcp.pop %v1572
      %v1574 = vmul.f32 1.0, %v1573
      %v1575 = vmul.f32 %v1567, %v1230
      %v1576 = vmul.f32 %v1561, %v1568
      %v1577 = vadd.f32 %v1575, %v1576
      %v1578 = vtanh.pop %v1577
      %v1579 = vmul.f32 %v1574, %v1578
      %s1580 = ssub.s32 1, %s26
      %s1581 = smul.u32 %s1580, 8
      %s1582 = sadd.s32 %s1581, 7
      %p1583 = scmp.lt.s32.totalorder %s1582, 12
      %s1584 = scalar_select %p1583, 1, 0
      %v1585 = vstv %s1584
      %vm1586 = vcmp.eq.s32.totalorder %v1585, 1
      %v1587 = vsel %vm1586, %v1579, %v1229
      %v1588 = vsel %vm1586, %v1577, %v1230
      %1589 = vst [vmem:[%s421] sm:$0xff] %v1404
      %s1590 = scalar_lea.vmem %s431, 56
      %1591 = vst [vmem:[%s1590] sm:$0xff] %v1587
      %s1592 = scalar_lea.vmem [#allocation2], 32
      %v1593 = vld [vmem:[%s1592] sm:$0xff]
      %v1594 = vld [vmem:[%s1592 + $0x8] sm:$0xff]
      %v1595 = vld [vmem:[%s1592 + $0x10] sm:$0xff]
      %v1596 = vld [vmem:[%s1592 + $0x18] sm:$0xff]
      %1597 = vmatprep.subr.mxu0 %v1160
      %1598 = vmatpush1.msra.mxu0 %v1159
      %1599 = vmatprep.subr.mxu0 %v1156
      %1600 = vmatpush1.msra.mxu0 %v1155
      %1601 = vmatprep.subr.mxu0 %v1152
      %1602 = vmatpush1.msra.mxu0 %v1151
      %1603 = vmatprep.subr.mxu0 %v1148
      %1604 = vmatpush1.msra.mxu0 %v1147
      %1605 = vmatprep.subr.mxu0 %v1144
      %1606 = vmatpush1.msra.mxu0 %v1143
      %1607 = vmatprep.subr.mxu0 %v1140
      %1608 = vmatpush1.msra.mxu0 %v1139
      %1609 = vmatprep.subr.mxu0 %v1136
      %1610 = vmatpush1.msra.mxu0 %v1135
      %1611 = vmatprep.subr.mxu0 %v1132
      %1612 = vmatpush1.msra.mxu0 %v1131
      %1613 = vmatprep.subr.mxu0 %v1128
      %1614 = vmatpush1.msra.mxu0 %v1127
      %1615 = vmatprep.subr.mxu0 %v1124
      %1616 = vmatpush1.msra.mxu0 %v1123
      %1617 = vmatprep.subr.mxu0 %v1120
      %1618 = vmatpush1.msra.mxu0 %v1119
      %1619 = vmatprep.subr.mxu0 %v1116
      %1620 = vmatpush1.msra.mxu0 %v1115
      %1621 = vmatprep.subr.mxu0 %v1112
      %1622 = vmatpush1.msra.mxu0 %v1111
      %1623 = vmatprep.subr.mxu0 %v1108
      %1624 = vmatpush1.msra.mxu0 %v1107
      %1625 = vmatprep.subr.mxu0 %v1104
      %1626 = vmatpush1.msra.mxu0 %v1103
      %1627 = vmatprep.subr.mxu0 %v1100
      %1628 = vmatpush1.msra.mxu0 %v1099
      %1629 = vmatprep.subr.mxu0 0.0
      %1630 = vmatpush2.msra.mxu0 0.0
      %1631 = vmatprep.subr.mxu0 0.0
      %1632 = vmatpush2.msra.mxu0 0.0
      %1633 = vmatprep.subr.mxu0 0.0
      %1634 = vmatpush2.msra.mxu0 0.0
      %1635 = vmatprep.subr.mxu0 0.0
      %1636 = vmatpush2.msra.mxu0 0.0
      %1637 = vmatprep.subr.mxu0 0.0
      %1638 = vmatpush2.msra.mxu0 0.0
      %1639 = vmatprep.subr.mxu0 0.0
      %1640 = vmatpush2.msra.mxu0 0.0
      %1641 = vmatprep.subr.mxu0 0.0
      %1642 = vmatpush2.msra.mxu0 0.0
      %1643 = vmatprep.subr.mxu0 0.0
      %1644 = vmatpush2.msra.mxu0 0.0
      %1645 = vmatprep.subr.mxu0 0.0
      %1646 = vmatpush2.msra.mxu0 0.0
      %1647 = vmatprep.subr.mxu0 0.0
      %1648 = vmatpush2.msra.mxu0 0.0
      %1649 = vmatprep.subr.mxu0 0.0
      %1650 = vmatpush2.msra.mxu0 0.0
      %1651 = vmatprep.subr.mxu0 0.0
      %1652 = vmatpush2.msra.mxu0 0.0
      %1653 = vmatprep.subr.mxu0 0.0
      %1654 = vmatpush2.msra.mxu0 0.0
      %1655 = vmatprep.subr.mxu0 0.0
      %1656 = vmatpush2.msra.mxu0 0.0
      %1657 = vmatprep.subr.mxu0 0.0
      %1658 = vmatpush2.msra.mxu0 0.0
      %1659 = vmatprep.subr.mxu0 0.0
      %1660 = vmatpush2.msra.mxu0 0.0
      %1661 = vmatprep.mubr.f32.mxu0 0.0
      %1662 = vmatmul.mubr.f32.gmra.mxu0 %v1404
      %v1663 = vpop.f32.mrf.mxu0
      %v1664 = vadd.f32 0.0, %v1663
      %v1665 = vpop.f32.mrf.mxu0
      %v1666 = vadd.f32 0.0, %v1665
      %1667 = vdwg.mxu0
      %1668 = vmatprep.subr.mxu0 %v1162
      %1669 = vmatpush1.msra.mxu0 %v1161
      %1670 = vmatprep.subr.mxu0 %v1158
      %1671 = vmatpush1.msra.mxu0 %v1157
      %1672 = vmatprep.subr.mxu0 %v1154
      %1673 = vmatpush1.msra.mxu0 %v1153
      %1674 = vmatprep.subr.mxu0 %v1150
      %1675 = vmatpush1.msra.mxu0 %v1149
      %1676 = vmatprep.subr.mxu0 %v1146
      %1677 = vmatpush1.msra.mxu0 %v1145
      %1678 = vmatprep.subr.mxu0 %v1142
      %1679 = vmatpush1.msra.mxu0 %v1141
      %1680 = vmatprep.subr.mxu0 %v1138
      %1681 = vmatpush1.msra.mxu0 %v1137
      %1682 = vmatprep.subr.mxu0 %v1134
      %1683 = vmatpush1.msra.mxu0 %v1133
      %1684 = vmatprep.subr.mxu0 %v1130
      %1685 = vmatpush1.msra.mxu0 %v1129
      %1686 = vmatprep.subr.mxu0 %v1126
      %1687 = vmatpush1.msra.mxu0 %v1125
      %1688 = vmatprep.subr.mxu0 %v1122
      %1689 = vmatpush1.msra.mxu0 %v1121
      %1690 = vmatprep.subr.mxu0 %v1118
      %1691 = vmatpush1.msra.mxu0 %v1117
      %1692 = vmatprep.subr.mxu0 %v1114
      %1693 = vmatpush1.msra.mxu0 %v1113
      %1694 = vmatprep.subr.mxu0 %v1110
      %1695 = vmatpush1.msra.mxu0 %v1109
      %1696 = vmatprep.subr.mxu0 %v1106
      %1697 = vmatpush1.msra.mxu0 %v1105
      %1698 = vmatprep.subr.mxu0 %v1102
      %1699 = vmatpush1.msra.mxu0 %v1101
      %1700 = vmatprep.subr.mxu0 0.0
      %1701 = vmatpush2.msra.mxu0 0.0
      %1702 = vmatprep.subr.mxu0 0.0
      %1703 = vmatpush2.msra.mxu0 0.0
      %1704 = vmatprep.subr.mxu0 0.0
      %1705 = vmatpush2.msra.mxu0 0.0
      %1706 = vmatprep.subr.mxu0 0.0
      %1707 = vmatpush2.msra.mxu0 0.0
      %1708 = vmatprep.subr.mxu0 0.0
      %1709 = vmatpush2.msra.mxu0 0.0
      %1710 = vmatprep.subr.mxu0 0.0
      %1711 = vmatpush2.msra.mxu0 0.0
      %1712 = vmatprep.subr.mxu0 0.0
      %1713 = vmatpush2.msra.mxu0 0.0
      %1714 = vmatprep.subr.mxu0 0.0
      %1715 = vmatpush2.msra.mxu0 0.0
      %1716 = vmatprep.subr.mxu0 0.0
      %1717 = vmatpush2.msra.mxu0 0.0
      %1718 = vmatprep.subr.mxu0 0.0
      %1719 = vmatpush2.msra.mxu0 0.0
      %1720 = vmatprep.subr.mxu0 0.0
      %1721 = vmatpush2.msra.mxu0 0.0
      %1722 = vmatprep.subr.mxu0 0.0
      %1723 = vmatpush2.msra.mxu0 0.0
      %1724 = vmatprep.subr.mxu0 0.0
      %1725 = vmatpush2.msra.mxu0 0.0
      %1726 = vmatprep.subr.mxu0 0.0
      %1727 = vmatpush2.msra.mxu0 0.0
      %1728 = vmatprep.subr.mxu0 0.0
      %1729 = vmatpush2.msra.mxu0 0.0
      %1730 = vmatprep.subr.mxu0 0.0
      %1731 = vmatpush2.msra.mxu0 0.0
      %1732 = vmatprep.mubr.f32.mxu0 0.0
      %1733 = vmatmul.mubr.f32.gmra.mxu0 %v1404
      %v1734 = vpop.f32.mrf.mxu0
      %v1735 = vadd.f32 0.0, %v1734
      %v1736 = vpop.f32.mrf.mxu0
      %v1737 = vadd.f32 0.0, %v1736
      %1738 = vdwg.mxu0
      %v1739 = vadd.f32 %v1593, %v1664
      %v1740 = vadd.f32 %v1594, %v1666
      %v1741 = vadd.f32 %v1595, %v1735
      %v1742 = vadd.f32 %v1596, %v1737
      %v1743 = vxor.u32 %v1739, 2147483648
      %v1744 = vmul.f32 %v1743, 1.442695
      %v1745 = vpow.pop %v1744
      %v1746 = vadd.f32 %v1745, 1.0
      %v1747 = vrcp.pop %v1746
      %v1748 = vmul.f32 1.0, %v1747
      %v1749 = vxor.u32 %v1740, 2147483648
      %v1750 = vmul.f32 %v1749, 1.442695
      %v1751 = vpow.pop %v1750
      %v1752 = vadd.f32 %v1751, 1.0
      %v1753 = vrcp.pop %v1752
      %v1754 = vmul.f32 1.0, %v1753
      %v1755 = vtanh.pop %v1741
      %v1756 = vxor.u32 %v1742, 2147483648
      %v1757 = vmul.f32 %v1756, 1.442695
      %v1758 = vpow.pop %v1757
      %v1759 = vadd.f32 %v1758, 1.0
      %v1760 = vrcp.pop %v1759
      %v1761 = vmul.f32 1.0, %v1760
      %v1762 = vmul.f32 %v1754, %v1402
      %v1763 = vmul.f32 %v1748, %v1755
      %v1764 = vadd.f32 %v1762, %v1763
      %v1765 = vtanh.pop %v1764
      %v1766 = vmul.f32 %v1761, %v1765
      %s1767 = scalar_lea.vmem [#allocation3], 192
      %v1768 = vld [vmem:[%s1767] sm:$0xff]
      %v1769 = vld [vmem:[%s1767 + $0x8] sm:$0xff]
      %v1770 = vld [vmem:[%s1767 + $0x10] sm:$0xff]
      %v1771 = vld [vmem:[%s1767 + $0x18] sm:$0xff]
      %1772 = vmatprep.subr.mxu0 %v1224
      %1773 = vmatpush1.msra.mxu0 %v1223
      %1774 = vmatprep.subr.mxu0 %v1220
      %1775 = vmatpush1.msra.mxu0 %v1219
      %1776 = vmatprep.subr.mxu0 %v1216
      %1777 = vmatpush1.msra.mxu0 %v1215
      %1778 = vmatprep.subr.mxu0 %v1212
      %1779 = vmatpush1.msra.mxu0 %v1211
      %1780 = vmatprep.subr.mxu0 %v1208
      %1781 = vmatpush1.msra.mxu0 %v1207
      %1782 = vmatprep.subr.mxu0 %v1204
      %1783 = vmatpush1.msra.mxu0 %v1203
      %1784 = vmatprep.subr.mxu0 %v1200
      %1785 = vmatpush1.msra.mxu0 %v1199
      %1786 = vmatprep.subr.mxu0 %v1196
      %1787 = vmatpush1.msra.mxu0 %v1195
      %1788 = vmatprep.subr.mxu0 %v1192
      %1789 = vmatpush1.msra.mxu0 %v1191
      %1790 = vmatprep.subr.mxu0 %v1188
      %1791 = vmatpush1.msra.mxu0 %v1187
      %1792 = vmatprep.subr.mxu0 %v1184
      %1793 = vmatpush1.msra.mxu0 %v1183
      %1794 = vmatprep.subr.mxu0 %v1180
      %1795 = vmatpush1.msra.mxu0 %v1179
      %1796 = vmatprep.subr.mxu0 %v1176
      %1797 = vmatpush1.msra.mxu0 %v1175
      %1798 = vmatprep.subr.mxu0 %v1172
      %1799 = vmatpush1.msra.mxu0 %v1171
      %1800 = vmatprep.subr.mxu0 %v1168
      %1801 = vmatpush1.msra.mxu0 %v1167
      %1802 = vmatprep.subr.mxu0 %v1164
      %1803 = vmatpush1.msra.mxu0 %v1163
      %1804 = vmatprep.subr.mxu0 0.0
      %1805 = vmatpush2.msra.mxu0 0.0
      %1806 = vmatprep.subr.mxu0 0.0
      %1807 = vmatpush2.msra.mxu0 0.0
      %1808 = vmatprep.subr.mxu0 0.0
      %1809 = vmatpush2.msra.mxu0 0.0
      %1810 = vmatprep.subr.mxu0 0.0
      %1811 = vmatpush2.msra.mxu0 0.0
      %1812 = vmatprep.subr.mxu0 0.0
      %1813 = vmatpush2.msra.mxu0 0.0
      %1814 = vmatprep.subr.mxu0 0.0
      %1815 = vmatpush2.msra.mxu0 0.0
      %1816 = vmatprep.subr.mxu0 0.0
      %1817 = vmatpush2.msra.mxu0 0.0
      %1818 = vmatprep.subr.mxu0 0.0
      %1819 = vmatpush2.msra.mxu0 0.0
      %1820 = vmatprep.subr.mxu0 0.0
      %1821 = vmatpush2.msra.mxu0 0.0
      %1822 = vmatprep.subr.mxu0 0.0
      %1823 = vmatpush2.msra.mxu0 0.0
      %1824 = vmatprep.subr.mxu0 0.0
      %1825 = vmatpush2.msra.mxu0 0.0
      %1826 = vmatprep.subr.mxu0 0.0
      %1827 = vmatpush2.msra.mxu0 0.0
      %1828 = vmatprep.subr.mxu0 0.0
      %1829 = vmatpush2.msra.mxu0 0.0
      %1830 = vmatprep.subr.mxu0 0.0
      %1831 = vmatpush2.msra.mxu0 0.0
      %1832 = vmatprep.subr.mxu0 0.0
      %1833 = vmatpush2.msra.mxu0 0.0
      %1834 = vmatprep.subr.mxu0 0.0
      %1835 = vmatpush2.msra.mxu0 0.0
      %1836 = vmatprep.mubr.f32.mxu0 0.0
      %1837 = vmatmul.mubr.f32.gmra.mxu0 %v1587
      %v1838 = vpop.f32.mrf.mxu0
      %v1839 = vadd.f32 0.0, %v1838
      %v1840 = vpop.f32.mrf.mxu0
      %v1841 = vadd.f32 0.0, %v1840
      %1842 = vdwg.mxu0
      %1843 = vmatprep.subr.mxu0 %v1226
      %1844 = vmatpush1.msra.mxu0 %v1225
      %1845 = vmatprep.subr.mxu0 %v1222
      %1846 = vmatpush1.msra.mxu0 %v1221
      %1847 = vmatprep.subr.mxu0 %v1218
      %1848 = vmatpush1.msra.mxu0 %v1217
      %1849 = vmatprep.subr.mxu0 %v1214
      %1850 = vmatpush1.msra.mxu0 %v1213
      %1851 = vmatprep.subr.mxu0 %v1210
      %1852 = vmatpush1.msra.mxu0 %v1209
      %1853 = vmatprep.subr.mxu0 %v1206
      %1854 = vmatpush1.msra.mxu0 %v1205
      %1855 = vmatprep.subr.mxu0 %v1202
      %1856 = vmatpush1.msra.mxu0 %v1201
      %1857 = vmatprep.subr.mxu0 %v1198
      %1858 = vmatpush1.msra.mxu0 %v1197
      %1859 = vmatprep.subr.mxu0 %v1194
      %1860 = vmatpush1.msra.mxu0 %v1193
      %1861 = vmatprep.subr.mxu0 %v1190
      %1862 = vmatpush1.msra.mxu0 %v1189
      %1863 = vmatprep.subr.mxu0 %v1186
      %1864 = vmatpush1.msra.mxu0 %v1185
      %1865 = vmatprep.subr.mxu0 %v1182
      %1866 = vmatpush1.msra.mxu0 %v1181
      %1867 = vmatprep.subr.mxu0 %v1178
      %1868 = vmatpush1.msra.mxu0 %v1177
      %1869 = vmatprep.subr.mxu0 %v1174
      %1870 = vmatpush1.msra.mxu0 %v1173
      %1871 = vmatprep.subr.mxu0 %v1170
      %1872 = vmatpush1.msra.mxu0 %v1169
      %1873 = vmatprep.subr.mxu0 %v1166
      %1874 = vmatpush1.msra.mxu0 %v1165
      %1875 = vmatprep.subr.mxu0 0.0
      %1876 = vmatpush2.msra.mxu0 0.0
      %1877 = vmatprep.subr.mxu0 0.0
      %1878 = vmatpush2.msra.mxu0 0.0
      %1879 = vmatprep.subr.mxu0 0.0
      %1880 = vmatpush2.msra.mxu0 0.0
      %1881 = vmatprep.subr.mxu0 0.0
      %1882 = vmatpush2.msra.mxu0 0.0
      %1883 = vmatprep.subr.mxu0 0.0
      %1884 = vmatpush2.msra.mxu0 0.0
      %1885 = vmatprep.subr.mxu0 0.0
      %1886 = vmatpush2.msra.mxu0 0.0
      %1887 = vmatprep.subr.mxu0 0.0
      %1888 = vmatpush2.msra.mxu0 0.0
      %1889 = vmatprep.subr.mxu0 0.0
      %1890 = vmatpush2.msra.mxu0 0.0
      %1891 = vmatprep.subr.mxu0 0.0
      %1892 = vmatpush2.msra.mxu0 0.0
      %1893 = vmatprep.subr.mxu0 0.0
      %1894 = vmatpush2.msra.mxu0 0.0
      %1895 = vmatprep.subr.mxu0 0.0
      %1896 = vmatpush2.msra.mxu0 0.0
      %1897 = vmatprep.subr.mxu0 0.0
      %1898 = vmatpush2.msra.mxu0 0.0
      %1899 = vmatprep.subr.mxu0 0.0
      %1900 = vmatpush2.msra.mxu0 0.0
      %1901 = vmatprep.subr.mxu0 0.0
      %1902 = vmatpush2.msra.mxu0 0.0
      %1903 = vmatprep.subr.mxu0 0.0
      %1904 = vmatpush2.msra.mxu0 0.0
      %1905 = vmatprep.subr.mxu0 0.0
      %1906 = vmatpush2.msra.mxu0 0.0
      %1907 = vmatprep.mubr.f32.mxu0 0.0
      %1908 = vmatmul.mubr.f32.gmra.mxu0 %v1587
      %v1909 = vpop.f32.mrf.mxu0
      %v1910 = vadd.f32 0.0, %v1909
      %v1911 = vpop.f32.mrf.mxu0
      %v1912 = vadd.f32 0.0, %v1911
      %1913 = vdwg.mxu0
      %v1914 = vadd.f32 %v1768, %v1839
      %v1915 = vadd.f32 %v1769, %v1841
      %v1916 = vadd.f32 %v1770, %v1910
      %v1917 = vadd.f32 %v1771, %v1912
      %v1918 = vxor.u32 %v1914, 2147483648
      %v1919 = vmul.f32 %v1918, 1.442695
      %v1920 = vpow.pop %v1919
      %v1921 = vadd.f32 %v1920, 1.0
      %v1922 = vrcp.pop %v1921
      %v1923 = vmul.f32 1.0, %v1922
      %v1924 = vxor.u32 %v1915, 2147483648
      %v1925 = vmul.f32 %v1924, 1.442695
      %v1926 = vpow.pop %v1925
      %v1927 = vadd.f32 %v1926, 1.0
      %v1928 = vrcp.pop %v1927
      %v1929 = vmul.f32 1.0, %v1928
      %v1930 = vtanh.pop %v1916
      %v1931 = vxor.u32 %v1917, 2147483648
      %v1932 = vmul.f32 %v1931, 1.442695
      %v1933 = vpow.pop %v1932
      %v1934 = vadd.f32 %v1933, 1.0
      %v1935 = vrcp.pop %v1934
      %v1936 = vmul.f32 1.0, %v1935
      %v1937 = vmul.f32 %v1929, %v1588
      %v1938 = vmul.f32 %v1923, %v1930
      %v1939 = vadd.f32 %v1937, %v1938
      %v1940 = vtanh.pop %v1939
      %v1941 = vmul.f32 %v1936, %v1940
      %s1942 = sadd.s32 %s1581, 6
      %p1943 = scmp.lt.s32.totalorder %s1942, 12
      %s1944 = scalar_select %p1943, 1, 0
      %v1945 = vstv %s1944
      %vm1946 = vcmp.eq.s32.totalorder %v1945, 1
      %v1947 = vsel %vm1946, %v1941, %v1587
      %v1948 = vsel %vm1946, %v1939, %v1588
      %s1949 = scalar_lea.vmem %s421, 8
      %1950 = vst [vmem:[%s1949] sm:$0xff] %v1766
      %s1951 = scalar_lea.vmem %s431, 48
      %1952 = vst [vmem:[%s1951] sm:$0xff] %v1947
      %s1953 = scalar_lea.vmem [#allocation2], 64
      %v1954 = vld [vmem:[%s1953] sm:$0xff]
      %v1955 = vld [vmem:[%s1953 + $0x8] sm:$0xff]
      %v1956 = vld [vmem:[%s1953 + $0x10] sm:$0xff]
      %v1957 = vld [vmem:[%s1953 + $0x18] sm:$0xff]
      %1958 = vmatprep.subr.mxu0 %v1160
      %1959 = vmatpush1.msra.mxu0 %v1159
      %1960 = vmatprep.subr.mxu0 %v1156
      %1961 = vmatpush1.msra.mxu0 %v1155
      %1962 = vmatprep.subr.mxu0 %v1152
      %1963 = vmatpush1.msra.mxu0 %v1151
      %1964 = vmatprep.subr.mxu0 %v1148
      %1965 = vmatpush1.msra.mxu0 %v1147
      %1966 = vmatprep.subr.mxu0 %v1144
      %1967 = vmatpush1.msra.mxu0 %v1143
      %1968 = vmatprep.subr.mxu0 %v1140
      %1969 = vmatpush1.msra.mxu0 %v1139
      %1970 = vmatprep.subr.mxu0 %v1136
      %1971 = vmatpush1.msra.mxu0 %v1135
      %1972 = vmatprep.subr.mxu0 %v1132
      %1973 = vmatpush1.msra.mxu0 %v1131
      %1974 = vmatprep.subr.mxu0 %v1128
      %1975 = vmatpush1.msra.mxu0 %v1127
      %1976 = vmatprep.subr.mxu0 %v1124
      %1977 = vmatpush1.msra.mxu0 %v1123
      %1978 = vmatprep.subr.mxu0 %v1120
      %1979 = vmatpush1.msra.mxu0 %v1119
      %1980 = vmatprep.subr.mxu0 %v1116
      %1981 = vmatpush1.msra.mxu0 %v1115
      %1982 = vmatprep.subr.mxu0 %v1112
      %1983 = vmatpush1.msra.mxu0 %v1111
      %1984 = vmatprep.subr.mxu0 %v1108
      %1985 = vmatpush1.msra.mxu0 %v1107
      %1986 = vmatprep.subr.mxu0 %v1104
      %1987 = vmatpush1.msra.mxu0 %v1103
      %1988 = vmatprep.subr.mxu0 %v1100
      %1989 = vmatpush1.msra.mxu0 %v1099
      %1990 = vmatprep.subr.mxu0 0.0
      %1991 = vmatpush2.msra.mxu0 0.0
      %1992 = vmatprep.subr.mxu0 0.0
      %1993 = vmatpush2.msra.mxu0 0.0
      %1994 = vmatprep.subr.mxu0 0.0
      %1995 = vmatpush2.msra.mxu0 0.0
      %1996 = vmatprep.subr.mxu0 0.0
      %1997 = vmatpush2.msra.mxu0 0.0
      %1998 = vmatprep.subr.mxu0 0.0
      %1999 = vmatpush2.msra.mxu0 0.0
      %2000 = vmatprep.subr.mxu0 0.0
      %2001 = vmatpush2.msra.mxu0 0.0
      %2002 = vmatprep.subr.mxu0 0.0
      %2003 = vmatpush2.msra.mxu0 0.0
      %2004 = vmatprep.subr.mxu0 0.0
      %2005 = vmatpush2.msra.mxu0 0.0
      %2006 = vmatprep.subr.mxu0 0.0
      %2007 = vmatpush2.msra.mxu0 0.0
      %2008 = vmatprep.subr.mxu0 0.0
      %2009 = vmatpush2.msra.mxu0 0.0
      %2010 = vmatprep.subr.mxu0 0.0
      %2011 = vmatpush2.msra.mxu0 0.0
      %2012 = vmatprep.subr.mxu0 0.0
      %2013 = vmatpush2.msra.mxu0 0.0
      %2014 = vmatprep.subr.mxu0 0.0
      %2015 = vmatpush2.msra.mxu0 0.0
      %2016 = vmatprep.subr.mxu0 0.0
      %2017 = vmatpush2.msra.mxu0 0.0
      %2018 = vmatprep.subr.mxu0 0.0
      %2019 = vmatpush2.msra.mxu0 0.0
      %2020 = vmatprep.subr.mxu0 0.0
      %2021 = vmatpush2.msra.mxu0 0.0
      %2022 = vmatprep.mubr.f32.mxu0 0.0
      %2023 = vmatmul.mubr.f32.gmra.mxu0 %v1766
      %v2024 = vpop.f32.mrf.mxu0
      %v2025 = vadd.f32 0.0, %v2024
      %v2026 = vpop.f32.mrf.mxu0
      %v2027 = vadd.f32 0.0, %v2026
      %2028 = vdwg.mxu0
      %2029 = vmatprep.subr.mxu0 %v1162
      %2030 = vmatpush1.msra.mxu0 %v1161
      %2031 = vmatprep.subr.mxu0 %v1158
      %2032 = vmatpush1.msra.mxu0 %v1157
      %2033 = vmatprep.subr.mxu0 %v1154
      %2034 = vmatpush1.msra.mxu0 %v1153
      %2035 = vmatprep.subr.mxu0 %v1150
      %2036 = vmatpush1.msra.mxu0 %v1149
      %2037 = vmatprep.subr.mxu0 %v1146
      %2038 = vmatpush1.msra.mxu0 %v1145
      %2039 = vmatprep.subr.mxu0 %v1142
      %2040 = vmatpush1.msra.mxu0 %v1141
      %2041 = vmatprep.subr.mxu0 %v1138
      %2042 = vmatpush1.msra.mxu0 %v1137
      %2043 = vmatprep.subr.mxu0 %v1134
      %2044 = vmatpush1.msra.mxu0 %v1133
      %2045 = vmatprep.subr.mxu0 %v1130
      %2046 = vmatpush1.msra.mxu0 %v1129
      %2047 = vmatprep.subr.mxu0 %v1126
      %2048 = vmatpush1.msra.mxu0 %v1125
      %2049 = vmatprep.subr.mxu0 %v1122
      %2050 = vmatpush1.msra.mxu0 %v1121
      %2051 = vmatprep.subr.mxu0 %v1118
      %2052 = vmatpush1.msra.mxu0 %v1117
      %2053 = vmatprep.subr.mxu0 %v1114
      %2054 = vmatpush1.msra.mxu0 %v1113
      %2055 = vmatprep.subr.mxu0 %v1110
      %2056 = vmatpush1.msra.mxu0 %v1109
      %2057 = vmatprep.subr.mxu0 %v1106
      %2058 = vmatpush1.msra.mxu0 %v1105
      %2059 = vmatprep.subr.mxu0 %v1102
      %2060 = vmatpush1.msra.mxu0 %v1101
      %2061 = vmatprep.subr.mxu0 0.0
      %2062 = vmatpush2.msra.mxu0 0.0
      %2063 = vmatprep.subr.mxu0 0.0
      %2064 = vmatpush2.msra.mxu0 0.0
      %2065 = vmatprep.subr.mxu0 0.0
      %2066 = vmatpush2.msra.mxu0 0.0
      %2067 = vmatprep.subr.mxu0 0.0
      %2068 = vmatpush2.msra.mxu0 0.0
      %2069 = vmatprep.subr.mxu0 0.0
      %2070 = vmatpush2.msra.mxu0 0.0
      %2071 = vmatprep.subr.mxu0 0.0
      %2072 = vmatpush2.msra.mxu0 0.0
      %2073 = vmatprep.subr.mxu0 0.0
      %2074 = vmatpush2.msra.mxu0 0.0
      %2075 = vmatprep.subr.mxu0 0.0
      %2076 = vmatpush2.msra.mxu0 0.0
      %2077 = vmatprep.subr.mxu0 0.0
      %2078 = vmatpush2.msra.mxu0 0.0
      %2079 = vmatprep.subr.mxu0 0.0
      %2080 = vmatpush2.msra.mxu0 0.0
      %2081 = vmatprep.subr.mxu0 0.0
      %2082 = vmatpush2.msra.mxu0 0.0
      %2083 = vmatprep.subr.mxu0 0.0
      %2084 = vmatpush2.msra.mxu0 0.0
      %2085 = vmatprep.subr.mxu0 0.0
      %2086 = vmatpush2.msra.mxu0 0.0
      %2087 = vmatprep.subr.mxu0 0.0
      %2088 = vmatpush2.msra.mxu0 0.0
      %2089 = vmatprep.subr.mxu0 0.0
      %2090 = vmatpush2.msra.mxu0 0.0
      %2091 = vmatprep.subr.mxu0 0.0
      %2092 = vmatpush2.msra.mxu0 0.0
      %2093 = vmatprep.mubr.f32.mxu0 0.0
      %2094 = vmatmul.mubr.f32.gmra.mxu0 %v1766
      %v2095 = vpop.f32.mrf.mxu0
      %v2096 = vadd.f32 0.0, %v2095
      %v2097 = vpop.f32.mrf.mxu0
      %v2098 = vadd.f32 0.0, %v2097
      %2099 = vdwg.mxu0
      %v2100 = vadd.f32 %v1954, %v2025
      %v2101 = vadd.f32 %v1955, %v2027
      %v2102 = vadd.f32 %v1956, %v2096
      %v2103 = vadd.f32 %v1957, %v2098
      %v2104 = vxor.u32 %v2100, 2147483648
      %v2105 = vmul.f32 %v2104, 1.442695
      %v2106 = vpow.pop %v2105
      %v2107 = vadd.f32 %v2106, 1.0
      %v2108 = vrcp.pop %v2107
      %v2109 = vmul.f32 1.0, %v2108
      %v2110 = vxor.u32 %v2101, 2147483648
      %v2111 = vmul.f32 %v2110, 1.442695
      %v2112 = vpow.pop %v2111
      %v2113 = vadd.f32 %v2112, 1.0
      %v2114 = vrcp.pop %v2113
      %v2115 = vmul.f32 1.0, %v2114
      %v2116 = vtanh.pop %v2102
      %v2117 = vxor.u32 %v2103, 2147483648
      %v2118 = vmul.f32 %v2117, 1.442695
      %v2119 = vpow.pop %v2118
      %v2120 = vadd.f32 %v2119, 1.0
      %v2121 = vrcp.pop %v2120
      %v2122 = vmul.f32 1.0, %v2121
      %v2123 = vmul.f32 %v2115, %v1764
      %v2124 = vmul.f32 %v2109, %v2116
      %v2125 = vadd.f32 %v2123, %v2124
      %v2126 = vtanh.pop %v2125
      %v2127 = vmul.f32 %v2122, %v2126
      %s2128 = scalar_lea.vmem [#allocation3], 160
      %v2129 = vld [vmem:[%s2128] sm:$0xff]
      %v2130 = vld [vmem:[%s2128 + $0x8] sm:$0xff]
      %v2131 = vld [vmem:[%s2128 + $0x10] sm:$0xff]
      %v2132 = vld [vmem:[%s2128 + $0x18] sm:$0xff]
      %2133 = vmatprep.subr.mxu0 %v1224
      %2134 = vmatpush1.msra.mxu0 %v1223
      %2135 = vmatprep.subr.mxu0 %v1220
      %2136 = vmatpush1.msra.mxu0 %v1219
      %2137 = vmatprep.subr.mxu0 %v1216
      %2138 = vmatpush1.msra.mxu0 %v1215
      %2139 = vmatprep.subr.mxu0 %v1212
      %2140 = vmatpush1.msra.mxu0 %v1211
      %2141 = vmatprep.subr.mxu0 %v1208
      %2142 = vmatpush1.msra.mxu0 %v1207
      %2143 = vmatprep.subr.mxu0 %v1204
      %2144 = vmatpush1.msra.mxu0 %v1203
      %2145 = vmatprep.subr.mxu0 %v1200
      %2146 = vmatpush1.msra.mxu0 %v1199
      %2147 = vmatprep.subr.mxu0 %v1196
      %2148 = vmatpush1.msra.mxu0 %v1195
      %2149 = vmatprep.subr.mxu0 %v1192
      %2150 = vmatpush1.msra.mxu0 %v1191
      %2151 = vmatprep.subr.mxu0 %v1188
      %2152 = vmatpush1.msra.mxu0 %v1187
      %2153 = vmatprep.subr.mxu0 %v1184
      %2154 = vmatpush1.msra.mxu0 %v1183
      %2155 = vmatprep.subr.mxu0 %v1180
      %2156 = vmatpush1.msra.mxu0 %v1179
      %2157 = vmatprep.subr.mxu0 %v1176
      %2158 = vmatpush1.msra.mxu0 %v1175
      %2159 = vmatprep.subr.mxu0 %v1172
      %2160 = vmatpush1.msra.mxu0 %v1171
      %2161 = vmatprep.subr.mxu0 %v1168
      %2162 = vmatpush1.msra.mxu0 %v1167
      %2163 = vmatprep.subr.mxu0 %v1164
      %2164 = vmatpush1.msra.mxu0 %v1163
      %2165 = vmatprep.subr.mxu0 0.0
      %2166 = vmatpush2.msra.mxu0 0.0
      %2167 = vmatprep.subr.mxu0 0.0
      %2168 = vmatpush2.msra.mxu0 0.0
      %2169 = vmatprep.subr.mxu0 0.0
      %2170 = vmatpush2.msra.mxu0 0.0
      %2171 = vmatprep.subr.mxu0 0.0
      %2172 = vmatpush2.msra.mxu0 0.0
      %2173 = vmatprep.subr.mxu0 0.0
      %2174 = vmatpush2.msra.mxu0 0.0
      %2175 = vmatprep.subr.mxu0 0.0
      %2176 = vmatpush2.msra.mxu0 0.0
      %2177 = vmatprep.subr.mxu0 0.0
      %2178 = vmatpush2.msra.mxu0 0.0
      %2179 = vmatprep.subr.mxu0 0.0
      %2180 = vmatpush2.msra.mxu0 0.0
      %2181 = vmatprep.subr.mxu0 0.0
      %2182 = vmatpush2.msra.mxu0 0.0
      %2183 = vmatprep.subr.mxu0 0.0
      %2184 = vmatpush2.msra.mxu0 0.0
      %2185 = vmatprep.subr.mxu0 0.0
      %2186 = vmatpush2.msra.mxu0 0.0
      %2187 = vmatprep.subr.mxu0 0.0
      %2188 = vmatpush2.msra.mxu0 0.0
      %2189 = vmatprep.subr.mxu0 0.0
      %2190 = vmatpush2.msra.mxu0 0.0
      %2191 = vmatprep.subr.mxu0 0.0
      %2192 = vmatpush2.msra.mxu0 0.0
      %2193 = vmatprep.subr.mxu0 0.0
      %2194 = vmatpush2.msra.mxu0 0.0
      %2195 = vmatprep.subr.mxu0 0.0
      %2196 = vmatpush2.msra.mxu0 0.0
      %2197 = vmatprep.mubr.f32.mxu0 0.0
      %2198 = vmatmul.mubr.f32.gmra.mxu0 %v1947
      %v2199 = vpop.f32.mrf.mxu0
      %v2200 = vadd.f32 0.0, %v2199
      %v2201 = vpop.f32.mrf.mxu0
      %v2202 = vadd.f32 0.0, %v2201
      %2203 = vdwg.mxu0
      %2204 = vmatprep.subr.mxu0 %v1226
      %2205 = vmatpush1.msra.mxu0 %v1225
      %2206 = vmatprep.subr.mxu0 %v1222
      %2207 = vmatpush1.msra.mxu0 %v1221
      %2208 = vmatprep.subr.mxu0 %v1218
      %2209 = vmatpush1.msra.mxu0 %v1217
      %2210 = vmatprep.subr.mxu0 %v1214
      %2211 = vmatpush1.msra.mxu0 %v1213
      %2212 = vmatprep.subr.mxu0 %v1210
      %2213 = vmatpush1.msra.mxu0 %v1209
      %2214 = vmatprep.subr.mxu0 %v1206
      %2215 = vmatpush1.msra.mxu0 %v1205
      %2216 = vmatprep.subr.mxu0 %v1202
      %2217 = vmatpush1.msra.mxu0 %v1201
      %2218 = vmatprep.subr.mxu0 %v1198
      %2219 = vmatpush1.msra.mxu0 %v1197
      %2220 = vmatprep.subr.mxu0 %v1194
      %2221 = vmatpush1.msra.mxu0 %v1193
      %2222 = vmatprep.subr.mxu0 %v1190
      %2223 = vmatpush1.msra.mxu0 %v1189
      %2224 = vmatprep.subr.mxu0 %v1186
      %2225 = vmatpush1.msra.mxu0 %v1185
      %2226 = vmatprep.subr.mxu0 %v1182
      %2227 = vmatpush1.msra.mxu0 %v1181
      %2228 = vmatprep.subr.mxu0 %v1178
      %2229 = vmatpush1.msra.mxu0 %v1177
      %2230 = vmatprep.subr.mxu0 %v1174
      %2231 = vmatpush1.msra.mxu0 %v1173
      %2232 = vmatprep.subr.mxu0 %v1170
      %2233 = vmatpush1.msra.mxu0 %v1169
      %2234 = vmatprep.subr.mxu0 %v1166
      %2235 = vmatpush1.msra.mxu0 %v1165
      %2236 = vmatprep.subr.mxu0 0.0
      %2237 = vmatpush2.msra.mxu0 0.0
      %2238 = vmatprep.subr.mxu0 0.0
      %2239 = vmatpush2.msra.mxu0 0.0
      %2240 = vmatprep.subr.mxu0 0.0
      %2241 = vmatpush2.msra.mxu0 0.0
      %2242 = vmatprep.subr.mxu0 0.0
      %2243 = vmatpush2.msra.mxu0 0.0
      %2244 = vmatprep.subr.mxu0 0.0
      %2245 = vmatpush2.msra.mxu0 0.0
      %2246 = vmatprep.subr.mxu0 0.0
      %2247 = vmatpush2.msra.mxu0 0.0
      %2248 = vmatprep.subr.mxu0 0.0
      %2249 = vmatpush2.msra.mxu0 0.0
      %2250 = vmatprep.subr.mxu0 0.0
      %2251 = vmatpush2.msra.mxu0 0.0
      %2252 = vmatprep.subr.mxu0 0.0
      %2253 = vmatpush2.msra.mxu0 0.0
      %2254 = vmatprep.subr.mxu0 0.0
      %2255 = vmatpush2.msra.mxu0 0.0
      %2256 = vmatprep.subr.mxu0 0.0
      %2257 = vmatpush2.msra.mxu0 0.0
      %2258 = vmatprep.subr.mxu0 0.0
      %2259 = vmatpush2.msra.mxu0 0.0
      %2260 = vmatprep.subr.mxu0 0.0
      %2261 = vmatpush2.msra.mxu0 0.0
      %2262 = vmatprep.subr.mxu0 0.0
      %2263 = vmatpush2.msra.mxu0 0.0
      %2264 = vmatprep.subr.mxu0 0.0
      %2265 = vmatpush2.msra.mxu0 0.0
      %2266 = vmatprep.subr.mxu0 0.0
      %2267 = vmatpush2.msra.mxu0 0.0
      %2268 = vmatprep.mubr.f32.mxu0 0.0
      %2269 = vmatmul.mubr.f32.gmra.mxu0 %v1947
      %v2270 = vpop.f32.mrf.mxu0
      %v2271 = vadd.f32 0.0, %v2270
      %v2272 = vpop.f32.mrf.mxu0
      %v2273 = vadd.f32 0.0, %v2272
      %2274 = vdwg.mxu0
      %v2275 = vadd.f32 %v2129, %v2200
      %v2276 = vadd.f32 %v2130, %v2202
      %v2277 = vadd.f32 %v2131, %v2271
      %v2278 = vadd.f32 %v2132, %v2273
      %v2279 = vxor.u32 %v2275, 2147483648
      %v2280 = vmul.f32 %v2279, 1.442695
      %v2281 = vpow.pop %v2280
      %v2282 = vadd.f32 %v2281, 1.0
      %v2283 = vrcp.pop %v2282
      %v2284 = vmul.f32 1.0, %v2283
      %v2285 = vxor.u32 %v2276, 2147483648
      %v2286 = vmul.f32 %v2285, 1.442695
      %v2287 = vpow.pop %v2286
      %v2288 = vadd.f32 %v2287, 1.0
      %v2289 = vrcp.pop %v2288
      %v2290 = vmul.f32 1.0, %v2289
      %v2291 = vtanh.pop %v2277
      %v2292 = vxor.u32 %v2278, 2147483648
      %v2293 = vmul.f32 %v2292, 1.442695
      %v2294 = vpow.pop %v2293
      %v2295 = vadd.f32 %v2294, 1.0
      %v2296 = vrcp.pop %v2295
      %v2297 = vmul.f32 1.0, %v2296
      %v2298 = vmul.f32 %v2290, %v1948
      %v2299 = vmul.f32 %v2284, %v2291
      %v2300 = vadd.f32 %v2298, %v2299
      %v2301 = vtanh.pop %v2300
      %v2302 = vmul.f32 %v2297, %v2301
      %s2303 = sadd.s32 %s1581, 5
      %p2304 = scmp.lt.s32.totalorder %s2303, 12
      %s2305 = scalar_select %p2304, 1, 0
      %v2306 = vstv %s2305
      %vm2307 = vcmp.eq.s32.totalorder %v2306, 1
      %v2308 = vsel %vm2307, %v2302, %v1947
      %v2309 = vsel %vm2307, %v2300, %v1948
      %s2310 = scalar_lea.vmem %s421, 16
      %2311 = vst [vmem:[%s2310] sm:$0xff] %v2127
      %s2312 = scalar_lea.vmem %s431, 40
      %2313 = vst [vmem:[%s2312] sm:$0xff] %v2308
      %s2314 = scalar_lea.vmem [#allocation2], 96
      %v2315 = vld [vmem:[%s2314] sm:$0xff]
      %v2316 = vld [vmem:[%s2314 + $0x8] sm:$0xff]
      %v2317 = vld [vmem:[%s2314 + $0x10] sm:$0xff]
      %v2318 = vld [vmem:[%s2314 + $0x18] sm:$0xff]
      %2319 = vmatprep.subr.mxu0 %v1160
      %2320 = vmatpush1.msra.mxu0 %v1159
      %2321 = vmatprep.subr.mxu0 %v1156
      %2322 = vmatpush1.msra.mxu0 %v1155
      %2323 = vmatprep.subr.mxu0 %v1152
      %2324 = vmatpush1.msra.mxu0 %v1151
      %2325 = vmatprep.subr.mxu0 %v1148
      %2326 = vmatpush1.msra.mxu0 %v1147
      %2327 = vmatprep.subr.mxu0 %v1144
      %2328 = vmatpush1.msra.mxu0 %v1143
      %2329 = vmatprep.subr.mxu0 %v1140
      %2330 = vmatpush1.msra.mxu0 %v1139
      %2331 = vmatprep.subr.mxu0 %v1136
      %2332 = vmatpush1.msra.mxu0 %v1135
      %2333 = vmatprep.subr.mxu0 %v1132
      %2334 = vmatpush1.msra.mxu0 %v1131
      %2335 = vmatprep.subr.mxu0 %v1128
      %2336 = vmatpush1.msra.mxu0 %v1127
      %2337 = vmatprep.subr.mxu0 %v1124
      %2338 = vmatpush1.msra.mxu0 %v1123
      %2339 = vmatprep.subr.mxu0 %v1120
      %2340 = vmatpush1.msra.mxu0 %v1119
      %2341 = vmatprep.subr.mxu0 %v1116
      %2342 = vmatpush1.msra.mxu0 %v1115
      %2343 = vmatprep.subr.mxu0 %v1112
      %2344 = vmatpush1.msra.mxu0 %v1111
      %2345 = vmatprep.subr.mxu0 %v1108
      %2346 = vmatpush1.msra.mxu0 %v1107
      %2347 = vmatprep.subr.mxu0 %v1104
      %2348 = vmatpush1.msra.mxu0 %v1103
      %2349 = vmatprep.subr.mxu0 %v1100
      %2350 = vmatpush1.msra.mxu0 %v1099
      %2351 = vmatprep.subr.mxu0 0.0
      %2352 = vmatpush2.msra.mxu0 0.0
      %2353 = vmatprep.subr.mxu0 0.0
      %2354 = vmatpush2.msra.mxu0 0.0
      %2355 = vmatprep.subr.mxu0 0.0
      %2356 = vmatpush2.msra.mxu0 0.0
      %2357 = vmatprep.subr.mxu0 0.0
      %2358 = vmatpush2.msra.mxu0 0.0
      %2359 = vmatprep.subr.mxu0 0.0
      %2360 = vmatpush2.msra.mxu0 0.0
      %2361 = vmatprep.subr.mxu0 0.0
      %2362 = vmatpush2.msra.mxu0 0.0
      %2363 = vmatprep.subr.mxu0 0.0
      %2364 = vmatpush2.msra.mxu0 0.0
      %2365 = vmatprep.subr.mxu0 0.0
      %2366 = vmatpush2.msra.mxu0 0.0
      %2367 = vmatprep.subr.mxu0 0.0
      %2368 = vmatpush2.msra.mxu0 0.0
      %2369 = vmatprep.subr.mxu0 0.0
      %2370 = vmatpush2.msra.mxu0 0.0
      %2371 = vmatprep.subr.mxu0 0.0
      %2372 = vmatpush2.msra.mxu0 0.0
      %2373 = vmatprep.subr.mxu0 0.0
      %2374 = vmatpush2.msra.mxu0 0.0
      %2375 = vmatprep.subr.mxu0 0.0
      %2376 = vmatpush2.msra.mxu0 0.0
      %2377 = vmatprep.subr.mxu0 0.0
      %2378 = vmatpush2.msra.mxu0 0.0
      %2379 = vmatprep.subr.mxu0 0.0
      %2380 = vmatpush2.msra.mxu0 0.0
      %2381 = vmatprep.subr.mxu0 0.0
      %2382 = vmatpush2.msra.mxu0 0.0
      %2383 = vmatprep.mubr.f32.mxu0 0.0
      %2384 = vmatmul.mubr.f32.gmra.mxu0 %v2127
      %v2385 = vpop.f32.mrf.mxu0
      %v2386 = vadd.f32 0.0, %v2385
      %v2387 = vpop.f32.mrf.mxu0
      %v2388 = vadd.f32 0.0, %v2387
      %2389 = vdwg.mxu0
      %2390 = vmatprep.subr.mxu0 %v1162
      %2391 = vmatpush1.msra.mxu0 %v1161
      %2392 = vmatprep.subr.mxu0 %v1158
      %2393 = vmatpush1.msra.mxu0 %v1157
      %2394 = vmatprep.subr.mxu0 %v1154
      %2395 = vmatpush1.msra.mxu0 %v1153
      %2396 = vmatprep.subr.mxu0 %v1150
      %2397 = vmatpush1.msra.mxu0 %v1149
      %2398 = vmatprep.subr.mxu0 %v1146
      %2399 = vmatpush1.msra.mxu0 %v1145
      %2400 = vmatprep.subr.mxu0 %v1142
      %2401 = vmatpush1.msra.mxu0 %v1141
      %2402 = vmatprep.subr.mxu0 %v1138
      %2403 = vmatpush1.msra.mxu0 %v1137
      %2404 = vmatprep.subr.mxu0 %v1134
      %2405 = vmatpush1.msra.mxu0 %v1133
      %2406 = vmatprep.subr.mxu0 %v1130
      %2407 = vmatpush1.msra.mxu0 %v1129
      %2408 = vmatprep.subr.mxu0 %v1126
      %2409 = vmatpush1.msra.mxu0 %v1125
      %2410 = vmatprep.subr.mxu0 %v1122
      %2411 = vmatpush1.msra.mxu0 %v1121
      %2412 = vmatprep.subr.mxu0 %v1118
      %2413 = vmatpush1.msra.mxu0 %v1117
      %2414 = vmatprep.subr.mxu0 %v1114
      %2415 = vmatpush1.msra.mxu0 %v1113
      %2416 = vmatprep.subr.mxu0 %v1110
      %2417 = vmatpush1.msra.mxu0 %v1109
      %2418 = vmatprep.subr.mxu0 %v1106
      %2419 = vmatpush1.msra.mxu0 %v1105
      %2420 = vmatprep.subr.mxu0 %v1102
      %2421 = vmatpush1.msra.mxu0 %v1101
      %2422 = vmatprep.subr.mxu0 0.0
      %2423 = vmatpush2.msra.mxu0 0.0
      %2424 = vmatprep.subr.mxu0 0.0
      %2425 = vmatpush2.msra.mxu0 0.0
      %2426 = vmatprep.subr.mxu0 0.0
      %2427 = vmatpush2.msra.mxu0 0.0
      %2428 = vmatprep.subr.mxu0 0.0
      %2429 = vmatpush2.msra.mxu0 0.0
      %2430 = vmatprep.subr.mxu0 0.0
      %2431 = vmatpush2.msra.mxu0 0.0
      %2432 = vmatprep.subr.mxu0 0.0
      %2433 = vmatpush2.msra.mxu0 0.0
      %2434 = vmatprep.subr.mxu0 0.0
      %2435 = vmatpush2.msra.mxu0 0.0
      %2436 = vmatprep.subr.mxu0 0.0
      %2437 = vmatpush2.msra.mxu0 0.0
      %2438 = vmatprep.subr.mxu0 0.0
      %2439 = vmatpush2.msra.mxu0 0.0
      %2440 = vmatprep.subr.mxu0 0.0
      %2441 = vmatpush2.msra.mxu0 0.0
      %2442 = vmatprep.subr.mxu0 0.0
      %2443 = vmatpush2.msra.mxu0 0.0
      %2444 = vmatprep.subr.mxu0 0.0
      %2445 = vmatpush2.msra.mxu0 0.0
      %2446 = vmatprep.subr.mxu0 0.0
      %2447 = vmatpush2.msra.mxu0 0.0
      %2448 = vmatprep.subr.mxu0 0.0
      %2449 = vmatpush2.msra.mxu0 0.0
      %2450 = vmatprep.subr.mxu0 0.0
      %2451 = vmatpush2.msra.mxu0 0.0
      %2452 = vmatprep.subr.mxu0 0.0
      %2453 = vmatpush2.msra.mxu0 0.0
      %2454 = vmatprep.mubr.f32.mxu0 0.0
      %2455 = vmatmul.mubr.f32.gmra.mxu0 %v2127
      %v2456 = vpop.f32.mrf.mxu0
      %v2457 = vadd.f32 0.0, %v2456
      %v2458 = vpop.f32.mrf.mxu0
      %v2459 = vadd.f32 0.0, %v2458
      %2460 = vdwg.mxu0
      %v2461 = vadd.f32 %v2315, %v2386
      %v2462 = vadd.f32 %v2316, %v2388
      %v2463 = vadd.f32 %v2317, %v2457
      %v2464 = vadd.f32 %v2318, %v2459
      %v2465 = vxor.u32 %v2461, 2147483648
      %v2466 = vmul.f32 %v2465, 1.442695
      %v2467 = vpow.pop %v2466
      %v2468 = vadd.f32 %v2467, 1.0
      %v2469 = vrcp.pop %v2468
      %v2470 = vmul.f32 1.0, %v2469
      %v2471 = vxor.u32 %v2462, 2147483648
      %v2472 = vmul.f32 %v2471, 1.442695
      %v2473 = vpow.pop %v2472
      %v2474 = vadd.f32 %v2473, 1.0
      %v2475 = vrcp.pop %v2474
      %v2476 = vmul.f32 1.0, %v2475
      %v2477 = vtanh.pop %v2463
      %v2478 = vxor.u32 %v2464, 2147483648
      %v2479 = vmul.f32 %v2478, 1.442695
      %v2480 = vpow.pop %v2479
      %v2481 = vadd.f32 %v2480, 1.0
      %v2482 = vrcp.pop %v2481
      %v2483 = vmul.f32 1.0, %v2482
      %v2484 = vmul.f32 %v2476, %v2125
      %v2485 = vmul.f32 %v2470, %v2477
      %v2486 = vadd.f32 %v2484, %v2485
      %v2487 = vtanh.pop %v2486
      %v2488 = vmul.f32 %v2483, %v2487
      %s2489 = scalar_lea.vmem [#allocation3], 128
      %v2490 = vld [vmem:[%s2489] sm:$0xff]
      %v2491 = vld [vmem:[%s2489 + $0x8] sm:$0xff]
      %v2492 = vld [vmem:[%s2489 + $0x10] sm:$0xff]
      %v2493 = vld [vmem:[%s2489 + $0x18] sm:$0xff]
      %2494 = vmatprep.subr.mxu0 %v1224
      %2495 = vmatpush1.msra.mxu0 %v1223
      %2496 = vmatprep.subr.mxu0 %v1220
      %2497 = vmatpush1.msra.mxu0 %v1219
      %2498 = vmatprep.subr.mxu0 %v1216
      %2499 = vmatpush1.msra.mxu0 %v1215
      %2500 = vmatprep.subr.mxu0 %v1212
      %2501 = vmatpush1.msra.mxu0 %v1211
      %2502 = vmatprep.subr.mxu0 %v1208
      %2503 = vmatpush1.msra.mxu0 %v1207
      %2504 = vmatprep.subr.mxu0 %v1204
      %2505 = vmatpush1.msra.mxu0 %v1203
      %2506 = vmatprep.subr.mxu0 %v1200
      %2507 = vmatpush1.msra.mxu0 %v1199
      %2508 = vmatprep.subr.mxu0 %v1196
      %2509 = vmatpush1.msra.mxu0 %v1195
      %2510 = vmatprep.subr.mxu0 %v1192
      %2511 = vmatpush1.msra.mxu0 %v1191
      %2512 = vmatprep.subr.mxu0 %v1188
      %2513 = vmatpush1.msra.mxu0 %v1187
      %2514 = vmatprep.subr.mxu0 %v1184
      %2515 = vmatpush1.msra.mxu0 %v1183
      %2516 = vmatprep.subr.mxu0 %v1180
      %2517 = vmatpush1.msra.mxu0 %v1179
      %2518 = vmatprep.subr.mxu0 %v1176
      %2519 = vmatpush1.msra.mxu0 %v1175
      %2520 = vmatprep.subr.mxu0 %v1172
      %2521 = vmatpush1.msra.mxu0 %v1171
      %2522 = vmatprep.subr.mxu0 %v1168
      %2523 = vmatpush1.msra.mxu0 %v1167
      %2524 = vmatprep.subr.mxu0 %v1164
      %2525 = vmatpush1.msra.mxu0 %v1163
      %2526 = vmatprep.subr.mxu0 0.0
      %2527 = vmatpush2.msra.mxu0 0.0
      %2528 = vmatprep.subr.mxu0 0.0
      %2529 = vmatpush2.msra.mxu0 0.0
      %2530 = vmatprep.subr.mxu0 0.0
      %2531 = vmatpush2.msra.mxu0 0.0
      %2532 = vmatprep.subr.mxu0 0.0
      %2533 = vmatpush2.msra.mxu0 0.0
      %2534 = vmatprep.subr.mxu0 0.0
      %2535 = vmatpush2.msra.mxu0 0.0
      %2536 = vmatprep.subr.mxu0 0.0
      %2537 = vmatpush2.msra.mxu0 0.0
      %2538 = vmatprep.subr.mxu0 0.0
      %2539 = vmatpush2.msra.mxu0 0.0
      %2540 = vmatprep.subr.mxu0 0.0
      %2541 = vmatpush2.msra.mxu0 0.0
      %2542 = vmatprep.subr.mxu0 0.0
      %2543 = vmatpush2.msra.mxu0 0.0
      %2544 = vmatprep.subr.mxu0 0.0
      %2545 = vmatpush2.msra.mxu0 0.0
      %2546 = vmatprep.subr.mxu0 0.0
      %2547 = vmatpush2.msra.mxu0 0.0
      %2548 = vmatprep.subr.mxu0 0.0
      %2549 = vmatpush2.msra.mxu0 0.0
      %2550 = vmatprep.subr.mxu0 0.0
      %2551 = vmatpush2.msra.mxu0 0.0
      %2552 = vmatprep.subr.mxu0 0.0
      %2553 = vmatpush2.msra.mxu0 0.0
      %2554 = vmatprep.subr.mxu0 0.0
      %2555 = vmatpush2.msra.mxu0 0.0
      %2556 = vmatprep.subr.mxu0 0.0
      %2557 = vmatpush2.msra.mxu0 0.0
      %2558 = vmatprep.mubr.f32.mxu0 0.0
      %2559 = vmatmul.mubr.f32.gmra.mxu0 %v2308
      %v2560 = vpop.f32.mrf.mxu0
      %v2561 = vadd.f32 0.0, %v2560
      %v2562 = vpop.f32.mrf.mxu0
      %v2563 = vadd.f32 0.0, %v2562
      %2564 = vdwg.mxu0
      %2565 = vmatprep.subr.mxu0 %v1226
      %2566 = vmatpush1.msra.mxu0 %v1225
      %2567 = vmatprep.subr.mxu0 %v1222
      %2568 = vmatpush1.msra.mxu0 %v1221
      %2569 = vmatprep.subr.mxu0 %v1218
      %2570 = vmatpush1.msra.mxu0 %v1217
      %2571 = vmatprep.subr.mxu0 %v1214
      %2572 = vmatpush1.msra.mxu0 %v1213
      %2573 = vmatprep.subr.mxu0 %v1210
      %2574 = vmatpush1.msra.mxu0 %v1209
      %2575 = vmatprep.subr.mxu0 %v1206
      %2576 = vmatpush1.msra.mxu0 %v1205
      %2577 = vmatprep.subr.mxu0 %v1202
      %2578 = vmatpush1.msra.mxu0 %v1201
      %2579 = vmatprep.subr.mxu0 %v1198
      %2580 = vmatpush1.msra.mxu0 %v1197
      %2581 = vmatprep.subr.mxu0 %v1194
      %2582 = vmatpush1.msra.mxu0 %v1193
      %2583 = vmatprep.subr.mxu0 %v1190
      %2584 = vmatpush1.msra.mxu0 %v1189
      %2585 = vmatprep.subr.mxu0 %v1186
      %2586 = vmatpush1.msra.mxu0 %v1185
      %2587 = vmatprep.subr.mxu0 %v1182
      %2588 = vmatpush1.msra.mxu0 %v1181
      %2589 = vmatprep.subr.mxu0 %v1178
      %2590 = vmatpush1.msra.mxu0 %v1177
      %2591 = vmatprep.subr.mxu0 %v1174
      %2592 = vmatpush1.msra.mxu0 %v1173
      %2593 = vmatprep.subr.mxu0 %v1170
      %2594 = vmatpush1.msra.mxu0 %v1169
      %2595 = vmatprep.subr.mxu0 %v1166
      %2596 = vmatpush1.msra.mxu0 %v1165
      %2597 = vmatprep.subr.mxu0 0.0
      %2598 = vmatpush2.msra.mxu0 0.0
      %2599 = vmatprep.subr.mxu0 0.0
      %2600 = vmatpush2.msra.mxu0 0.0
      %2601 = vmatprep.subr.mxu0 0.0
      %2602 = vmatpush2.msra.mxu0 0.0
      %2603 = vmatprep.subr.mxu0 0.0
      %2604 = vmatpush2.msra.mxu0 0.0
      %2605 = vmatprep.subr.mxu0 0.0
      %2606 = vmatpush2.msra.mxu0 0.0
      %2607 = vmatprep.subr.mxu0 0.0
      %2608 = vmatpush2.msra.mxu0 0.0
      %2609 = vmatprep.subr.mxu0 0.0
      %2610 = vmatpush2.msra.mxu0 0.0
      %2611 = vmatprep.subr.mxu0 0.0
      %2612 = vmatpush2.msra.mxu0 0.0
      %2613 = vmatprep.subr.mxu0 0.0
      %2614 = vmatpush2.msra.mxu0 0.0
      %2615 = vmatprep.subr.mxu0 0.0
      %2616 = vmatpush2.msra.mxu0 0.0
      %2617 = vmatprep.subr.mxu0 0.0
      %2618 = vmatpush2.msra.mxu0 0.0
      %2619 = vmatprep.subr.mxu0 0.0
      %2620 = vmatpush2.msra.mxu0 0.0
      %2621 = vmatprep.subr.mxu0 0.0
      %2622 = vmatpush2.msra.mxu0 0.0
      %2623 = vmatprep.subr.mxu0 0.0
      %2624 = vmatpush2.msra.mxu0 0.0
      %2625 = vmatprep.subr.mxu0 0.0
      %2626 = vmatpush2.msra.mxu0 0.0
      %2627 = vmatprep.subr.mxu0 0.0
      %2628 = vmatpush2.msra.mxu0 0.0
      %2629 = vmatprep.mubr.f32.mxu0 0.0
      %2630 = vmatmul.mubr.f32.gmra.mxu0 %v2308
      %v2631 = vpop.f32.mrf.mxu0
      %v2632 = vadd.f32 0.0, %v2631
      %v2633 = vpop.f32.mrf.mxu0
      %v2634 = vadd.f32 0.0, %v2633
      %2635 = vdwg.mxu0
      %v2636 = vadd.f32 %v2490, %v2561
      %v2637 = vadd.f32 %v2491, %v2563
      %v2638 = vadd.f32 %v2492, %v2632
      %v2639 = vadd.f32 %v2493, %v2634
      %v2640 = vxor.u32 %v2636, 2147483648
      %v2641 = vmul.f32 %v2640, 1.442695
      %v2642 = vpow.pop %v2641
      %v2643 = vadd.f32 %v2642, 1.0
      %v2644 = vrcp.pop %v2643
      %v2645 = vmul.f32 1.0, %v2644
      %v2646 = vxor.u32 %v2637, 2147483648
      %v2647 = vmul.f32 %v2646, 1.442695
      %v2648 = vpow.pop %v2647
      %v2649 = vadd.f32 %v2648, 1.0
      %v2650 = vrcp.pop %v2649
      %v2651 = vmul.f32 1.0, %v2650
      %v2652 = vtanh.pop %v2638
      %v2653 = vxor.u32 %v2639, 2147483648
      %v2654 = vmul.f32 %v2653, 1.442695
      %v2655 = vpow.pop %v2654
      %v2656 = vadd.f32 %v2655, 1.0
      %v2657 = vrcp.pop %v2656
      %v2658 = vmul.f32 1.0, %v2657
      %v2659 = vmul.f32 %v2651, %v2309
      %v2660 = vmul.f32 %v2645, %v2652
      %v2661 = vadd.f32 %v2659, %v2660
      %v2662 = vtanh.pop %v2661
      %v2663 = vmul.f32 %v2658, %v2662
      %s2664 = sadd.s32 %s1581, 4
      %p2665 = scmp.lt.s32.totalorder %s2664, 12
      %s2666 = scalar_select %p2665, 1, 0
      %v2667 = vstv %s2666
      %vm2668 = vcmp.eq.s32.totalorder %v2667, 1
      %v2669 = vsel %vm2668, %v2663, %v2308
      %v2670 = vsel %vm2668, %v2661, %v2309
      %s2671 = scalar_lea.vmem %s421, 24
      %2672 = vst [vmem:[%s2671] sm:$0xff] %v2488
      %s2673 = scalar_lea.vmem %s431, 32
      %2674 = vst [vmem:[%s2673] sm:$0xff] %v2669
      %s2675 = scalar_lea.vmem [#allocation2], 128
      %v2676 = vld [vmem:[%s2675] sm:$0xff]
      %v2677 = vld [vmem:[%s2675 + $0x8] sm:$0xff]
      %v2678 = vld [vmem:[%s2675 + $0x10] sm:$0xff]
      %v2679 = vld [vmem:[%s2675 + $0x18] sm:$0xff]
      %2680 = vmatprep.subr.mxu0 %v1160
      %2681 = vmatpush1.msra.mxu0 %v1159
      %2682 = vmatprep.subr.mxu0 %v1156
      %2683 = vmatpush1.msra.mxu0 %v1155
      %2684 = vmatprep.subr.mxu0 %v1152
      %2685 = vmatpush1.msra.mxu0 %v1151
      %2686 = vmatprep.subr.mxu0 %v1148
      %2687 = vmatpush1.msra.mxu0 %v1147
      %2688 = vmatprep.subr.mxu0 %v1144
      %2689 = vmatpush1.msra.mxu0 %v1143
      %2690 = vmatprep.subr.mxu0 %v1140
      %2691 = vmatpush1.msra.mxu0 %v1139
      %2692 = vmatprep.subr.mxu0 %v1136
      %2693 = vmatpush1.msra.mxu0 %v1135
      %2694 = vmatprep.subr.mxu0 %v1132
      %2695 = vmatpush1.msra.mxu0 %v1131
      %2696 = vmatprep.subr.mxu0 %v1128
      %2697 = vmatpush1.msra.mxu0 %v1127
      %2698 = vmatprep.subr.mxu0 %v1124
      %2699 = vmatpush1.msra.mxu0 %v1123
      %2700 = vmatprep.subr.mxu0 %v1120
      %2701 = vmatpush1.msra.mxu0 %v1119
      %2702 = vmatprep.subr.mxu0 %v1116
      %2703 = vmatpush1.msra.mxu0 %v1115
      %2704 = vmatprep.subr.mxu0 %v1112
      %2705 = vmatpush1.msra.mxu0 %v1111
      %2706 = vmatprep.subr.mxu0 %v1108
      %2707 = vmatpush1.msra.mxu0 %v1107
      %2708 = vmatprep.subr.mxu0 %v1104
      %2709 = vmatpush1.msra.mxu0 %v1103
      %2710 = vmatprep.subr.mxu0 %v1100
      %2711 = vmatpush1.msra.mxu0 %v1099
      %2712 = vmatprep.subr.mxu0 0.0
      %2713 = vmatpush2.msra.mxu0 0.0
      %2714 = vmatprep.subr.mxu0 0.0
      %2715 = vmatpush2.msra.mxu0 0.0
      %2716 = vmatprep.subr.mxu0 0.0
      %2717 = vmatpush2.msra.mxu0 0.0
      %2718 = vmatprep.subr.mxu0 0.0
      %2719 = vmatpush2.msra.mxu0 0.0
      %2720 = vmatprep.subr.mxu0 0.0
      %2721 = vmatpush2.msra.mxu0 0.0
      %2722 = vmatprep.subr.mxu0 0.0
      %2723 = vmatpush2.msra.mxu0 0.0
      %2724 = vmatprep.subr.mxu0 0.0
      %2725 = vmatpush2.msra.mxu0 0.0
      %2726 = vmatprep.subr.mxu0 0.0
      %2727 = vmatpush2.msra.mxu0 0.0
      %2728 = vmatprep.subr.mxu0 0.0
      %2729 = vmatpush2.msra.mxu0 0.0
      %2730 = vmatprep.subr.mxu0 0.0
      %2731 = vmatpush2.msra.mxu0 0.0
      %2732 = vmatprep.subr.mxu0 0.0
      %2733 = vmatpush2.msra.mxu0 0.0
      %2734 = vmatprep.subr.mxu0 0.0
      %2735 = vmatpush2.msra.mxu0 0.0
      %2736 = vmatprep.subr.mxu0 0.0
      %2737 = vmatpush2.msra.mxu0 0.0
      %2738 = vmatprep.subr.mxu0 0.0
      %2739 = vmatpush2.msra.mxu0 0.0
      %2740 = vmatprep.subr.mxu0 0.0
      %2741 = vmatpush2.msra.mxu0 0.0
      %2742 = vmatprep.subr.mxu0 0.0
      %2743 = vmatpush2.msra.mxu0 0.0
      %2744 = vmatprep.mubr.f32.mxu0 0.0
      %2745 = vmatmul.mubr.f32.gmra.mxu0 %v2488
      %v2746 = vpop.f32.mrf.mxu0
      %v2747 = vadd.f32 0.0, %v2746
      %v2748 = vpop.f32.mrf.mxu0
      %v2749 = vadd.f32 0.0, %v2748
      %2750 = vdwg.mxu0
      %2751 = vmatprep.subr.mxu0 %v1162
      %2752 = vmatpush1.msra.mxu0 %v1161
      %2753 = vmatprep.subr.mxu0 %v1158
      %2754 = vmatpush1.msra.mxu0 %v1157
      %2755 = vmatprep.subr.mxu0 %v1154
      %2756 = vmatpush1.msra.mxu0 %v1153
      %2757 = vmatprep.subr.mxu0 %v1150
      %2758 = vmatpush1.msra.mxu0 %v1149
      %2759 = vmatprep.subr.mxu0 %v1146
      %2760 = vmatpush1.msra.mxu0 %v1145
      %2761 = vmatprep.subr.mxu0 %v1142
      %2762 = vmatpush1.msra.mxu0 %v1141
      %2763 = vmatprep.subr.mxu0 %v1138
      %2764 = vmatpush1.msra.mxu0 %v1137
      %2765 = vmatprep.subr.mxu0 %v1134
      %2766 = vmatpush1.msra.mxu0 %v1133
      %2767 = vmatprep.subr.mxu0 %v1130
      %2768 = vmatpush1.msra.mxu0 %v1129
      %2769 = vmatprep.subr.mxu0 %v1126
      %2770 = vmatpush1.msra.mxu0 %v1125
      %2771 = vmatprep.subr.mxu0 %v1122
      %2772 = vmatpush1.msra.mxu0 %v1121
      %2773 = vmatprep.subr.mxu0 %v1118
      %2774 = vmatpush1.msra.mxu0 %v1117
      %2775 = vmatprep.subr.mxu0 %v1114
      %2776 = vmatpush1.msra.mxu0 %v1113
      %2777 = vmatprep.subr.mxu0 %v1110
      %2778 = vmatpush1.msra.mxu0 %v1109
      %2779 = vmatprep.subr.mxu0 %v1106
      %2780 = vmatpush1.msra.mxu0 %v1105
      %2781 = vmatprep.subr.mxu0 %v1102
      %2782 = vmatpush1.msra.mxu0 %v1101
      %2783 = vmatprep.subr.mxu0 0.0
      %2784 = vmatpush2.msra.mxu0 0.0
      %2785 = vmatprep.subr.mxu0 0.0
      %2786 = vmatpush2.msra.mxu0 0.0
      %2787 = vmatprep.subr.mxu0 0.0
      %2788 = vmatpush2.msra.mxu0 0.0
      %2789 = vmatprep.subr.mxu0 0.0
      %2790 = vmatpush2.msra.mxu0 0.0
      %2791 = vmatprep.subr.mxu0 0.0
      %2792 = vmatpush2.msra.mxu0 0.0
      %2793 = vmatprep.subr.mxu0 0.0
      %2794 = vmatpush2.msra.mxu0 0.0
      %2795 = vmatprep.subr.mxu0 0.0
      %2796 = vmatpush2.msra.mxu0 0.0
      %2797 = vmatprep.subr.mxu0 0.0
      %2798 = vmatpush2.msra.mxu0 0.0
      %2799 = vmatprep.subr.mxu0 0.0
      %2800 = vmatpush2.msra.mxu0 0.0
      %2801 = vmatprep.subr.mxu0 0.0
      %2802 = vmatpush2.msra.mxu0 0.0
      %2803 = vmatprep.subr.mxu0 0.0
      %2804 = vmatpush2.msra.mxu0 0.0
      %2805 = vmatprep.subr.mxu0 0.0
      %2806 = vmatpush2.msra.mxu0 0.0
      %2807 = vmatprep.subr.mxu0 0.0
      %2808 = vmatpush2.msra.mxu0 0.0
      %2809 = vmatprep.subr.mxu0 0.0
      %2810 = vmatpush2.msra.mxu0 0.0
      %2811 = vmatprep.subr.mxu0 0.0
      %2812 = vmatpush2.msra.mxu0 0.0
      %2813 = vmatprep.subr.mxu0 0.0
      %2814 = vmatpush2.msra.mxu0 0.0
      %2815 = vmatprep.mubr.f32.mxu0 0.0
      %2816 = vmatmul.mubr.f32.gmra.mxu0 %v2488
      %v2817 = vpop.f32.mrf.mxu0
      %v2818 = vadd.f32 0.0, %v2817
      %v2819 = vpop.f32.mrf.mxu0
      %v2820 = vadd.f32 0.0, %v2819
      %2821 = vdwg.mxu0
      %v2822 = vadd.f32 %v2676, %v2747
      %v2823 = vadd.f32 %v2677, %v2749
      %v2824 = vadd.f32 %v2678, %v2818
      %v2825 = vadd.f32 %v2679, %v2820
      %v2826 = vxor.u32 %v2822, 2147483648
      %v2827 = vmul.f32 %v2826, 1.442695
      %v2828 = vpow.pop %v2827
      %v2829 = vadd.f32 %v2828, 1.0
      %v2830 = vrcp.pop %v2829
      %v2831 = vmul.f32 1.0, %v2830
      %v2832 = vxor.u32 %v2823, 2147483648
      %v2833 = vmul.f32 %v2832, 1.442695
      %v2834 = vpow.pop %v2833
      %v2835 = vadd.f32 %v2834, 1.0
      %v2836 = vrcp.pop %v2835
      %v2837 = vmul.f32 1.0, %v2836
      %v2838 = vtanh.pop %v2824
      %v2839 = vxor.u32 %v2825, 2147483648
      %v2840 = vmul.f32 %v2839, 1.442695
      %v2841 = vpow.pop %v2840
      %v2842 = vadd.f32 %v2841, 1.0
      %v2843 = vrcp.pop %v2842
      %v2844 = vmul.f32 1.0, %v2843
      %v2845 = vmul.f32 %v2837, %v2486
      %v2846 = vmul.f32 %v2831, %v2838
      %v2847 = vadd.f32 %v2845, %v2846
      %v2848 = vtanh.pop %v2847
      %v2849 = vmul.f32 %v2844, %v2848
      %s2850 = scalar_lea.vmem [#allocation3], 96
      %v2851 = vld [vmem:[%s2850] sm:$0xff]
      %v2852 = vld [vmem:[%s2850 + $0x8] sm:$0xff]
      %v2853 = vld [vmem:[%s2850 + $0x10] sm:$0xff]
      %v2854 = vld [vmem:[%s2850 + $0x18] sm:$0xff]
      %2855 = vmatprep.subr.mxu0 %v1224
      %2856 = vmatpush1.msra.mxu0 %v1223
      %2857 = vmatprep.subr.mxu0 %v1220
      %2858 = vmatpush1.msra.mxu0 %v1219
      %2859 = vmatprep.subr.mxu0 %v1216
      %2860 = vmatpush1.msra.mxu0 %v1215
      %2861 = vmatprep.subr.mxu0 %v1212
      %2862 = vmatpush1.msra.mxu0 %v1211
      %2863 = vmatprep.subr.mxu0 %v1208
      %2864 = vmatpush1.msra.mxu0 %v1207
      %2865 = vmatprep.subr.mxu0 %v1204
      %2866 = vmatpush1.msra.mxu0 %v1203
      %2867 = vmatprep.subr.mxu0 %v1200
      %2868 = vmatpush1.msra.mxu0 %v1199
      %2869 = vmatprep.subr.mxu0 %v1196
      %2870 = vmatpush1.msra.mxu0 %v1195
      %2871 = vmatprep.subr.mxu0 %v1192
      %2872 = vmatpush1.msra.mxu0 %v1191
      %2873 = vmatprep.subr.mxu0 %v1188
      %2874 = vmatpush1.msra.mxu0 %v1187
      %2875 = vmatprep.subr.mxu0 %v1184
      %2876 = vmatpush1.msra.mxu0 %v1183
      %2877 = vmatprep.subr.mxu0 %v1180
      %2878 = vmatpush1.msra.mxu0 %v1179
      %2879 = vmatprep.subr.mxu0 %v1176
      %2880 = vmatpush1.msra.mxu0 %v1175
      %2881 = vmatprep.subr.mxu0 %v1172
      %2882 = vmatpush1.msra.mxu0 %v1171
      %2883 = vmatprep.subr.mxu0 %v1168
      %2884 = vmatpush1.msra.mxu0 %v1167
      %2885 = vmatprep.subr.mxu0 %v1164
      %2886 = vmatpush1.msra.mxu0 %v1163
      %2887 = vmatprep.subr.mxu0 0.0
      %2888 = vmatpush2.msra.mxu0 0.0
      %2889 = vmatprep.subr.mxu0 0.0
      %2890 = vmatpush2.msra.mxu0 0.0
      %2891 = vmatprep.subr.mxu0 0.0
      %2892 = vmatpush2.msra.mxu0 0.0
      %2893 = vmatprep.subr.mxu0 0.0
      %2894 = vmatpush2.msra.mxu0 0.0
      %2895 = vmatprep.subr.mxu0 0.0
      %2896 = vmatpush2.msra.mxu0 0.0
      %2897 = vmatprep.subr.mxu0 0.0
      %2898 = vmatpush2.msra.mxu0 0.0
      %2899 = vmatprep.subr.mxu0 0.0
      %2900 = vmatpush2.msra.mxu0 0.0
      %2901 = vmatprep.subr.mxu0 0.0
      %2902 = vmatpush2.msra.mxu0 0.0
      %2903 = vmatprep.subr.mxu0 0.0
      %2904 = vmatpush2.msra.mxu0 0.0
      %2905 = vmatprep.subr.mxu0 0.0
      %2906 = vmatpush2.msra.mxu0 0.0
      %2907 = vmatprep.subr.mxu0 0.0
      %2908 = vmatpush2.msra.mxu0 0.0
      %2909 = vmatprep.subr.mxu0 0.0
      %2910 = vmatpush2.msra.mxu0 0.0
      %2911 = vmatprep.subr.mxu0 0.0
      %2912 = vmatpush2.msra.mxu0 0.0
      %2913 = vmatprep.subr.mxu0 0.0
      %2914 = vmatpush2.msra.mxu0 0.0
      %2915 = vmatprep.subr.mxu0 0.0
      %2916 = vmatpush2.msra.mxu0 0.0
      %2917 = vmatprep.subr.mxu0 0.0
      %2918 = vmatpush2.msra.mxu0 0.0
      %2919 = vmatprep.mubr.f32.mxu0 0.0
      %2920 = vmatmul.mubr.f32.gmra.mxu0 %v2669
      %v2921 = vpop.f32.mrf.mxu0
      %v2922 = vadd.f32 0.0, %v2921
      %v2923 = vpop.f32.mrf.mxu0
      %v2924 = vadd.f32 0.0, %v2923
      %2925 = vdwg.mxu0
      %2926 = vmatprep.subr.mxu0 %v1226
      %2927 = vmatpush1.msra.mxu0 %v1225
      %2928 = vmatprep.subr.mxu0 %v1222
      %2929 = vmatpush1.msra.mxu0 %v1221
      %2930 = vmatprep.subr.mxu0 %v1218
      %2931 = vmatpush1.msra.mxu0 %v1217
      %2932 = vmatprep.subr.mxu0 %v1214
      %2933 = vmatpush1.msra.mxu0 %v1213
      %2934 = vmatprep.subr.mxu0 %v1210
      %2935 = vmatpush1.msra.mxu0 %v1209
      %2936 = vmatprep.subr.mxu0 %v1206
      %2937 = vmatpush1.msra.mxu0 %v1205
      %2938 = vmatprep.subr.mxu0 %v1202
      %2939 = vmatpush1.msra.mxu0 %v1201
      %2940 = vmatprep.subr.mxu0 %v1198
      %2941 = vmatpush1.msra.mxu0 %v1197
      %2942 = vmatprep.subr.mxu0 %v1194
      %2943 = vmatpush1.msra.mxu0 %v1193
      %2944 = vmatprep.subr.mxu0 %v1190
      %2945 = vmatpush1.msra.mxu0 %v1189
      %2946 = vmatprep.subr.mxu0 %v1186
      %2947 = vmatpush1.msra.mxu0 %v1185
      %2948 = vmatprep.subr.mxu0 %v1182
      %2949 = vmatpush1.msra.mxu0 %v1181
      %2950 = vmatprep.subr.mxu0 %v1178
      %2951 = vmatpush1.msra.mxu0 %v1177
      %2952 = vmatprep.subr.mxu0 %v1174
      %2953 = vmatpush1.msra.mxu0 %v1173
      %2954 = vmatprep.subr.mxu0 %v1170
      %2955 = vmatpush1.msra.mxu0 %v1169
      %2956 = vmatprep.subr.mxu0 %v1166
      %2957 = vmatpush1.msra.mxu0 %v1165
      %2958 = vmatprep.subr.mxu0 0.0
      %2959 = vmatpush2.msra.mxu0 0.0
      %2960 = vmatprep.subr.mxu0 0.0
      %2961 = vmatpush2.msra.mxu0 0.0
      %2962 = vmatprep.subr.mxu0 0.0
      %2963 = vmatpush2.msra.mxu0 0.0
      %2964 = vmatprep.subr.mxu0 0.0
      %2965 = vmatpush2.msra.mxu0 0.0
      %2966 = vmatprep.subr.mxu0 0.0
      %2967 = vmatpush2.msra.mxu0 0.0
      %2968 = vmatprep.subr.mxu0 0.0
      %2969 = vmatpush2.msra.mxu0 0.0
      %2970 = vmatprep.subr.mxu0 0.0
      %2971 = vmatpush2.msra.mxu0 0.0
      %2972 = vmatprep.subr.mxu0 0.0
      %2973 = vmatpush2.msra.mxu0 0.0
      %2974 = vmatprep.subr.mxu0 0.0
      %2975 = vmatpush2.msra.mxu0 0.0
      %2976 = vmatprep.subr.mxu0 0.0
      %2977 = vmatpush2.msra.mxu0 0.0
      %2978 = vmatprep.subr.mxu0 0.0
      %2979 = vmatpush2.msra.mxu0 0.0
      %2980 = vmatprep.subr.mxu0 0.0
      %2981 = vmatpush2.msra.mxu0 0.0
      %2982 = vmatprep.subr.mxu0 0.0
      %2983 = vmatpush2.msra.mxu0 0.0
      %2984 = vmatprep.subr.mxu0 0.0
      %2985 = vmatpush2.msra.mxu0 0.0
      %2986 = vmatprep.subr.mxu0 0.0
      %2987 = vmatpush2.msra.mxu0 0.0
      %2988 = vmatprep.subr.mxu0 0.0
      %2989 = vmatpush2.msra.mxu0 0.0
      %2990 = vmatprep.mubr.f32.mxu0 0.0
      %2991 = vmatmul.mubr.f32.gmra.mxu0 %v2669
      %v2992 = vpop.f32.mrf.mxu0
      %v2993 = vadd.f32 0.0, %v2992
      %v2994 = vpop.f32.mrf.mxu0
      %v2995 = vadd.f32 0.0, %v2994
      %2996 = vdwg.mxu0
      %v2997 = vadd.f32 %v2851, %v2922
      %v2998 = vadd.f32 %v2852, %v2924
      %v2999 = vadd.f32 %v2853, %v2993
      %v3000 = vadd.f32 %v2854, %v2995
      %v3001 = vxor.u32 %v2997, 2147483648
      %v3002 = vmul.f32 %v3001, 1.442695
      %v3003 = vpow.pop %v3002
      %v3004 = vadd.f32 %v3003, 1.0
      %v3005 = vrcp.pop %v3004
      %v3006 = vmul.f32 1.0, %v3005
      %v3007 = vxor.u32 %v2998, 2147483648
      %v3008 = vmul.f32 %v3007, 1.442695
      %v3009 = vpow.pop %v3008
      %v3010 = vadd.f32 %v3009, 1.0
      %v3011 = vrcp.pop %v3010
      %v3012 = vmul.f32 1.0, %v3011
      %v3013 = vtanh.pop %v2999
      %v3014 = vxor.u32 %v3000, 2147483648
      %v3015 = vmul.f32 %v3014, 1.442695
      %v3016 = vpow.pop %v3015
      %v3017 = vadd.f32 %v3016, 1.0
      %v3018 = vrcp.pop %v3017
      %v3019 = vmul.f32 1.0, %v3018
      %v3020 = vmul.f32 %v3012, %v2670
      %v3021 = vmul.f32 %v3006, %v3013
      %v3022 = vadd.f32 %v3020, %v3021
      %v3023 = vtanh.pop %v3022
      %v3024 = vmul.f32 %v3019, %v3023
      %s3025 = sadd.s32 %s1581, 3
      %p3026 = scmp.lt.s32.totalorder %s3025, 12
      %s3027 = scalar_select %p3026, 1, 0
      %v3028 = vstv %s3027
      %vm3029 = vcmp.eq.s32.totalorder %v3028, 1
      %v3030 = vsel %vm3029, %v3024, %v2669
      %v3031 = vsel %vm3029, %v3022, %v2670
      %s3032 = scalar_lea.vmem %s421, 32
      %3033 = vst [vmem:[%s3032] sm:$0xff] %v2849
      %s3034 = scalar_lea.vmem %s431, 24
      %3035 = vst [vmem:[%s3034] sm:$0xff] %v3030
      %s3036 = scalar_lea.vmem [#allocation2], 160
      %v3037 = vld [vmem:[%s3036] sm:$0xff]
      %v3038 = vld [vmem:[%s3036 + $0x8] sm:$0xff]
      %v3039 = vld [vmem:[%s3036 + $0x10] sm:$0xff]
      %v3040 = vld [vmem:[%s3036 + $0x18] sm:$0xff]
      %3041 = vmatprep.subr.mxu0 %v1160
      %3042 = vmatpush1.msra.mxu0 %v1159
      %3043 = vmatprep.subr.mxu0 %v1156
      %3044 = vmatpush1.msra.mxu0 %v1155
      %3045 = vmatprep.subr.mxu0 %v1152
      %3046 = vmatpush1.msra.mxu0 %v1151
      %3047 = vmatprep.subr.mxu0 %v1148
      %3048 = vmatpush1.msra.mxu0 %v1147
      %3049 = vmatprep.subr.mxu0 %v1144
      %3050 = vmatpush1.msra.mxu0 %v1143
      %3051 = vmatprep.subr.mxu0 %v1140
      %3052 = vmatpush1.msra.mxu0 %v1139
      %3053 = vmatprep.subr.mxu0 %v1136
      %3054 = vmatpush1.msra.mxu0 %v1135
      %3055 = vmatprep.subr.mxu0 %v1132
      %3056 = vmatpush1.msra.mxu0 %v1131
      %3057 = vmatprep.subr.mxu0 %v1128
      %3058 = vmatpush1.msra.mxu0 %v1127
      %3059 = vmatprep.subr.mxu0 %v1124
      %3060 = vmatpush1.msra.mxu0 %v1123
      %3061 = vmatprep.subr.mxu0 %v1120
      %3062 = vmatpush1.msra.mxu0 %v1119
      %3063 = vmatprep.subr.mxu0 %v1116
      %3064 = vmatpush1.msra.mxu0 %v1115
      %3065 = vmatprep.subr.mxu0 %v1112
      %3066 = vmatpush1.msra.mxu0 %v1111
      %3067 = vmatprep.subr.mxu0 %v1108
      %3068 = vmatpush1.msra.mxu0 %v1107
      %3069 = vmatprep.subr.mxu0 %v1104
      %3070 = vmatpush1.msra.mxu0 %v1103
      %3071 = vmatprep.subr.mxu0 %v1100
      %3072 = vmatpush1.msra.mxu0 %v1099
      %3073 = vmatprep.subr.mxu0 0.0
      %3074 = vmatpush2.msra.mxu0 0.0
      %3075 = vmatprep.subr.mxu0 0.0
      %3076 = vmatpush2.msra.mxu0 0.0
      %3077 = vmatprep.subr.mxu0 0.0
      %3078 = vmatpush2.msra.mxu0 0.0
      %3079 = vmatprep.subr.mxu0 0.0
      %3080 = vmatpush2.msra.mxu0 0.0
      %3081 = vmatprep.subr.mxu0 0.0
      %3082 = vmatpush2.msra.mxu0 0.0
      %3083 = vmatprep.subr.mxu0 0.0
      %3084 = vmatpush2.msra.mxu0 0.0
      %3085 = vmatprep.subr.mxu0 0.0
      %3086 = vmatpush2.msra.mxu0 0.0
      %3087 = vmatprep.subr.mxu0 0.0
      %3088 = vmatpush2.msra.mxu0 0.0
      %3089 = vmatprep.subr.mxu0 0.0
      %3090 = vmatpush2.msra.mxu0 0.0
      %3091 = vmatprep.subr.mxu0 0.0
      %3092 = vmatpush2.msra.mxu0 0.0
      %3093 = vmatprep.subr.mxu0 0.0
      %3094 = vmatpush2.msra.mxu0 0.0
      %3095 = vmatprep.subr.mxu0 0.0
      %3096 = vmatpush2.msra.mxu0 0.0
      %3097 = vmatprep.subr.mxu0 0.0
      %3098 = vmatpush2.msra.mxu0 0.0
      %3099 = vmatprep.subr.mxu0 0.0
      %3100 = vmatpush2.msra.mxu0 0.0
      %3101 = vmatprep.subr.mxu0 0.0
      %3102 = vmatpush2.msra.mxu0 0.0
      %3103 = vmatprep.subr.mxu0 0.0
      %3104 = vmatpush2.msra.mxu0 0.0
      %3105 = vmatprep.mubr.f32.mxu0 0.0
      %3106 = vmatmul.mubr.f32.gmra.mxu0 %v2849
      %v3107 = vpop.f32.mrf.mxu0
      %v3108 = vadd.f32 0.0, %v3107
      %v3109 = vpop.f32.mrf.mxu0
      %v3110 = vadd.f32 0.0, %v3109
      %3111 = vdwg.mxu0
      %3112 = vmatprep.subr.mxu0 %v1162
      %3113 = vmatpush1.msra.mxu0 %v1161
      %3114 = vmatprep.subr.mxu0 %v1158
      %3115 = vmatpush1.msra.mxu0 %v1157
      %3116 = vmatprep.subr.mxu0 %v1154
      %3117 = vmatpush1.msra.mxu0 %v1153
      %3118 = vmatprep.subr.mxu0 %v1150
      %3119 = vmatpush1.msra.mxu0 %v1149
      %3120 = vmatprep.subr.mxu0 %v1146
      %3121 = vmatpush1.msra.mxu0 %v1145
      %3122 = vmatprep.subr.mxu0 %v1142
      %3123 = vmatpush1.msra.mxu0 %v1141
      %3124 = vmatprep.subr.mxu0 %v1138
      %3125 = vmatpush1.msra.mxu0 %v1137
      %3126 = vmatprep.subr.mxu0 %v1134
      %3127 = vmatpush1.msra.mxu0 %v1133
      %3128 = vmatprep.subr.mxu0 %v1130
      %3129 = vmatpush1.msra.mxu0 %v1129
      %3130 = vmatprep.subr.mxu0 %v1126
      %3131 = vmatpush1.msra.mxu0 %v1125
      %3132 = vmatprep.subr.mxu0 %v1122
      %3133 = vmatpush1.msra.mxu0 %v1121
      %3134 = vmatprep.subr.mxu0 %v1118
      %3135 = vmatpush1.msra.mxu0 %v1117
      %3136 = vmatprep.subr.mxu0 %v1114
      %3137 = vmatpush1.msra.mxu0 %v1113
      %3138 = vmatprep.subr.mxu0 %v1110
      %3139 = vmatpush1.msra.mxu0 %v1109
      %3140 = vmatprep.subr.mxu0 %v1106
      %3141 = vmatpush1.msra.mxu0 %v1105
      %3142 = vmatprep.subr.mxu0 %v1102
      %3143 = vmatpush1.msra.mxu0 %v1101
      %3144 = vmatprep.subr.mxu0 0.0
      %3145 = vmatpush2.msra.mxu0 0.0
      %3146 = vmatprep.subr.mxu0 0.0
      %3147 = vmatpush2.msra.mxu0 0.0
      %3148 = vmatprep.subr.mxu0 0.0
      %3149 = vmatpush2.msra.mxu0 0.0
      %3150 = vmatprep.subr.mxu0 0.0
      %3151 = vmatpush2.msra.mxu0 0.0
      %3152 = vmatprep.subr.mxu0 0.0
      %3153 = vmatpush2.msra.mxu0 0.0
      %3154 = vmatprep.subr.mxu0 0.0
      %3155 = vmatpush2.msra.mxu0 0.0
      %3156 = vmatprep.subr.mxu0 0.0
      %3157 = vmatpush2.msra.mxu0 0.0
      %3158 = vmatprep.subr.mxu0 0.0
      %3159 = vmatpush2.msra.mxu0 0.0
      %3160 = vmatprep.subr.mxu0 0.0
      %3161 = vmatpush2.msra.mxu0 0.0
      %3162 = vmatprep.subr.mxu0 0.0
      %3163 = vmatpush2.msra.mxu0 0.0
      %3164 = vmatprep.subr.mxu0 0.0
      %3165 = vmatpush2.msra.mxu0 0.0
      %3166 = vmatprep.subr.mxu0 0.0
      %3167 = vmatpush2.msra.mxu0 0.0
      %3168 = vmatprep.subr.mxu0 0.0
      %3169 = vmatpush2.msra.mxu0 0.0
      %3170 = vmatprep.subr.mxu0 0.0
      %3171 = vmatpush2.msra.mxu0 0.0
      %3172 = vmatprep.subr.mxu0 0.0
      %3173 = vmatpush2.msra.mxu0 0.0
      %3174 = vmatprep.subr.mxu0 0.0
      %3175 = vmatpush2.msra.mxu0 0.0
      %3176 = vmatprep.mubr.f32.mxu0 0.0
      %3177 = vmatmul.mubr.f32.gmra.mxu0 %v2849
      %v3178 = vpop.f32.mrf.mxu0
      %v3179 = vadd.f32 0.0, %v3178
      %v3180 = vpop.f32.mrf.mxu0
      %v3181 = vadd.f32 0.0, %v3180
      %3182 = vdwg.mxu0
      %v3183 = vadd.f32 %v3037, %v3108
      %v3184 = vadd.f32 %v3038, %v3110
      %v3185 = vadd.f32 %v3039, %v3179
      %v3186 = vadd.f32 %v3040, %v3181
      %v3187 = vxor.u32 %v3183, 2147483648
      %v3188 = vmul.f32 %v3187, 1.442695
      %v3189 = vpow.pop %v3188
      %v3190 = vadd.f32 %v3189, 1.0
      %v3191 = vrcp.pop %v3190
      %v3192 = vmul.f32 1.0, %v3191
      %v3193 = vxor.u32 %v3184, 2147483648
      %v3194 = vmul.f32 %v3193, 1.442695
      %v3195 = vpow.pop %v3194
      %v3196 = vadd.f32 %v3195, 1.0
      %v3197 = vrcp.pop %v3196
      %v3198 = vmul.f32 1.0, %v3197
      %v3199 = vtanh.pop %v3185
      %v3200 = vxor.u32 %v3186, 2147483648
      %v3201 = vmul.f32 %v3200, 1.442695
      %v3202 = vpow.pop %v3201
      %v3203 = vadd.f32 %v3202, 1.0
      %v3204 = vrcp.pop %v3203
      %v3205 = vmul.f32 1.0, %v3204
      %v3206 = vmul.f32 %v3198, %v2847
      %v3207 = vmul.f32 %v3192, %v3199
      %v3208 = vadd.f32 %v3206, %v3207
      %v3209 = vtanh.pop %v3208
      %v3210 = vmul.f32 %v3205, %v3209
      %s3211 = scalar_lea.vmem [#allocation3], 64
      %v3212 = vld [vmem:[%s3211] sm:$0xff]
      %v3213 = vld [vmem:[%s3211 + $0x8] sm:$0xff]
      %v3214 = vld [vmem:[%s3211 + $0x10] sm:$0xff]
      %v3215 = vld [vmem:[%s3211 + $0x18] sm:$0xff]
      %3216 = vmatprep.subr.mxu0 %v1224
      %3217 = vmatpush1.msra.mxu0 %v1223
      %3218 = vmatprep.subr.mxu0 %v1220
      %3219 = vmatpush1.msra.mxu0 %v1219
      %3220 = vmatprep.subr.mxu0 %v1216
      %3221 = vmatpush1.msra.mxu0 %v1215
      %3222 = vmatprep.subr.mxu0 %v1212
      %3223 = vmatpush1.msra.mxu0 %v1211
      %3224 = vmatprep.subr.mxu0 %v1208
      %3225 = vmatpush1.msra.mxu0 %v1207
      %3226 = vmatprep.subr.mxu0 %v1204
      %3227 = vmatpush1.msra.mxu0 %v1203
      %3228 = vmatprep.subr.mxu0 %v1200
      %3229 = vmatpush1.msra.mxu0 %v1199
      %3230 = vmatprep.subr.mxu0 %v1196
      %3231 = vmatpush1.msra.mxu0 %v1195
      %3232 = vmatprep.subr.mxu0 %v1192
      %3233 = vmatpush1.msra.mxu0 %v1191
      %3234 = vmatprep.subr.mxu0 %v1188
      %3235 = vmatpush1.msra.mxu0 %v1187
      %3236 = vmatprep.subr.mxu0 %v1184
      %3237 = vmatpush1.msra.mxu0 %v1183
      %3238 = vmatprep.subr.mxu0 %v1180
      %3239 = vmatpush1.msra.mxu0 %v1179
      %3240 = vmatprep.subr.mxu0 %v1176
      %3241 = vmatpush1.msra.mxu0 %v1175
      %3242 = vmatprep.subr.mxu0 %v1172
      %3243 = vmatpush1.msra.mxu0 %v1171
      %3244 = vmatprep.subr.mxu0 %v1168
      %3245 = vmatpush1.msra.mxu0 %v1167
      %3246 = vmatprep.subr.mxu0 %v1164
      %3247 = vmatpush1.msra.mxu0 %v1163
      %3248 = vmatprep.subr.mxu0 0.0
      %3249 = vmatpush2.msra.mxu0 0.0
      %3250 = vmatprep.subr.mxu0 0.0
      %3251 = vmatpush2.msra.mxu0 0.0
      %3252 = vmatprep.subr.mxu0 0.0
      %3253 = vmatpush2.msra.mxu0 0.0
      %3254 = vmatprep.subr.mxu0 0.0
      %3255 = vmatpush2.msra.mxu0 0.0
      %3256 = vmatprep.subr.mxu0 0.0
      %3257 = vmatpush2.msra.mxu0 0.0
      %3258 = vmatprep.subr.mxu0 0.0
      %3259 = vmatpush2.msra.mxu0 0.0
      %3260 = vmatprep.subr.mxu0 0.0
      %3261 = vmatpush2.msra.mxu0 0.0
      %3262 = vmatprep.subr.mxu0 0.0
      %3263 = vmatpush2.msra.mxu0 0.0
      %3264 = vmatprep.subr.mxu0 0.0
      %3265 = vmatpush2.msra.mxu0 0.0
      %3266 = vmatprep.subr.mxu0 0.0
      %3267 = vmatpush2.msra.mxu0 0.0
      %3268 = vmatprep.subr.mxu0 0.0
      %3269 = vmatpush2.msra.mxu0 0.0
      %3270 = vmatprep.subr.mxu0 0.0
      %3271 = vmatpush2.msra.mxu0 0.0
      %3272 = vmatprep.subr.mxu0 0.0
      %3273 = vmatpush2.msra.mxu0 0.0
      %3274 = vmatprep.subr.mxu0 0.0
      %3275 = vmatpush2.msra.mxu0 0.0
      %3276 = vmatprep.subr.mxu0 0.0
      %3277 = vmatpush2.msra.mxu0 0.0
      %3278 = vmatprep.subr.mxu0 0.0
      %3279 = vmatpush2.msra.mxu0 0.0
      %3280 = vmatprep.mubr.f32.mxu0 0.0
      %3281 = vmatmul.mubr.f32.gmra.mxu0 %v3030
      %v3282 = vpop.f32.mrf.mxu0
      %v3283 = vadd.f32 0.0, %v3282
      %v3284 = vpop.f32.mrf.mxu0
      %v3285 = vadd.f32 0.0, %v3284
      %3286 = vdwg.mxu0
      %3287 = vmatprep.subr.mxu0 %v1226
      %3288 = vmatpush1.msra.mxu0 %v1225
      %3289 = vmatprep.subr.mxu0 %v1222
      %3290 = vmatpush1.msra.mxu0 %v1221
      %3291 = vmatprep.subr.mxu0 %v1218
      %3292 = vmatpush1.msra.mxu0 %v1217
      %3293 = vmatprep.subr.mxu0 %v1214
      %3294 = vmatpush1.msra.mxu0 %v1213
      %3295 = vmatprep.subr.mxu0 %v1210
      %3296 = vmatpush1.msra.mxu0 %v1209
      %3297 = vmatprep.subr.mxu0 %v1206
      %3298 = vmatpush1.msra.mxu0 %v1205
      %3299 = vmatprep.subr.mxu0 %v1202
      %3300 = vmatpush1.msra.mxu0 %v1201
      %3301 = vmatprep.subr.mxu0 %v1198
      %3302 = vmatpush1.msra.mxu0 %v1197
      %3303 = vmatprep.subr.mxu0 %v1194
      %3304 = vmatpush1.msra.mxu0 %v1193
      %3305 = vmatprep.subr.mxu0 %v1190
      %3306 = vmatpush1.msra.mxu0 %v1189
      %3307 = vmatprep.subr.mxu0 %v1186
      %3308 = vmatpush1.msra.mxu0 %v1185
      %3309 = vmatprep.subr.mxu0 %v1182
      %3310 = vmatpush1.msra.mxu0 %v1181
      %3311 = vmatprep.subr.mxu0 %v1178
      %3312 = vmatpush1.msra.mxu0 %v1177
      %3313 = vmatprep.subr.mxu0 %v1174
      %3314 = vmatpush1.msra.mxu0 %v1173
      %3315 = vmatprep.subr.mxu0 %v1170
      %3316 = vmatpush1.msra.mxu0 %v1169
      %3317 = vmatprep.subr.mxu0 %v1166
      %3318 = vmatpush1.msra.mxu0 %v1165
      %3319 = vmatprep.subr.mxu0 0.0
      %3320 = vmatpush2.msra.mxu0 0.0
      %3321 = vmatprep.subr.mxu0 0.0
      %3322 = vmatpush2.msra.mxu0 0.0
      %3323 = vmatprep.subr.mxu0 0.0
      %3324 = vmatpush2.msra.mxu0 0.0
      %3325 = vmatprep.subr.mxu0 0.0
      %3326 = vmatpush2.msra.mxu0 0.0
      %3327 = vmatprep.subr.mxu0 0.0
      %3328 = vmatpush2.msra.mxu0 0.0
      %3329 = vmatprep.subr.mxu0 0.0
      %3330 = vmatpush2.msra.mxu0 0.0
      %3331 = vmatprep.subr.mxu0 0.0
      %3332 = vmatpush2.msra.mxu0 0.0
      %3333 = vmatprep.subr.mxu0 0.0
      %3334 = vmatpush2.msra.mxu0 0.0
      %3335 = vmatprep.subr.mxu0 0.0
      %3336 = vmatpush2.msra.mxu0 0.0
      %3337 = vmatprep.subr.mxu0 0.0
      %3338 = vmatpush2.msra.mxu0 0.0
      %3339 = vmatprep.subr.mxu0 0.0
      %3340 = vmatpush2.msra.mxu0 0.0
      %3341 = vmatprep.subr.mxu0 0.0
      %3342 = vmatpush2.msra.mxu0 0.0
      %3343 = vmatprep.subr.mxu0 0.0
      %3344 = vmatpush2.msra.mxu0 0.0
      %3345 = vmatprep.subr.mxu0 0.0
      %3346 = vmatpush2.msra.mxu0 0.0
      %3347 = vmatprep.subr.mxu0 0.0
      %3348 = vmatpush2.msra.mxu0 0.0
      %3349 = vmatprep.subr.mxu0 0.0
      %3350 = vmatpush2.msra.mxu0 0.0
      %3351 = vmatprep.mubr.f32.mxu0 0.0
      %3352 = vmatmul.mubr.f32.gmra.mxu0 %v3030
      %v3353 = vpop.f32.mrf.mxu0
      %v3354 = vadd.f32 0.0, %v3353
      %v3355 = vpop.f32.mrf.mxu0
      %v3356 = vadd.f32 0.0, %v3355
      %3357 = vdwg.mxu0
      %v3358 = vadd.f32 %v3212, %v3283
      %v3359 = vadd.f32 %v3213, %v3285
      %v3360 = vadd.f32 %v3214, %v3354
      %v3361 = vadd.f32 %v3215, %v3356
      %v3362 = vxor.u32 %v3358, 2147483648
      %v3363 = vmul.f32 %v3362, 1.442695
      %v3364 = vpow.pop %v3363
      %v3365 = vadd.f32 %v3364, 1.0
      %v3366 = vrcp.pop %v3365
      %v3367 = vmul.f32 1.0, %v3366
      %v3368 = vxor.u32 %v3359, 2147483648
      %v3369 = vmul.f32 %v3368, 1.442695
      %v3370 = vpow.pop %v3369
      %v3371 = vadd.f32 %v3370, 1.0
      %v3372 = vrcp.pop %v3371
      %v3373 = vmul.f32 1.0, %v3372
      %v3374 = vtanh.pop %v3360
      %v3375 = vxor.u32 %v3361, 2147483648
      %v3376 = vmul.f32 %v3375, 1.442695
      %v3377 = vpow.pop %v3376
      %v3378 = vadd.f32 %v3377, 1.0
      %v3379 = vrcp.pop %v3378
      %v3380 = vmul.f32 1.0, %v3379
      %v3381 = vmul.f32 %v3373, %v3031
      %v3382 = vmul.f32 %v3367, %v3374
      %v3383 = vadd.f32 %v3381, %v3382
      %v3384 = vtanh.pop %v3383
      %v3385 = vmul.f32 %v3380, %v3384
      %s3386 = sadd.s32 %s1581, 2
      %p3387 = scmp.lt.s32.totalorder %s3386, 12
      %s3388 = scalar_select %p3387, 1, 0
      %v3389 = vstv %s3388
      %vm3390 = vcmp.eq.s32.totalorder %v3389, 1
      %v3391 = vsel %vm3390, %v3385, %v3030
      %v3392 = vsel %vm3390, %v3383, %v3031
      %s3393 = scalar_lea.vmem %s421, 40
      %3394 = vst [vmem:[%s3393] sm:$0xff] %v3210
      %s3395 = scalar_lea.vmem %s431, 16
      %3396 = vst [vmem:[%s3395] sm:$0xff] %v3391
      %s3397 = scalar_lea.vmem [#allocation2], 192
      %v3398 = vld [vmem:[%s3397] sm:$0xff]
      %v3399 = vld [vmem:[%s3397 + $0x8] sm:$0xff]
      %v3400 = vld [vmem:[%s3397 + $0x10] sm:$0xff]
      %v3401 = vld [vmem:[%s3397 + $0x18] sm:$0xff]
      %3402 = vmatprep.subr.mxu0 %v1160
      %3403 = vmatpush1.msra.mxu0 %v1159
      %3404 = vmatprep.subr.mxu0 %v1156
      %3405 = vmatpush1.msra.mxu0 %v1155
      %3406 = vmatprep.subr.mxu0 %v1152
      %3407 = vmatpush1.msra.mxu0 %v1151
      %3408 = vmatprep.subr.mxu0 %v1148
      %3409 = vmatpush1.msra.mxu0 %v1147
      %3410 = vmatprep.subr.mxu0 %v1144
      %3411 = vmatpush1.msra.mxu0 %v1143
      %3412 = vmatprep.subr.mxu0 %v1140
      %3413 = vmatpush1.msra.mxu0 %v1139
      %3414 = vmatprep.subr.mxu0 %v1136
      %3415 = vmatpush1.msra.mxu0 %v1135
      %3416 = vmatprep.subr.mxu0 %v1132
      %3417 = vmatpush1.msra.mxu0 %v1131
      %3418 = vmatprep.subr.mxu0 %v1128
      %3419 = vmatpush1.msra.mxu0 %v1127
      %3420 = vmatprep.subr.mxu0 %v1124
      %3421 = vmatpush1.msra.mxu0 %v1123
      %3422 = vmatprep.subr.mxu0 %v1120
      %3423 = vmatpush1.msra.mxu0 %v1119
      %3424 = vmatprep.subr.mxu0 %v1116
      %3425 = vmatpush1.msra.mxu0 %v1115
      %3426 = vmatprep.subr.mxu0 %v1112
      %3427 = vmatpush1.msra.mxu0 %v1111
      %3428 = vmatprep.subr.mxu0 %v1108
      %3429 = vmatpush1.msra.mxu0 %v1107
      %3430 = vmatprep.subr.mxu0 %v1104
      %3431 = vmatpush1.msra.mxu0 %v1103
      %3432 = vmatprep.subr.mxu0 %v1100
      %3433 = vmatpush1.msra.mxu0 %v1099
      %3434 = vmatprep.subr.mxu0 0.0
      %3435 = vmatpush2.msra.mxu0 0.0
      %3436 = vmatprep.subr.mxu0 0.0
      %3437 = vmatpush2.msra.mxu0 0.0
      %3438 = vmatprep.subr.mxu0 0.0
      %3439 = vmatpush2.msra.mxu0 0.0
      %3440 = vmatprep.subr.mxu0 0.0
      %3441 = vmatpush2.msra.mxu0 0.0
      %3442 = vmatprep.subr.mxu0 0.0
      %3443 = vmatpush2.msra.mxu0 0.0
      %3444 = vmatprep.subr.mxu0 0.0
      %3445 = vmatpush2.msra.mxu0 0.0
      %3446 = vmatprep.subr.mxu0 0.0
      %3447 = vmatpush2.msra.mxu0 0.0
      %3448 = vmatprep.subr.mxu0 0.0
      %3449 = vmatpush2.msra.mxu0 0.0
      %3450 = vmatprep.subr.mxu0 0.0
      %3451 = vmatpush2.msra.mxu0 0.0
      %3452 = vmatprep.subr.mxu0 0.0
      %3453 = vmatpush2.msra.mxu0 0.0
      %3454 = vmatprep.subr.mxu0 0.0
      %3455 = vmatpush2.msra.mxu0 0.0
      %3456 = vmatprep.subr.mxu0 0.0
      %3457 = vmatpush2.msra.mxu0 0.0
      %3458 = vmatprep.subr.mxu0 0.0
      %3459 = vmatpush2.msra.mxu0 0.0
      %3460 = vmatprep.subr.mxu0 0.0
      %3461 = vmatpush2.msra.mxu0 0.0
      %3462 = vmatprep.subr.mxu0 0.0
      %3463 = vmatpush2.msra.mxu0 0.0
      %3464 = vmatprep.subr.mxu0 0.0
      %3465 = vmatpush2.msra.mxu0 0.0
      %3466 = vmatprep.mubr.f32.mxu0 0.0
      %3467 = vmatmul.mubr.f32.gmra.mxu0 %v3210
      %v3468 = vpop.f32.mrf.mxu0
      %v3469 = vadd.f32 0.0, %v3468
      %v3470 = vpop.f32.mrf.mxu0
      %v3471 = vadd.f32 0.0, %v3470
      %3472 = vdwg.mxu0
      %3473 = vmatprep.subr.mxu0 %v1162
      %3474 = vmatpush1.msra.mxu0 %v1161
      %3475 = vmatprep.subr.mxu0 %v1158
      %3476 = vmatpush1.msra.mxu0 %v1157
      %3477 = vmatprep.subr.mxu0 %v1154
      %3478 = vmatpush1.msra.mxu0 %v1153
      %3479 = vmatprep.subr.mxu0 %v1150
      %3480 = vmatpush1.msra.mxu0 %v1149
      %3481 = vmatprep.subr.mxu0 %v1146
      %3482 = vmatpush1.msra.mxu0 %v1145
      %3483 = vmatprep.subr.mxu0 %v1142
      %3484 = vmatpush1.msra.mxu0 %v1141
      %3485 = vmatprep.subr.mxu0 %v1138
      %3486 = vmatpush1.msra.mxu0 %v1137
      %3487 = vmatprep.subr.mxu0 %v1134
      %3488 = vmatpush1.msra.mxu0 %v1133
      %3489 = vmatprep.subr.mxu0 %v1130
      %3490 = vmatpush1.msra.mxu0 %v1129
      %3491 = vmatprep.subr.mxu0 %v1126
      %3492 = vmatpush1.msra.mxu0 %v1125
      %3493 = vmatprep.subr.mxu0 %v1122
      %3494 = vmatpush1.msra.mxu0 %v1121
      %3495 = vmatprep.subr.mxu0 %v1118
      %3496 = vmatpush1.msra.mxu0 %v1117
      %3497 = vmatprep.subr.mxu0 %v1114
      %3498 = vmatpush1.msra.mxu0 %v1113
      %3499 = vmatprep.subr.mxu0 %v1110
      %3500 = vmatpush1.msra.mxu0 %v1109
      %3501 = vmatprep.subr.mxu0 %v1106
      %3502 = vmatpush1.msra.mxu0 %v1105
      %3503 = vmatprep.subr.mxu0 %v1102
      %3504 = vmatpush1.msra.mxu0 %v1101
      %3505 = vmatprep.subr.mxu0 0.0
      %3506 = vmatpush2.msra.mxu0 0.0
      %3507 = vmatprep.subr.mxu0 0.0
      %3508 = vmatpush2.msra.mxu0 0.0
      %3509 = vmatprep.subr.mxu0 0.0
      %3510 = vmatpush2.msra.mxu0 0.0
      %3511 = vmatprep.subr.mxu0 0.0
      %3512 = vmatpush2.msra.mxu0 0.0
      %3513 = vmatprep.subr.mxu0 0.0
      %3514 = vmatpush2.msra.mxu0 0.0
      %3515 = vmatprep.subr.mxu0 0.0
      %3516 = vmatpush2.msra.mxu0 0.0
      %3517 = vmatprep.subr.mxu0 0.0
      %3518 = vmatpush2.msra.mxu0 0.0
      %3519 = vmatprep.subr.mxu0 0.0
      %3520 = vmatpush2.msra.mxu0 0.0
      %3521 = vmatprep.subr.mxu0 0.0
      %3522 = vmatpush2.msra.mxu0 0.0
      %3523 = vmatprep.subr.mxu0 0.0
      %3524 = vmatpush2.msra.mxu0 0.0
      %3525 = vmatprep.subr.mxu0 0.0
      %3526 = vmatpush2.msra.mxu0 0.0
      %3527 = vmatprep.subr.mxu0 0.0
      %3528 = vmatpush2.msra.mxu0 0.0
      %3529 = vmatprep.subr.mxu0 0.0
      %3530 = vmatpush2.msra.mxu0 0.0
      %3531 = vmatprep.subr.mxu0 0.0
      %3532 = vmatpush2.msra.mxu0 0.0
      %3533 = vmatprep.subr.mxu0 0.0
      %3534 = vmatpush2.msra.mxu0 0.0
      %3535 = vmatprep.subr.mxu0 0.0
      %3536 = vmatpush2.msra.mxu0 0.0
      %3537 = vmatprep.mubr.f32.mxu0 0.0
      %3538 = vmatmul.mubr.f32.gmra.mxu0 %v3210
      %v3539 = vpop.f32.mrf.mxu0
      %v3540 = vadd.f32 0.0, %v3539
      %v3541 = vpop.f32.mrf.mxu0
      %v3542 = vadd.f32 0.0, %v3541
      %3543 = vdwg.mxu0
      %v3544 = vadd.f32 %v3398, %v3469
      %v3545 = vadd.f32 %v3399, %v3471
      %v3546 = vadd.f32 %v3400, %v3540
      %v3547 = vadd.f32 %v3401, %v3542
      %v3548 = vxor.u32 %v3544, 2147483648
      %v3549 = vmul.f32 %v3548, 1.442695
      %v3550 = vpow.pop %v3549
      %v3551 = vadd.f32 %v3550, 1.0
      %v3552 = vrcp.pop %v3551
      %v3553 = vmul.f32 1.0, %v3552
      %v3554 = vxor.u32 %v3545, 2147483648
      %v3555 = vmul.f32 %v3554, 1.442695
      %v3556 = vpow.pop %v3555
      %v3557 = vadd.f32 %v3556, 1.0
      %v3558 = vrcp.pop %v3557
      %v3559 = vmul.f32 1.0, %v3558
      %v3560 = vtanh.pop %v3546
      %v3561 = vxor.u32 %v3547, 2147483648
      %v3562 = vmul.f32 %v3561, 1.442695
      %v3563 = vpow.pop %v3562
      %v3564 = vadd.f32 %v3563, 1.0
      %v3565 = vrcp.pop %v3564
      %v3566 = vmul.f32 1.0, %v3565
      %v3567 = vmul.f32 %v3559, %v3208
      %v3568 = vmul.f32 %v3553, %v3560
      %v3569 = vadd.f32 %v3567, %v3568
      %v3570 = vtanh.pop %v3569
      %v3571 = vmul.f32 %v3566, %v3570
      %s3572 = scalar_lea.vmem [#allocation3], 32
      %v3573 = vld [vmem:[%s3572] sm:$0xff]
      %v3574 = vld [vmem:[%s3572 + $0x8] sm:$0xff]
      %v3575 = vld [vmem:[%s3572 + $0x10] sm:$0xff]
      %v3576 = vld [vmem:[%s3572 + $0x18] sm:$0xff]
      %3577 = vmatprep.subr.mxu0 %v1224
      %3578 = vmatpush1.msra.mxu0 %v1223
      %3579 = vmatprep.subr.mxu0 %v1220
      %3580 = vmatpush1.msra.mxu0 %v1219
      %3581 = vmatprep.subr.mxu0 %v1216
      %3582 = vmatpush1.msra.mxu0 %v1215
      %3583 = vmatprep.subr.mxu0 %v1212
      %3584 = vmatpush1.msra.mxu0 %v1211
      %3585 = vmatprep.subr.mxu0 %v1208
      %3586 = vmatpush1.msra.mxu0 %v1207
      %3587 = vmatprep.subr.mxu0 %v1204
      %3588 = vmatpush1.msra.mxu0 %v1203
      %3589 = vmatprep.subr.mxu0 %v1200
      %3590 = vmatpush1.msra.mxu0 %v1199
      %3591 = vmatprep.subr.mxu0 %v1196
      %3592 = vmatpush1.msra.mxu0 %v1195
      %3593 = vmatprep.subr.mxu0 %v1192
      %3594 = vmatpush1.msra.mxu0 %v1191
      %3595 = vmatprep.subr.mxu0 %v1188
      %3596 = vmatpush1.msra.mxu0 %v1187
      %3597 = vmatprep.subr.mxu0 %v1184
      %3598 = vmatpush1.msra.mxu0 %v1183
      %3599 = vmatprep.subr.mxu0 %v1180
      %3600 = vmatpush1.msra.mxu0 %v1179
      %3601 = vmatprep.subr.mxu0 %v1176
      %3602 = vmatpush1.msra.mxu0 %v1175
      %3603 = vmatprep.subr.mxu0 %v1172
      %3604 = vmatpush1.msra.mxu0 %v1171
      %3605 = vmatprep.subr.mxu0 %v1168
      %3606 = vmatpush1.msra.mxu0 %v1167
      %3607 = vmatprep.subr.mxu0 %v1164
      %3608 = vmatpush1.msra.mxu0 %v1163
      %3609 = vmatprep.subr.mxu0 0.0
      %3610 = vmatpush2.msra.mxu0 0.0
      %3611 = vmatprep.subr.mxu0 0.0
      %3612 = vmatpush2.msra.mxu0 0.0
      %3613 = vmatprep.subr.mxu0 0.0
      %3614 = vmatpush2.msra.mxu0 0.0
      %3615 = vmatprep.subr.mxu0 0.0
      %3616 = vmatpush2.msra.mxu0 0.0
      %3617 = vmatprep.subr.mxu0 0.0
      %3618 = vmatpush2.msra.mxu0 0.0
      %3619 = vmatprep.subr.mxu0 0.0
      %3620 = vmatpush2.msra.mxu0 0.0
      %3621 = vmatprep.subr.mxu0 0.0
      %3622 = vmatpush2.msra.mxu0 0.0
      %3623 = vmatprep.subr.mxu0 0.0
      %3624 = vmatpush2.msra.mxu0 0.0
      %3625 = vmatprep.subr.mxu0 0.0
      %3626 = vmatpush2.msra.mxu0 0.0
      %3627 = vmatprep.subr.mxu0 0.0
      %3628 = vmatpush2.msra.mxu0 0.0
      %3629 = vmatprep.subr.mxu0 0.0
      %3630 = vmatpush2.msra.mxu0 0.0
      %3631 = vmatprep.subr.mxu0 0.0
      %3632 = vmatpush2.msra.mxu0 0.0
      %3633 = vmatprep.subr.mxu0 0.0
      %3634 = vmatpush2.msra.mxu0 0.0
      %3635 = vmatprep.subr.mxu0 0.0
      %3636 = vmatpush2.msra.mxu0 0.0
      %3637 = vmatprep.subr.mxu0 0.0
      %3638 = vmatpush2.msra.mxu0 0.0
      %3639 = vmatprep.subr.mxu0 0.0
      %3640 = vmatpush2.msra.mxu0 0.0
      %3641 = vmatprep.mubr.f32.mxu0 0.0
      %3642 = vmatmul.mubr.f32.gmra.mxu0 %v3391
      %v3643 = vpop.f32.mrf.mxu0
      %v3644 = vadd.f32 0.0, %v3643
      %v3645 = vpop.f32.mrf.mxu0
      %v3646 = vadd.f32 0.0, %v3645
      %3647 = vdwg.mxu0
      %3648 = vmatprep.subr.mxu0 %v1226
      %3649 = vmatpush1.msra.mxu0 %v1225
      %3650 = vmatprep.subr.mxu0 %v1222
      %3651 = vmatpush1.msra.mxu0 %v1221
      %3652 = vmatprep.subr.mxu0 %v1218
      %3653 = vmatpush1.msra.mxu0 %v1217
      %3654 = vmatprep.subr.mxu0 %v1214
      %3655 = vmatpush1.msra.mxu0 %v1213
      %3656 = vmatprep.subr.mxu0 %v1210
      %3657 = vmatpush1.msra.mxu0 %v1209
      %3658 = vmatprep.subr.mxu0 %v1206
      %3659 = vmatpush1.msra.mxu0 %v1205
      %3660 = vmatprep.subr.mxu0 %v1202
      %3661 = vmatpush1.msra.mxu0 %v1201
      %3662 = vmatprep.subr.mxu0 %v1198
      %3663 = vmatpush1.msra.mxu0 %v1197
      %3664 = vmatprep.subr.mxu0 %v1194
      %3665 = vmatpush1.msra.mxu0 %v1193
      %3666 = vmatprep.subr.mxu0 %v1190
      %3667 = vmatpush1.msra.mxu0 %v1189
      %3668 = vmatprep.subr.mxu0 %v1186
      %3669 = vmatpush1.msra.mxu0 %v1185
      %3670 = vmatprep.subr.mxu0 %v1182
      %3671 = vmatpush1.msra.mxu0 %v1181
      %3672 = vmatprep.subr.mxu0 %v1178
      %3673 = vmatpush1.msra.mxu0 %v1177
      %3674 = vmatprep.subr.mxu0 %v1174
      %3675 = vmatpush1.msra.mxu0 %v1173
      %3676 = vmatprep.subr.mxu0 %v1170
      %3677 = vmatpush1.msra.mxu0 %v1169
      %3678 = vmatprep.subr.mxu0 %v1166
      %3679 = vmatpush1.msra.mxu0 %v1165
      %3680 = vmatprep.subr.mxu0 0.0
      %3681 = vmatpush2.msra.mxu0 0.0
      %3682 = vmatprep.subr.mxu0 0.0
      %3683 = vmatpush2.msra.mxu0 0.0
      %3684 = vmatprep.subr.mxu0 0.0
      %3685 = vmatpush2.msra.mxu0 0.0
      %3686 = vmatprep.subr.mxu0 0.0
      %3687 = vmatpush2.msra.mxu0 0.0
      %3688 = vmatprep.subr.mxu0 0.0
      %3689 = vmatpush2.msra.mxu0 0.0
      %3690 = vmatprep.subr.mxu0 0.0
      %3691 = vmatpush2.msra.mxu0 0.0
      %3692 = vmatprep.subr.mxu0 0.0
      %3693 = vmatpush2.msra.mxu0 0.0
      %3694 = vmatprep.subr.mxu0 0.0
      %3695 = vmatpush2.msra.mxu0 0.0
      %3696 = vmatprep.subr.mxu0 0.0
      %3697 = vmatpush2.msra.mxu0 0.0
      %3698 = vmatprep.subr.mxu0 0.0
      %3699 = vmatpush2.msra.mxu0 0.0
      %3700 = vmatprep.subr.mxu0 0.0
      %3701 = vmatpush2.msra.mxu0 0.0
      %3702 = vmatprep.subr.mxu0 0.0
      %3703 = vmatpush2.msra.mxu0 0.0
      %3704 = vmatprep.subr.mxu0 0.0
      %3705 = vmatpush2.msra.mxu0 0.0
      %3706 = vmatprep.subr.mxu0 0.0
      %3707 = vmatpush2.msra.mxu0 0.0
      %3708 = vmatprep.subr.mxu0 0.0
      %3709 = vmatpush2.msra.mxu0 0.0
      %3710 = vmatprep.subr.mxu0 0.0
      %3711 = vmatpush2.msra.mxu0 0.0
      %3712 = vmatprep.mubr.f32.mxu0 0.0
      %3713 = vmatmul.mubr.f32.gmra.mxu0 %v3391
      %v3714 = vpop.f32.mrf.mxu0
      %v3715 = vadd.f32 0.0, %v3714
      %v3716 = vpop.f32.mrf.mxu0
      %v3717 = vadd.f32 0.0, %v3716
      %3718 = vdwg.mxu0
      %v3719 = vadd.f32 %v3573, %v3644
      %v3720 = vadd.f32 %v3574, %v3646
      %v3721 = vadd.f32 %v3575, %v3715
      %v3722 = vadd.f32 %v3576, %v3717
      %v3723 = vxor.u32 %v3719, 2147483648
      %v3724 = vmul.f32 %v3723, 1.442695
      %v3725 = vpow.pop %v3724
      %v3726 = vadd.f32 %v3725, 1.0
      %v3727 = vrcp.pop %v3726
      %v3728 = vmul.f32 1.0, %v3727
      %v3729 = vxor.u32 %v3720, 2147483648
      %v3730 = vmul.f32 %v3729, 1.442695
      %v3731 = vpow.pop %v3730
      %v3732 = vadd.f32 %v3731, 1.0
      %v3733 = vrcp.pop %v3732
      %v3734 = vmul.f32 1.0, %v3733
      %v3735 = vtanh.pop %v3721
      %v3736 = vxor.u32 %v3722, 2147483648
      %v3737 = vmul.f32 %v3736, 1.442695
      %v3738 = vpow.pop %v3737
      %v3739 = vadd.f32 %v3738, 1.0
      %v3740 = vrcp.pop %v3739
      %v3741 = vmul.f32 1.0, %v3740
      %v3742 = vmul.f32 %v3734, %v3392
      %v3743 = vmul.f32 %v3728, %v3735
      %v3744 = vadd.f32 %v3742, %v3743
      %v3745 = vtanh.pop %v3744
      %v3746 = vmul.f32 %v3741, %v3745
      %s3747 = sadd.s32 %s1581, 1
      %p3748 = scmp.lt.s32.totalorder %s3747, 12
      %s3749 = scalar_select %p3748, 1, 0
      %v3750 = vstv %s3749
      %vm3751 = vcmp.eq.s32.totalorder %v3750, 1
      %v3752 = vsel %vm3751, %v3746, %v3391
      %v3753 = vsel %vm3751, %v3744, %v3392
      %s3754 = scalar_lea.vmem %s421, 48
      %3755 = vst [vmem:[%s3754] sm:$0xff] %v3571
      %s3756 = scalar_lea.vmem %s431, 8
      %3757 = vst [vmem:[%s3756] sm:$0xff] %v3752
      %s3758 = scalar_lea.vmem [#allocation2], 224
      %v3759 = vld [vmem:[%s3758] sm:$0xff]
      %v3760 = vld [vmem:[%s3758 + $0x8] sm:$0xff]
      %v3761 = vld [vmem:[%s3758 + $0x10] sm:$0xff]
      %v3762 = vld [vmem:[%s3758 + $0x18] sm:$0xff]
      %3763 = vmatprep.subr.mxu0 %v1160
      %3764 = vmatpush1.msra.mxu0 %v1159
      %3765 = vmatprep.subr.mxu0 %v1156
      %3766 = vmatpush1.msra.mxu0 %v1155
      %3767 = vmatprep.subr.mxu0 %v1152
      %3768 = vmatpush1.msra.mxu0 %v1151
      %3769 = vmatprep.subr.mxu0 %v1148
      %3770 = vmatpush1.msra.mxu0 %v1147
      %3771 = vmatprep.subr.mxu0 %v1144
      %3772 = vmatpush1.msra.mxu0 %v1143
      %3773 = vmatprep.subr.mxu0 %v1140
      %3774 = vmatpush1.msra.mxu0 %v1139
      %3775 = vmatprep.subr.mxu0 %v1136
      %3776 = vmatpush1.msra.mxu0 %v1135
      %3777 = vmatprep.subr.mxu0 %v1132
      %3778 = vmatpush1.msra.mxu0 %v1131
      %3779 = vmatprep.subr.mxu0 %v1128
      %3780 = vmatpush1.msra.mxu0 %v1127
      %3781 = vmatprep.subr.mxu0 %v1124
      %3782 = vmatpush1.msra.mxu0 %v1123
      %3783 = vmatprep.subr.mxu0 %v1120
      %3784 = vmatpush1.msra.mxu0 %v1119
      %3785 = vmatprep.subr.mxu0 %v1116
      %3786 = vmatpush1.msra.mxu0 %v1115
      %3787 = vmatprep.subr.mxu0 %v1112
      %3788 = vmatpush1.msra.mxu0 %v1111
      %3789 = vmatprep.subr.mxu0 %v1108
      %3790 = vmatpush1.msra.mxu0 %v1107
      %3791 = vmatprep.subr.mxu0 %v1104
      %3792 = vmatpush1.msra.mxu0 %v1103
      %3793 = vmatprep.subr.mxu0 %v1100
      %3794 = vmatpush1.msra.mxu0 %v1099
      %3795 = vmatprep.subr.mxu0 0.0
      %3796 = vmatpush2.msra.mxu0 0.0
      %3797 = vmatprep.subr.mxu0 0.0
      %3798 = vmatpush2.msra.mxu0 0.0
      %3799 = vmatprep.subr.mxu0 0.0
      %3800 = vmatpush2.msra.mxu0 0.0
      %3801 = vmatprep.subr.mxu0 0.0
      %3802 = vmatpush2.msra.mxu0 0.0
      %3803 = vmatprep.subr.mxu0 0.0
      %3804 = vmatpush2.msra.mxu0 0.0
      %3805 = vmatprep.subr.mxu0 0.0
      %3806 = vmatpush2.msra.mxu0 0.0
      %3807 = vmatprep.subr.mxu0 0.0
      %3808 = vmatpush2.msra.mxu0 0.0
      %3809 = vmatprep.subr.mxu0 0.0
      %3810 = vmatpush2.msra.mxu0 0.0
      %3811 = vmatprep.subr.mxu0 0.0
      %3812 = vmatpush2.msra.mxu0 0.0
      %3813 = vmatprep.subr.mxu0 0.0
      %3814 = vmatpush2.msra.mxu0 0.0
      %3815 = vmatprep.subr.mxu0 0.0
      %3816 = vmatpush2.msra.mxu0 0.0
      %3817 = vmatprep.subr.mxu0 0.0
      %3818 = vmatpush2.msra.mxu0 0.0
      %3819 = vmatprep.subr.mxu0 0.0
      %3820 = vmatpush2.msra.mxu0 0.0
      %3821 = vmatprep.subr.mxu0 0.0
      %3822 = vmatpush2.msra.mxu0 0.0
      %3823 = vmatprep.subr.mxu0 0.0
      %3824 = vmatpush2.msra.mxu0 0.0
      %3825 = vmatprep.subr.mxu0 0.0
      %3826 = vmatpush2.msra.mxu0 0.0
      %3827 = vmatprep.mubr.f32.mxu0 0.0
      %3828 = vmatmul.mubr.f32.gmra.mxu0 %v3571
      %v3829 = vpop.f32.mrf.mxu0
      %v3830 = vadd.f32 0.0, %v3829
      %v3831 = vpop.f32.mrf.mxu0
      %v3832 = vadd.f32 0.0, %v3831
      %3833 = vdwg.mxu0
      %3834 = vmatprep.subr.mxu0 %v1162
      %3835 = vmatpush1.msra.mxu0 %v1161
      %3836 = vmatprep.subr.mxu0 %v1158
      %3837 = vmatpush1.msra.mxu0 %v1157
      %3838 = vmatprep.subr.mxu0 %v1154
      %3839 = vmatpush1.msra.mxu0 %v1153
      %3840 = vmatprep.subr.mxu0 %v1150
      %3841 = vmatpush1.msra.mxu0 %v1149
      %3842 = vmatprep.subr.mxu0 %v1146
      %3843 = vmatpush1.msra.mxu0 %v1145
      %3844 = vmatprep.subr.mxu0 %v1142
      %3845 = vmatpush1.msra.mxu0 %v1141
      %3846 = vmatprep.subr.mxu0 %v1138
      %3847 = vmatpush1.msra.mxu0 %v1137
      %3848 = vmatprep.subr.mxu0 %v1134
      %3849 = vmatpush1.msra.mxu0 %v1133
      %3850 = vmatprep.subr.mxu0 %v1130
      %3851 = vmatpush1.msra.mxu0 %v1129
      %3852 = vmatprep.subr.mxu0 %v1126
      %3853 = vmatpush1.msra.mxu0 %v1125
      %3854 = vmatprep.subr.mxu0 %v1122
      %3855 = vmatpush1.msra.mxu0 %v1121
      %3856 = vmatprep.subr.mxu0 %v1118
      %3857 = vmatpush1.msra.mxu0 %v1117
      %3858 = vmatprep.subr.mxu0 %v1114
      %3859 = vmatpush1.msra.mxu0 %v1113
      %3860 = vmatprep.subr.mxu0 %v1110
      %3861 = vmatpush1.msra.mxu0 %v1109
      %3862 = vmatprep.subr.mxu0 %v1106
      %3863 = vmatpush1.msra.mxu0 %v1105
      %3864 = vmatprep.subr.mxu0 %v1102
      %3865 = vmatpush1.msra.mxu0 %v1101
      %3866 = vmatprep.subr.mxu0 0.0
      %3867 = vmatpush2.msra.mxu0 0.0
      %3868 = vmatprep.subr.mxu0 0.0
      %3869 = vmatpush2.msra.mxu0 0.0
      %3870 = vmatprep.subr.mxu0 0.0
      %3871 = vmatpush2.msra.mxu0 0.0
      %3872 = vmatprep.subr.mxu0 0.0
      %3873 = vmatpush2.msra.mxu0 0.0
      %3874 = vmatprep.subr.mxu0 0.0
      %3875 = vmatpush2.msra.mxu0 0.0
      %3876 = vmatprep.subr.mxu0 0.0
      %3877 = vmatpush2.msra.mxu0 0.0
      %3878 = vmatprep.subr.mxu0 0.0
      %3879 = vmatpush2.msra.mxu0 0.0
      %3880 = vmatprep.subr.mxu0 0.0
      %3881 = vmatpush2.msra.mxu0 0.0
      %3882 = vmatprep.subr.mxu0 0.0
      %3883 = vmatpush2.msra.mxu0 0.0
      %3884 = vmatprep.subr.mxu0 0.0
      %3885 = vmatpush2.msra.mxu0 0.0
      %3886 = vmatprep.subr.mxu0 0.0
      %3887 = vmatpush2.msra.mxu0 0.0
      %3888 = vmatprep.subr.mxu0 0.0
      %3889 = vmatpush2.msra.mxu0 0.0
      %3890 = vmatprep.subr.mxu0 0.0
      %3891 = vmatpush2.msra.mxu0 0.0
      %3892 = vmatprep.subr.mxu0 0.0
      %3893 = vmatpush2.msra.mxu0 0.0
      %3894 = vmatprep.subr.mxu0 0.0
      %3895 = vmatpush2.msra.mxu0 0.0
      %3896 = vmatprep.subr.mxu0 0.0
      %3897 = vmatpush2.msra.mxu0 0.0
      %3898 = vmatprep.mubr.f32.mxu0 0.0
      %3899 = vmatmul.mubr.f32.gmra.mxu0 %v3571
      %v3900 = vpop.f32.mrf.mxu0
      %v3901 = vadd.f32 0.0, %v3900
      %v3902 = vpop.f32.mrf.mxu0
      %v3903 = vadd.f32 0.0, %v3902
      %3904 = vdwg.mxu0
      %v3905 = vadd.f32 %v3759, %v3830
      %v3906 = vadd.f32 %v3760, %v3832
      %v3907 = vadd.f32 %v3761, %v3901
      %v3908 = vadd.f32 %v3762, %v3903
      %v3909 = vxor.u32 %v3905, 2147483648
      %v3910 = vmul.f32 %v3909, 1.442695
      %v3911 = vpow.pop %v3910
      %v3912 = vadd.f32 %v3911, 1.0
      %v3913 = vrcp.pop %v3912
      %v3914 = vmul.f32 1.0, %v3913
      %v3915 = vxor.u32 %v3906, 2147483648
      %v3916 = vmul.f32 %v3915, 1.442695
      %v3917 = vpow.pop %v3916
      %v3918 = vadd.f32 %v3917, 1.0
      %v3919 = vrcp.pop %v3918
      %v3920 = vmul.f32 1.0, %v3919
      %v3921 = vtanh.pop %v3907
      %v3922 = vxor.u32 %v3908, 2147483648
      %v3923 = vmul.f32 %v3922, 1.442695
      %v3924 = vpow.pop %v3923
      %v3925 = vadd.f32 %v3924, 1.0
      %v3926 = vrcp.pop %v3925
      %v3927 = vmul.f32 1.0, %v3926
      %v3928 = vmul.f32 %v3920, %v3569
      %v3929 = vmul.f32 %v3914, %v3921
      %v3930 = vadd.f32 %v3928, %v3929
      %v3931 = vtanh.pop %v3930
      %v3932 = vmul.f32 %v3927, %v3931
      %v3933 = vld [vmem:[#allocation3] sm:$0xff]
      %v3934 = vld [vmem:[#allocation3 + $0x8] sm:$0xff]
      %v3935 = vld [vmem:[#allocation3 + $0x10] sm:$0xff]
      %v3936 = vld [vmem:[#allocation3 + $0x18] sm:$0xff]
      %3937 = vmatprep.subr.mxu0 %v1224
      %3938 = vmatpush1.msra.mxu0 %v1223
      %3939 = vmatprep.subr.mxu0 %v1220
      %3940 = vmatpush1.msra.mxu0 %v1219
      %3941 = vmatprep.subr.mxu0 %v1216
      %3942 = vmatpush1.msra.mxu0 %v1215
      %3943 = vmatprep.subr.mxu0 %v1212
      %3944 = vmatpush1.msra.mxu0 %v1211
      %3945 = vmatprep.subr.mxu0 %v1208
      %3946 = vmatpush1.msra.mxu0 %v1207
      %3947 = vmatprep.subr.mxu0 %v1204
      %3948 = vmatpush1.msra.mxu0 %v1203
      %3949 = vmatprep.subr.mxu0 %v1200
      %3950 = vmatpush1.msra.mxu0 %v1199
      %3951 = vmatprep.subr.mxu0 %v1196
      %3952 = vmatpush1.msra.mxu0 %v1195
      %3953 = vmatprep.subr.mxu0 %v1192
      %3954 = vmatpush1.msra.mxu0 %v1191
      %3955 = vmatprep.subr.mxu0 %v1188
      %3956 = vmatpush1.msra.mxu0 %v1187
      %3957 = vmatprep.subr.mxu0 %v1184
      %3958 = vmatpush1.msra.mxu0 %v1183
      %3959 = vmatprep.subr.mxu0 %v1180
      %3960 = vmatpush1.msra.mxu0 %v1179
      %3961 = vmatprep.subr.mxu0 %v1176
      %3962 = vmatpush1.msra.mxu0 %v1175
      %3963 = vmatprep.subr.mxu0 %v1172
      %3964 = vmatpush1.msra.mxu0 %v1171
      %3965 = vmatprep.subr.mxu0 %v1168
      %3966 = vmatpush1.msra.mxu0 %v1167
      %3967 = vmatprep.subr.mxu0 %v1164
      %3968 = vmatpush1.msra.mxu0 %v1163
      %3969 = vmatprep.subr.mxu0 0.0
      %3970 = vmatpush2.msra.mxu0 0.0
      %3971 = vmatprep.subr.mxu0 0.0
      %3972 = vmatpush2.msra.mxu0 0.0
      %3973 = vmatprep.subr.mxu0 0.0
      %3974 = vmatpush2.msra.mxu0 0.0
      %3975 = vmatprep.subr.mxu0 0.0
      %3976 = vmatpush2.msra.mxu0 0.0
      %3977 = vmatprep.subr.mxu0 0.0
      %3978 = vmatpush2.msra.mxu0 0.0
      %3979 = vmatprep.subr.mxu0 0.0
      %3980 = vmatpush2.msra.mxu0 0.0
      %3981 = vmatprep.subr.mxu0 0.0
      %3982 = vmatpush2.msra.mxu0 0.0
      %3983 = vmatprep.subr.mxu0 0.0
      %3984 = vmatpush2.msra.mxu0 0.0
      %3985 = vmatprep.subr.mxu0 0.0
      %3986 = vmatpush2.msra.mxu0 0.0
      %3987 = vmatprep.subr.mxu0 0.0
      %3988 = vmatpush2.msra.mxu0 0.0
      %3989 = vmatprep.subr.mxu0 0.0
      %3990 = vmatpush2.msra.mxu0 0.0
      %3991 = vmatprep.subr.mxu0 0.0
      %3992 = vmatpush2.msra.mxu0 0.0
      %3993 = vmatprep.subr.mxu0 0.0
      %3994 = vmatpush2.msra.mxu0 0.0
      %3995 = vmatprep.subr.mxu0 0.0
      %3996 = vmatpush2.msra.mxu0 0.0
      %3997 = vmatprep.subr.mxu0 0.0
      %3998 = vmatpush2.msra.mxu0 0.0
      %3999 = vmatprep.subr.mxu0 0.0
      %4000 = vmatpush2.msra.mxu0 0.0
      %4001 = vmatprep.mubr.f32.mxu0 0.0
      %4002 = vmatmul.mubr.f32.gmra.mxu0 %v3752
      %v4003 = vpop.f32.mrf.mxu0
      %v4004 = vadd.f32 0.0, %v4003
      %v4005 = vpop.f32.mrf.mxu0
      %v4006 = vadd.f32 0.0, %v4005
      %4007 = vdwg.mxu0
      %4008 = vmatprep.subr.mxu0 %v1226
      %4009 = vmatpush1.msra.mxu0 %v1225
      %4010 = vmatprep.subr.mxu0 %v1222
      %4011 = vmatpush1.msra.mxu0 %v1221
      %4012 = vmatprep.subr.mxu0 %v1218
      %4013 = vmatpush1.msra.mxu0 %v1217
      %4014 = vmatprep.subr.mxu0 %v1214
      %4015 = vmatpush1.msra.mxu0 %v1213
      %4016 = vmatprep.subr.mxu0 %v1210
      %4017 = vmatpush1.msra.mxu0 %v1209
      %4018 = vmatprep.subr.mxu0 %v1206
      %4019 = vmatpush1.msra.mxu0 %v1205
      %4020 = vmatprep.subr.mxu0 %v1202
      %4021 = vmatpush1.msra.mxu0 %v1201
      %4022 = vmatprep.subr.mxu0 %v1198
      %4023 = vmatpush1.msra.mxu0 %v1197
      %4024 = vmatprep.subr.mxu0 %v1194
      %4025 = vmatpush1.msra.mxu0 %v1193
      %4026 = vmatprep.subr.mxu0 %v1190
      %4027 = vmatpush1.msra.mxu0 %v1189
      %4028 = vmatprep.subr.mxu0 %v1186
      %4029 = vmatpush1.msra.mxu0 %v1185
      %4030 = vmatprep.subr.mxu0 %v1182
      %4031 = vmatpush1.msra.mxu0 %v1181
      %4032 = vmatprep.subr.mxu0 %v1178
      %4033 = vmatpush1.msra.mxu0 %v1177
      %4034 = vmatprep.subr.mxu0 %v1174
      %4035 = vmatpush1.msra.mxu0 %v1173
      %4036 = vmatprep.subr.mxu0 %v1170
      %4037 = vmatpush1.msra.mxu0 %v1169
      %4038 = vmatprep.subr.mxu0 %v1166
      %4039 = vmatpush1.msra.mxu0 %v1165
      %4040 = vmatprep.subr.mxu0 0.0
      %4041 = vmatpush2.msra.mxu0 0.0
      %4042 = vmatprep.subr.mxu0 0.0
      %4043 = vmatpush2.msra.mxu0 0.0
      %4044 = vmatprep.subr.mxu0 0.0
      %4045 = vmatpush2.msra.mxu0 0.0
      %4046 = vmatprep.subr.mxu0 0.0
      %4047 = vmatpush2.msra.mxu0 0.0
      %4048 = vmatprep.subr.mxu0 0.0
      %4049 = vmatpush2.msra.mxu0 0.0
      %4050 = vmatprep.subr.mxu0 0.0
      %4051 = vmatpush2.msra.mxu0 0.0
      %4052 = vmatprep.subr.mxu0 0.0
      %4053 = vmatpush2.msra.mxu0 0.0
      %4054 = vmatprep.subr.mxu0 0.0
      %4055 = vmatpush2.msra.mxu0 0.0
      %4056 = vmatprep.subr.mxu0 0.0
      %4057 = vmatpush2.msra.mxu0 0.0
      %4058 = vmatprep.subr.mxu0 0.0
      %4059 = vmatpush2.msra.mxu0 0.0
      %4060 = vmatprep.subr.mxu0 0.0
      %4061 = vmatpush2.msra.mxu0 0.0
      %4062 = vmatprep.subr.mxu0 0.0
      %4063 = vmatpush2.msra.mxu0 0.0
      %4064 = vmatprep.subr.mxu0 0.0
      %4065 = vmatpush2.msra.mxu0 0.0
      %4066 = vmatprep.subr.mxu0 0.0
      %4067 = vmatpush2.msra.mxu0 0.0
      %4068 = vmatprep.subr.mxu0 0.0
      %4069 = vmatpush2.msra.mxu0 0.0
      %4070 = vmatprep.subr.mxu0 0.0
      %4071 = vmatpush2.msra.mxu0 0.0
      %4072 = vmatprep.mubr.f32.mxu0 0.0
      %4073 = vmatmul.mubr.f32.gmra.mxu0 %v3752
      %v4074 = vpop.f32.mrf.mxu0
      %v4075 = vadd.f32 0.0, %v4074
      %v4076 = vpop.f32.mrf.mxu0
      %v4077 = vadd.f32 0.0, %v4076
      %4078 = vdwg.mxu0
      %v4079 = vadd.f32 %v3933, %v4004
      %v4080 = vadd.f32 %v3934, %v4006
      %v4081 = vadd.f32 %v3935, %v4075
      %v4082 = vadd.f32 %v3936, %v4077
      %v4083 = vxor.u32 %v4079, 2147483648
      %v4084 = vmul.f32 %v4083, 1.442695
      %v4085 = vpow.pop %v4084
      %v4086 = vadd.f32 %v4085, 1.0
      %v4087 = vrcp.pop %v4086
      %v4088 = vmul.f32 1.0, %v4087
      %v4089 = vxor.u32 %v4080, 2147483648
      %v4090 = vmul.f32 %v4089, 1.442695
      %v4091 = vpow.pop %v4090
      %v4092 = vadd.f32 %v4091, 1.0
      %v4093 = vrcp.pop %v4092
      %v4094 = vmul.f32 1.0, %v4093
      %v4095 = vtanh.pop %v4081
      %v4096 = vxor.u32 %v4082, 2147483648
      %v4097 = vmul.f32 %v4096, 1.442695
      %v4098 = vpow.pop %v4097
      %v4099 = vadd.f32 %v4098, 1.0
      %v4100 = vrcp.pop %v4099
      %v4101 = vmul.f32 1.0, %v4100
      %v4102 = vmul.f32 %v4094, %v3753
      %v4103 = vmul.f32 %v4088, %v4095
      %v4104 = vadd.f32 %v4102, %v4103
      %v4105 = vtanh.pop %v4104
      %v4106 = vmul.f32 %v4101, %v4105
      %p4107 = scmp.lt.s32.totalorder %s1581, 12
      %s4108 = scalar_select %p4107, 1, 0
      %v4109 = vstv %s4108
      %vm4110 = vcmp.eq.s32.totalorder %v4109, 1
      %v4111 = vsel %vm4110, %v4106, %v3752
      %v4112 = vsel %vm4110, %v4104, %v3753
      %s4113 = scalar_lea.vmem %s421, 56
      %4114 = vst [vmem:[%s4113] sm:$0xff] %v3932
      %4115 = vst [vmem:[%s431] sm:$0xff] %v4111
      %4116 = vst [vmem:[#allocation4] sm:$0xff] %v3932
      %4117 = vst [vmem:[#allocation5] sm:$0xff] %v3930
      %4118 = vst [vmem:[#allocation6] sm:$0xff] %v4111
      %4119 = vst [vmem:[#allocation7] sm:$0xff] %v4112
      %s4120 = smul.u32 8, %s26
      %p4121 = scmp.lt.s32.totalorder %s4120, 15
      %s4122 = scalar_select %p4121, %s4120, 15
      %p4123 = scmp.lt.s32.totalorder %s25, 0
      %s4124 = scalar_select %p4123, %s25, 0
      %s4125 = sadd.s32 %s4124, %s4122
      %s4126 = smul.addr %s4125, 8
      %s4127 = scalar_lea.vmem %s8, %s4126
      %s4128 = ssub.s32 1, %s26
      %s4129 = smul.u32 8, %s4128
      %p4130 = scmp.lt.s32.totalorder %s4129, 15
      %s4131 = scalar_select %p4130, %s4129, 15
      %p4132 = scmp.lt.s32.totalorder %s25, 0
      %s4133 = scalar_select %p4132, %s25, 0
      %s4134 = sadd.s32 %s4133, %s4131
      %s4135 = smul.addr %s4134, 8
      %s4136 = scalar_lea.vmem %s9, %s4135
      // Predicated region
      $region57: #{bilstm_forward.1} parent=51 // pred_check
        %p4137 = pneg %p237
      $region58: #{bilstm_forward.1} parent=51 // pred_check_branch
        %4139 = sbr.rel (%p4137) target = $region60
      $region59: #{bilstm_forward.1} parent=51 // pred_region
        %s4140 = smul.u32 8, %s26
      $region60: #{bilstm_forward.1} parent=51 // pred_fallthru
        _
      // Predicated region
      $region61: #{bilstm_forward.1} parent=51 // pred_check
        %p4141 = pneg %p267
      $region62: #{bilstm_forward.1} parent=51 // pred_check_branch
        %4143 = sbr.rel (%p4141) target = $region64
      $region63: #{bilstm_forward.1} parent=51 // pred_region
        %s4144 = ssub.s32 1, %s26
        %s4145 = smul.u32 8, %s4144
      $region64: #{bilstm_forward.1} parent=51 // pred_fallthru
        _
    $region52: #{bilstm_forward.1} parent=5 // pred_fallthru
      _
    %p4146 = scmp.le.s32.totalorder 2, %s16
    // Predicated region
    $region65: #{bilstm_forward.1} parent=5 // pred_check
      %p4147 = pneg %p4146
    $region66: #{bilstm_forward.1} parent=5 // pred_check_branch
      %4149 = sbr.rel (%p4147) target = $region68
    $region67: #{bilstm_forward.1} parent=5 // pred_region
      %s4150 = ssub.s32 %s16, 2
      // Predicated region
      $region69: #{bilstm_forward.1} parent=67 // pred_check
        %p4151 = pneg %p243
      $region70: #{bilstm_forward.1} parent=67 // pred_check_branch
        %4153 = sbr.rel (%p4151) target = $region72
      $region71: #{bilstm_forward.1} parent=67 // pred_region
        %s4154 = smul.u32 8, %s28
        %p4155 = scmp.lt.s32.totalorder %s4154, 15
        %s4156 = scalar_select %p4155, %s4154, 15
        %p4157 = scmp.lt.s32.totalorder %s27, 0
        %s4158 = scalar_select %p4157, %s27, 0
        %s4159 = sadd.s32 %s4158, %s4156
        %s4160 = smul.addr %s4159, 8
        %s4161 = scalar_lea.vmem %s8, %s4160
      $region72: #{bilstm_forward.1} parent=67 // pred_fallthru
        _
      // Predicated region
      $region73: #{bilstm_forward.1} parent=67 // pred_check
        %p4162 = pneg %p273
      $region74: #{bilstm_forward.1} parent=67 // pred_check_branch
        %4164 = sbr.rel (%p4162) target = $region76
      $region75: #{bilstm_forward.1} parent=67 // pred_region
        %s4165 = ssub.s32 1, %s28
        %s4166 = smul.u32 8, %s4165
        %p4167 = scmp.lt.s32.totalorder %s4166, 15
        %s4168 = scalar_select %p4167, %s4166, 15
        %p4169 = scmp.lt.s32.totalorder %s27, 0
        %s4170 = scalar_select %p4169, %s27, 0
        %s4171 = sadd.s32 %s4170, %s4168
        %s4172 = smul.addr %s4171, 8
        %s4173 = scalar_lea.vmem %s9, %s4172
      $region76: #{bilstm_forward.1} parent=67 // pred_fallthru
        _
    $region68: #{bilstm_forward.1} parent=5 // pred_fallthru
      _
  $region6: #{bilstm_forward.1} parent=0 // loop_footer
    %s20 = sadd.s32 1, %s16
  $region7: #{bilstm_forward.1} parent=0 // loop_footer_branch
    %15 = sbr.rel target = $region3
  $region8: #{bilstm_forward.1} parent=0 // loop_exit
    _

</llo_original>
